<compile_context>
chip_gen: v7x
topology: tpu7x:2x2x1
jax: 0.10.0
libtpu: 0.0.40
codegen_flags: <defaults>
</compile_context>

<pallas_src>
import functools
import numpy as np
import jax
import jax.numpy as jnp
from jax import lax
from jax.experimental import pallas as pl
from jax.experimental.pallas import tpu as pltpu

LOG2 = float(np.log(2.0))


def _ssp(x):
    """shifted_softplus(x) = softplus(x) - log(2), numerically stable (f32 VPU/EUP)."""
    return jnp.maximum(x, 0.0) + jnp.log(1.0 + jnp.exp(-jnp.abs(x))) - LOG2


def _mxu(a, w):
    """MXU matmul: cast the activation to the (bf16) weight dtype, accumulate f32."""
    return jnp.dot(a.astype(w.dtype), w, preferred_element_type=jnp.float32)


def _emat_cat(F, M):
    """(F, M*F) 0/1 matrix: Emat_cat[q, a*F+b] = [q == (a*F+b)//M], iota-built."""
    q = lax.broadcasted_iota(jnp.int32, (F, M * F), 0)
    c = lax.broadcasted_iota(jnp.int32, (F, M * F), 1)
    hit = (c >= q * M) & (c < q * M + M)            # == (c // M == q), no int div
    return jnp.where(hit, 1.0, 0.0).astype(jnp.bfloat16)


def _sel_mat(a, F, M):
    """(F, M) 0/1 matrix: Sel_a[b, m] = [(a*F + b) % M == m], iota-built (no int div)."""
    bv = lax.broadcasted_iota(jnp.int32, (F, M), 0).astype(jnp.float32)
    mv = lax.broadcasted_iota(jnp.int32, (F, M), 1).astype(jnp.float32)
    c = bv + float(a * F)
    cmod = c - jnp.floor(c / float(M)) * float(M)   # exact for these small ints
    return jnp.where(jnp.abs(cmod - mv) < 0.5, 1.0, 0.0).astype(jnp.bfloat16)


def _residual_stack(m, w1_ref, b1_ref, w2_ref, b2_ref):
    # TODO(synk): nn.Dropout is modeled as eval-mode identity (no in-kernel RNG).
    n_res = w1_ref.shape[1]
    for r in range(n_res):
        y = _ssp(m)
        h = _mxu(y, w1_ref[0, r]) + b1_ref[0, r]
        m = m + _mxu(h, w2_ref[0, r]) + b2_ref[0, r]
    return m


# ---------------------------------------------------------------------------
# Kernel: one grid step == one PhysNet block (interaction + atomwise + output)
# ---------------------------------------------------------------------------

def physnet_block_kernel(
    # inputs shared across blocks (constant index_map -> fetched once)
    idx_ref,       # (M*N, 1) int32 : neighbour index, slot-major (row a*N + n)
    d2_ref,        # (M*N, 1) f32   : squared pair distances, slot-major
    centers_ref,   # (1, K)   f32
    widths_ref,    # (1, K)   f32
    x0_ref,        # (N, F)   f32   : embedded atom features
    # per-block weights (leading dim selected by the grid, bf16 where MXU operand)
    wk2f_ref,      # (1, K, F)   f32  (VPU operand)
    wij_ref,       # (1, F, 2F)  bf16 fused [dense_i | dense_j]
    bij_ref,       # (1, 1, 2F)  f32
    rw1_ref, rb1_ref, rw2_ref, rb2_ref,     # interaction residual stack
    u_ref, wd_ref, bd_ref,                  # (1,1,F) f32, (1,F,F) bf16, (1,1,F) f32
    aw1_ref, ab1_ref, aw2_ref, ab2_ref,     # atomwise residual stack
    ow1_ref, ob1_ref, ow2_ref, ob2_ref,     # output-block residual stack
    wout_ref,                               # (1, F, 2) bf16
    # outputs
    eq_ref,        # (N, 2) f32 : accumulated [E, Q]
    nh_ref,        # (1, 1) f32 : nhloss
    # VMEM scratch carried across the block grid
    x_sc,          # (N, F)   running atom features
    eq_sc,         # (N, 2)   E/Q accumulator
    nh_sc,         # (1, 1)   nhloss accumulator
    rbf_sc,        # (M*N, K) RBF table (computed once at b == 0)
    g_sc,          # (M*N, N) bf16 one-hot row-gather matrix (computed once)
    *, cutoff,
):
    b = pl.program_id(0)
    num_blocks = pl.num_programs(0)
    MN = idx_ref.shape[0]
    N, F = x0_ref.shape
    M = MN // N
    K = centers_ref.shape[1]

    # ---- once (b == 0): init carries, RBF table, gather matrix --------------
    @pl.when(b == 0)
    def _init():
        x_sc[...] = x0_ref[...]
        eq_sc[...] = jnp.zeros_like(eq_sc)
        nh_sc[...] = jnp.zeros_like(nh_sc)
        # exponential RBF with polynomial cutoff, all M*N pairs in one chain
        d = jnp.sqrt(jnp.maximum(d2_ref[...], 0.0))                   # (MN, 1)
        xc = d * (1.0 / cutoff)
        x3 = xc * xc * xc
        x4 = x3 * xc
        x5 = x4 * xc
        cut = jnp.where(xc < 1.0, 1.0 - 6.0 * x5 + 15.0 * x4 - 10.0 * x3, 0.0)
        rbf_sc[...] = cut * jnp.exp(
            -widths_ref[...] * (jnp.exp(-d) - centers_ref[...]) ** 2)  # (MN, K)
        # one-hot gather matrix: G[a*N + n, j] = [idx_j(atom n, slot a) == j]
        cols = lax.broadcasted_iota(jnp.int32, (MN, N), 1)
        g_sc[...] = jnp.where(idx_ref[...] == cols, 1.0, 0.0).astype(g_sc.dtype)

    x = x_sc[...]                                                     # (N, F)

    # ---- interaction layer: fused dense_i | dense_j projection --------------
    xa = _ssp(x)                               # dropout == identity (eval mode)
    xij = _mxu(xa, wij_ref[0]) + bij_ref[0]                           # (N, 2F)
    xi = xij[:, 0:F]
    dj = xij[:, F:2 * F]

    # ---- vectorized row gather of dense_j(x) for all M neighbour slots ------
    # TODO(synk): replace the one-hot matmul with jnp.take_along_axis / DMA
    #             gather at production N (this is O(N^2*F) on the MXU).
    dj_g = jnp.dot(g_sc[...], dj.astype(g_sc.dtype),
                   preferred_element_type=jnp.float32)                # (MN, F)

    # k2f gate: K is tiny -> VPU broadcast-FMAs over all M*N pairs at once.
    rbf = rbf_sc[...]
    wk2f_b = wk2f_ref[0]                                              # (K, F)
    gate = jnp.zeros((MN, F), jnp.float32)
    for k in range(K):
        gate = gate + rbf[:, k:k + 1] * wk2f_b[k:k + 1, :]
    xj = gate * dj_g                        # (MN, F); row a*N+n = slot a, atom n

    # ---- atomwise message-passing attention ----------------------------------
    # torch: scores[n, m] = sum_f xi[n, f] * xj.view(N, F, M)[n, f, m], where
    # view(N,F,M)[n,f,m] = xj_slot_a[n, c] with a*F + c = f*M + m; reproduced
    # with iota-built 0/1 matrices (one fused Emat matmul + Sel reduction).
    v_cat = _mxu(xi, _emat_cat(F, M))                                 # (N, M*F)
    if F % M == 0:
        prod = jnp.zeros((N, F), jnp.float32)
        for a in range(M):
            prod = prod + v_cat[:, a * F:(a + 1) * F] * xj[a * N:(a + 1) * N, :]
        scores = _mxu(prod, _sel_mat(0, F, M))                        # (N, M)
    else:
        scores = jnp.zeros((N, M), jnp.float32)
        for a in range(M):
            pa = v_cat[:, a * F:(a + 1) * F] * xj[a * N:(a + 1) * N, :]
            scores = scores + _mxu(pa, _sel_mat(a, F, M))

    mx = jnp.max(scores, axis=1, keepdims=True)
    ex = jnp.exp(scores - mx)
    den = jnp.sum(ex, axis=1, keepdims=True)
    att = ex * pl.reciprocal(den, approx=False)     # exact reciprocal (review)

    # ctx[n, f] = sum_m softmax[n, m] * xj.view(N, M, F)[n, m, f]
    #           = sum_m att[n, m] * xj_slot_m[n, f]
    ctx = jnp.zeros((N, F), jnp.float32)
    for m in range(M):
        ctx = ctx + att[:, m:m + 1] * xj[m * N:(m + 1) * N, :]

    msg = xi + ctx
    msg = _residual_stack(msg, rw1_ref, rb1_ref, rw2_ref, rb2_ref)
    msg = _ssp(msg)
    x = u_ref[0] * x + _mxu(msg, wd_ref[0]) + bd_ref[0]

    # ---- atomwise residual stack ---------------------------------------------
    x = _residual_stack(x, aw1_ref, ab1_ref, aw2_ref, ab2_ref)
    x_sc[...] = x

    # ---- output block ----------------------------------------------------------
    o = _residual_stack(x, ow1_ref, ob1_ref, ow2_ref, ob2_ref)
    o = _ssp(o)
    out = _mxu(o, wout_ref[0])                                        # (N, 2)
    eq_sc[...] = eq_sc[...] + out

    out2 = out * out
    # NOTE: the reference never updates last_out2 (stays 0); reproduced as-is.
    t = out2 / (out2 + 0.0 + 1e-07)
    contrib = jnp.sum(jnp.sum(t, axis=1, keepdims=True), axis=0,
                      keepdims=True) / (N * 2.0)

    @pl.when(b > 0)
    def _nh():
        nh_sc[...] = nh_sc[...] + contrib

    @pl.when(b == num_blocks - 1)
    def _fin():
        # TODO(synk): (N, 2)/(1, 1) stores are lane-sparse; pad to 128 lanes at
        #             production scale.
        eq_ref[...] = eq_sc[...]
        nh_ref[...] = nh_sc[...]


# ---------------------------------------------------------------------------
# Forward wrapper: index glue + one pallas_call with grid over blocks
# ---------------------------------------------------------------------------

def physnet_forward(params, Z, R, idx_i, idx_j, cutoff):
    N = Z.shape[0]
    P = idx_i.shape[0]
    F_ = params["emb"].shape[1]
    K = params["rbf_centers"].shape[1]
    B = params["wij"].shape[0]
    assert P % N == 0, "torch .view(N, F, M) requires P == N * M"
    M = P // N
    # NOTE: assumes the pair list is atom-major (pair p = n*M + a, i.e. idx_i
    #       sorted with exactly M contiguous neighbours per atom), matching the
    #       reference data pipeline; only P % N == 0 is checked here.

    # ---- tiny index / distance glue (heavy math is in the kernel) -----------
    Ri = jnp.take(R, idx_i, axis=0)
    Rj = jnp.take(R, idx_j, axis=0)
    diff = Ri - Rj
    d2 = jnp.sum(diff * diff, axis=-1)                                # (P,)
    # slot-major (a, n) ordering -> row a*N + n of the kernel's (M*N, *) arrays
    d2_sm = jnp.transpose(d2.reshape(N, M)).reshape(M * N, 1)
    idx_sm = jnp.transpose(idx_j.reshape(N, M)).reshape(M * N, 1).astype(jnp.int32)

    x0 = jnp.take(params["emb"], Z, axis=0)                           # (N, F)

    bf16 = lambda w: w.astype(jnp.bfloat16)        # MXU operands ship as bf16
    args = (
        idx_sm, d2_sm, params["rbf_centers"], params["rbf_widths"], x0,
        params["wk2f"], bf16(params["wij"]), params["bij"],
        bf16(params["rw1"]), params["rb1"], bf16(params["rw2"]), params["rb2"],
        params["u"], bf16(params["wd"]), params["bd"],
        bf16(params["aw1"]), params["ab1"], bf16(params["aw2"]), params["ab2"],
        bf16(params["ow1"]), params["ob1"], bf16(params["ow2"]), params["ob2"],
        bf16(params["wout"]),
    )
    NUM_SHARED = 5      # idx, d2, centers, widths, x0: same block for every b

    def shared_spec(shape):
        zeros = (0,) * len(shape)
        return pl.BlockSpec(shape, lambda b, _z=zeros: _z)

    def per_block_spec(shape):
        blk = (1,) + tuple(shape[1:])
        zeros = (0,) * (len(shape) - 1)
        return pl.BlockSpec(blk, lambda b, _z=zeros: (b,) + _z)

    in_specs = [shared_spec(a.shape) if i < NUM_SHARED else per_block_spec(a.shape)
                for i, a in enumerate(args)]

    eq, nh = pl.pallas_call(
        functools.partial(physnet_block_kernel, cutoff=float(cutoff)),
        out_shape=(jax.ShapeDtypeStruct((N, 2), jnp.float32),
                   jax.ShapeDtypeStruct((1, 1), jnp.float32)),
        grid_spec=pltpu.PrefetchScalarGridSpec(
            num_scalar_prefetch=0,
            grid=(B,),
            in_specs=in_specs,
            out_specs=[pl.BlockSpec((N, 2), lambda b: (0, 0)),
                       pl.BlockSpec((1, 1), lambda b: (0, 0))],
            scratch_shapes=[
                pltpu.VMEM((N, F_), jnp.float32),         # running atom features
                pltpu.VMEM((N, 2), jnp.float32),          # E/Q accumulator
                pltpu.VMEM((1, 1), jnp.float32),          # nhloss accumulator
                pltpu.VMEM((M * N, K), jnp.float32),      # RBF table
                pltpu.VMEM((M * N, N), jnp.bfloat16),     # one-hot gather matrix
            ]),
        # Block axis is a sequential carry. TODO(synk): add a "parallel" atom
        # axis at production N (v7x megacore) and pad F to a multiple of 128.
        compiler_params=pltpu.CompilerParams(dimension_semantics=("arbitrary",)),
    )(*args)

    return eq[:, 0], eq[:, 1], nh[0, 0]


# ---------------------------------------------------------------------------
# Deterministic parameter construction (stacked across blocks)
# ---------------------------------------------------------------------------

def _softplus_np(x):
    return np.log1p(np.exp(-np.abs(x))) + np.maximum(x, 0.0)


def _softplus_inverse_np(x):
    return np.log(np.expm1(x))


def init_params(key, F_, K, num_element, cutoff, num_blocks,
                n_res_atom, n_res_int, n_res_out):
    kit = iter(jax.random.split(key, 4096))

    def nk():
        return next(kit)

    def linear_w(fan_in, fan_out):
        bound = 1.0 / np.sqrt(fan_in)
        return jax.random.uniform(nk(), (fan_in, fan_out), jnp.float32, -bound, bound)

    def linear_b(fan_in, fan_out):
        bound = 1.0 / np.sqrt(fan_in)
        return jax.random.uniform(nk(), (1, fan_out), jnp.float32, -bound, bound)

    def res_stack(n):
        w1 = jnp.stack([linear_w(F_, F_) for _ in range(n)])
        b1 = jnp.stack([linear_b(F_, F_) for _ in range(n)])
        w2 = jnp.stack([linear_w(F_, F_) for _ in range(n)])
        b2 = jnp.stack([linear_b(F_, F_) for _ in range(n)])
        return w1, b1, w2, b2

    per_block = []
    for _ in range(num_blocks):
        wi, bi = linear_w(F_, F_), linear_b(F_, F_)
        wj, bj = linear_w(F_, F_), linear_b(F_, F_)
        blk = dict(
            wk2f=linear_w(K, F_),
            wij=jnp.concatenate([wi, wj], axis=1),    # fused dense_i | dense_j
            bij=jnp.concatenate([bi, bj], axis=1),
        )
        blk["rw1"], blk["rb1"], blk["rw2"], blk["rb2"] = res_stack(n_res_int)
        blk["u"] = jax.random.uniform(nk(), (1, F_), jnp.float32, 0.0, 1.0)
        blk["wd"], blk["bd"] = linear_w(F_, F_), linear_b(F_, F_)
        blk["aw1"], blk["ab1"], blk["aw2"], blk["ab2"] = res_stack(n_res_atom)
        blk["ow1"], blk["ob1"], blk["ow2"], blk["ob2"] = res_stack(n_res_out)
        blk["wout"] = linear_w(F_, 2)
        per_block.append(blk)

    params = {k: jnp.stack([blk[k] for blk in per_block]) for k in per_block[0]}

    # ExponentialRBF buffers: softplus(softplus_inverse(.)) as in the reference
    centers = _softplus_np(_softplus_inverse_np(
        np.linspace(1.0, np.exp(-cutoff), K))).astype(np.float32)
    widths = _softplus_np(np.full(
        K, _softplus_inverse_np((0.5 / ((1.0 - np.exp(-cutoff)) / K)) ** 2))
    ).astype(np.float32)

    params.update(
        emb=jax.random.normal(nk(), (num_element, F_), jnp.float32),
        rbf_centers=jnp.asarray(centers)[None, :],
        rbf_widths=jnp.asarray(widths)[None, :],
    )
    return params


# ---------------------------------------------------------------------------
# main
# ---------------------------------------------------------------------------

if __name__ == "__main__":
    F_, K, CUTOFF = 32, 5, 10.0
    NUM_ELEMENT = 20
    NUM_BLOCKS, N_RES_ATOM, N_RES_INT, N_RES_OUT = 2, 2, 2, 1
    N_ATOMS, NEIGH = 8, 4
    P = N_ATOMS * NEIGH                   # must be divisible by N (torch .view)

    root = jax.random.PRNGKey(0)
    kp, kz, kr, kj = jax.random.split(root, 4)

    params = init_params(kp, F_, K, NUM_ELEMENT, CUTOFF, NUM_BLOCKS,
                         N_RES_ATOM, N_RES_INT, N_RES_OUT)

    Z = jax.random.randint(kz, (N_ATOMS,), 0, NUM_ELEMENT, dtype=jnp.int32)
    R = jax.random.normal(kr, (N_ATOMS, 3), jnp.float32) * 2.0
    idx_i = jnp.repeat(jnp.arange(N_ATOMS, dtype=jnp.int32), NEIGH)
    idx_j = jax.random.randint(kj, (P,), 0, N_ATOMS, dtype=jnp.int32)

    E_total, Q_total, nhloss = physnet_forward(params, Z, R, idx_i, idx_j, CUTOFF)
    jax.block_until_ready((E_total, Q_total, nhloss))

    assert E_total.shape == (N_ATOMS,) and Q_total.shape == (N_ATOMS,)
    assert bool(jnp.all(jnp.isfinite(E_total)))
    assert bool(jnp.all(jnp.isfinite(Q_total)))
    assert bool(jnp.isfinite(nhloss))
    print("KERNEL_OK")
</pallas_src>

<mosaic_0001>
module attributes {stable_mosaic.version = 11 : i64} {
  func.func @physnet_block_kernel(%arg0: i32, %arg1: memref<32x1xi32, #tpu.memory_space<vmem>>, %arg2: memref<32x1xf32, #tpu.memory_space<vmem>>, %arg3: memref<1x5xf32, #tpu.memory_space<vmem>>, %arg4: memref<1x5xf32, #tpu.memory_space<vmem>>, %arg5: memref<8x32xf32, #tpu.memory_space<vmem>>, %arg6: memref<1x5x32xf32, #tpu.memory_space<vmem>>, %arg7: memref<1x32x64xbf16, #tpu.memory_space<vmem>>, %arg8: memref<1x1x64xf32, #tpu.memory_space<vmem>>, %arg9: memref<1x2x32x32xbf16, #tpu.memory_space<vmem>>, %arg10: memref<1x2x1x32xf32, #tpu.memory_space<vmem>>, %arg11: memref<1x2x32x32xbf16, #tpu.memory_space<vmem>>, %arg12: memref<1x2x1x32xf32, #tpu.memory_space<vmem>>, %arg13: memref<1x1x32xf32, #tpu.memory_space<vmem>>, %arg14: memref<1x32x32xbf16, #tpu.memory_space<vmem>>, %arg15: memref<1x1x32xf32, #tpu.memory_space<vmem>>, %arg16: memref<1x2x32x32xbf16, #tpu.memory_space<vmem>>, %arg17: memref<1x2x1x32xf32, #tpu.memory_space<vmem>>, %arg18: memref<1x2x32x32xbf16, #tpu.memory_space<vmem>>, %arg19: memref<1x2x1x32xf32, #tpu.memory_space<vmem>>, %arg20: memref<1x1x32x32xbf16, #tpu.memory_space<vmem>>, %arg21: memref<1x1x1x32xf32, #tpu.memory_space<vmem>>, %arg22: memref<1x1x32x32xbf16, #tpu.memory_space<vmem>>, %arg23: memref<1x1x1x32xf32, #tpu.memory_space<vmem>>, %arg24: memref<1x32x2xbf16, #tpu.memory_space<vmem>>, %arg25: memref<8x2xf32, #tpu.memory_space<vmem>>, %arg26: memref<1x1xf32, #tpu.memory_space<vmem>>, %arg27: memref<8x32xf32, #tpu.memory_space<vmem>>, %arg28: memref<8x2xf32, #tpu.memory_space<vmem>>, %arg29: memref<1x1xf32, #tpu.memory_space<vmem>>, %arg30: memref<32x5xf32, #tpu.memory_space<vmem>>, %arg31: memref<32x8xbf16, #tpu.memory_space<vmem>>) attributes {dimension_semantics = [#tpu.dimension_semantics<arbitrary>], iteration_bounds = array<i64: 2>, scalar_prefetch = 0 : i64, scratch_operands = 5 : i64, tpu.core_type = #tpu.core_type<tc>, window_params = [{pipeline_mode = #tpu.pipeline_mode<synchronous>, transform_indices = @transform_0, window_bounds = array<i64: 32, 1>}, {pipeline_mode = #tpu.pipeline_mode<synchronous>, transform_indices = @transform_1, window_bounds = array<i64: 32, 1>}, {pipeline_mode = #tpu.pipeline_mode<synchronous>, transform_indices = @transform_2, window_bounds = array<i64: 1, 5>}, {pipeline_mode = #tpu.pipeline_mode<synchronous>, transform_indices = @transform_3, window_bounds = array<i64: 1, 5>}, {pipeline_mode = #tpu.pipeline_mode<synchronous>, transform_indices = @transform_4, window_bounds = array<i64: 8, 32>}, {transform_indices = @transform_5, window_bounds = array<i64: 1, 5, 32>}, {transform_indices = @transform_6, window_bounds = array<i64: 1, 32, 64>}, {transform_indices = @transform_7, window_bounds = array<i64: 1, 1, 64>}, {transform_indices = @transform_8, window_bounds = array<i64: 1, 2, 32, 32>}, {transform_indices = @transform_9, window_bounds = array<i64: 1, 2, 1, 32>}, {transform_indices = @transform_10, window_bounds = array<i64: 1, 2, 32, 32>}, {transform_indices = @transform_11, window_bounds = array<i64: 1, 2, 1, 32>}, {transform_indices = @transform_12, window_bounds = array<i64: 1, 1, 32>}, {transform_indices = @transform_13, window_bounds = array<i64: 1, 32, 32>}, {transform_indices = @transform_14, window_bounds = array<i64: 1, 1, 32>}, {transform_indices = @transform_15, window_bounds = array<i64: 1, 2, 32, 32>}, {transform_indices = @transform_16, window_bounds = array<i64: 1, 2, 1, 32>}, {transform_indices = @transform_17, window_bounds = array<i64: 1, 2, 32, 32>}, {transform_indices = @transform_18, window_bounds = array<i64: 1, 2, 1, 32>}, {transform_indices = @transform_19, window_bounds = array<i64: 1, 1, 32, 32>}, {transform_indices = @transform_20, window_bounds = array<i64: 1, 1, 1, 32>}, {transform_indices = @transform_21, window_bounds = array<i64: 1, 1, 32, 32>}, {transform_indices = @transform_22, window_bounds = array<i64: 1, 1, 1, 32>}, {transform_indices = @transform_23, window_bounds = array<i64: 1, 32, 2>}, {pipeline_mode = #tpu.pipeline_mode<synchronous>, transform_indices = @transform_24, window_bounds = array<i64: 8, 2>}, {pipeline_mode = #tpu.pipeline_mode<synchronous>, transform_indices = @transform_25, window_bounds = array<i64: 1, 1>}]} {
    %c0_i32 = arith.constant 0 : i32
    %0 = arith.cmpi eq, %arg0, %c0_i32 : i32
    %1 = arith.extui %0 : i1 to i32
    %c0_i32_0 = arith.constant 0 : i32
    %2 = arith.cmpi ne, %1, %c0_i32_0 : i32
    scf.if %2 {
      %c0_182 = arith.constant 0 : index
      %c0_183 = arith.constant 0 : index
      %360 = vector.load %arg5[%c0_182, %c0_183] : memref<8x32xf32, #tpu.memory_space<vmem>>, vector<8x32xf32>
      %c0_184 = arith.constant 0 : index
      %c0_185 = arith.constant 0 : index
      %361 = vector.load %arg27[%c0_184, %c0_185] : memref<8x32xf32, #tpu.memory_space<vmem>>, vector<8x32xf32>
      tpu.vector_store %arg27[%c0_184, %c0_185], %360 {strides = array<i32>} : memref<8x32xf32, #tpu.memory_space<vmem>>, vector<8x32xf32>,
      %cst_186 = arith.constant 0.000000e+00 : f32
      %362 = vector.broadcast %cst_186 : f32 to vector<8x2xf32>
      %c0_187 = arith.constant 0 : index
      %c0_188 = arith.constant 0 : index
      %363 = vector.load %arg28[%c0_187, %c0_188] : memref<8x2xf32, #tpu.memory_space<vmem>>, vector<8x2xf32>
      tpu.vector_store %arg28[%c0_187, %c0_188], %362 {strides = array<i32>} : memref<8x2xf32, #tpu.memory_space<vmem>>, vector<8x2xf32>,
      %cst_189 = arith.constant 0.000000e+00 : f32
      %364 = vector.broadcast %cst_189 : f32 to vector<1x1xf32>
      %c0_190 = arith.constant 0 : index
      %c0_191 = arith.constant 0 : index
      %365 = vector.load %arg29[%c0_190, %c0_191] : memref<1x1xf32, #tpu.memory_space<vmem>>, vector<1x1xf32>
      tpu.vector_store %arg29[%c0_190, %c0_191], %364 {strides = array<i32>} : memref<1x1xf32, #tpu.memory_space<vmem>>, vector<1x1xf32>,
      %c0_192 = arith.constant 0 : index
      %c0_193 = arith.constant 0 : index
      %366 = vector.load %arg2[%c0_192, %c0_193] : memref<32x1xf32, #tpu.memory_space<vmem>>, vector<32x1xf32>
      %cst_194 = arith.constant 0.000000e+00 : f32
      %367 = vector.broadcast %cst_194 : f32 to vector<32x1xf32>
      %368 = arith.maximumf %366, %367 : vector<32x1xf32>
      %369 = math.sqrt %368 : vector<32x1xf32>
      %cst_195 = arith.constant 1.000000e-01 : f32
      %370 = vector.broadcast %cst_195 : f32 to vector<32x1xf32>
      %371 = arith.mulf %369, %370 : vector<32x1xf32>
      %372 = arith.mulf %371, %371 : vector<32x1xf32>
      %373 = arith.mulf %372, %371 : vector<32x1xf32>
      %374 = arith.mulf %373, %371 : vector<32x1xf32>
      %375 = arith.mulf %374, %371 : vector<32x1xf32>
      %cst_196 = arith.constant 1.000000e+00 : f32
      %376 = vector.broadcast %cst_196 : f32 to vector<32x1xf32>
      %377 = arith.cmpf olt, %371, %376 : vector<32x1xf32>
      %cst_197 = arith.constant 6.000000e+00 : f32
      %378 = vector.broadcast %cst_197 : f32 to vector<32x1xf32>
      %379 = arith.mulf %378, %375 : vector<32x1xf32>
      %cst_198 = arith.constant 1.000000e+00 : f32
      %380 = vector.broadcast %cst_198 : f32 to vector<32x1xf32>
      %381 = arith.subf %380, %379 : vector<32x1xf32>
      %cst_199 = arith.constant 1.500000e+01 : f32
      %382 = vector.broadcast %cst_199 : f32 to vector<32x1xf32>
      %383 = arith.mulf %382, %374 : vector<32x1xf32>
      %384 = arith.addf %381, %383 : vector<32x1xf32>
      %cst_200 = arith.constant 1.000000e+01 : f32
      %385 = vector.broadcast %cst_200 : f32 to vector<32x1xf32>
      %386 = arith.mulf %385, %373 : vector<32x1xf32>
      %387 = arith.subf %384, %386 : vector<32x1xf32>
      %cst_201 = arith.constant 0.000000e+00 : f32
      %388 = vector.broadcast %cst_201 : f32 to vector<32x1xf32>
      %389 = arith.select %377, %387, %388 : vector<32x1xi1>, vector<32x1xf32>
      %c0_202 = arith.constant 0 : index
      %c0_203 = arith.constant 0 : index
      %390 = vector.load %arg4[%c0_202, %c0_203] : memref<1x5xf32, #tpu.memory_space<vmem>>, vector<1x5xf32>
      %cst_204 = arith.constant 0.000000e+00 : f32
      %391 = vector.broadcast %cst_204 : f32 to vector<1x5xf32>
      %392 = arith.subf %391, %390 : vector<1x5xf32>
      %cst_205 = arith.constant 0.000000e+00 : f32
      %393 = vector.broadcast %cst_205 : f32 to vector<32x1xf32>
      %394 = arith.subf %393, %369 : vector<32x1xf32>
      %395 = math.exp %394 : vector<32x1xf32>
      %c0_206 = arith.constant 0 : index
      %c0_207 = arith.constant 0 : index
      %396 = vector.load %arg3[%c0_206, %c0_207] : memref<1x5xf32, #tpu.memory_space<vmem>>, vector<1x5xf32>
      %397 = vector.broadcast %395 : vector<32x1xf32> to vector<32x5xf32>
      %398 = vector.broadcast %396 : vector<1x5xf32> to vector<32x5xf32>
      %399 = arith.subf %397, %398 : vector<32x5xf32>
      %400 = arith.mulf %399, %399 : vector<32x5xf32>
      %401 = vector.broadcast %392 : vector<1x5xf32> to vector<32x5xf32>
      %402 = arith.mulf %401, %400 : vector<32x5xf32>
      %403 = math.exp %402 : vector<32x5xf32>
      %404 = vector.broadcast %389 : vector<32x1xf32> to vector<32x5xf32>
      %405 = arith.mulf %404, %403 : vector<32x5xf32>
      %c0_208 = arith.constant 0 : index
      %c0_209 = arith.constant 0 : index
      %406 = vector.load %arg30[%c0_208, %c0_209] : memref<32x5xf32, #tpu.memory_space<vmem>>, vector<32x5xf32>
      tpu.vector_store %arg30[%c0_208, %c0_209], %405 {strides = array<i32>} : memref<32x5xf32, #tpu.memory_space<vmem>>, vector<32x5xf32>,
      %407 = tpu.iota {dimensions = array<i32: 1>} : vector<32x8xi32>
      %c0_210 = arith.constant 0 : index
      %c0_211 = arith.constant 0 : index
      %408 = vector.load %arg1[%c0_210, %c0_211] : memref<32x1xi32, #tpu.memory_space<vmem>>, vector<32x1xi32>
      %409 = vector.broadcast %408 : vector<32x1xi32> to vector<32x8xi32>
      %410 = arith.cmpi eq, %409, %407 : vector<32x8xi32>
      %cst_212 = arith.constant 1.000000e+00 : f32
      %cst_213 = arith.constant 0.000000e+00 : f32
      %411 = vector.broadcast %cst_212 : f32 to vector<32x8xf32>
      %412 = vector.broadcast %cst_213 : f32 to vector<32x8xf32>
      %413 = arith.select %410, %411, %412 : vector<32x8xi1>, vector<32x8xf32>
      %414 = arith.truncf %413 : vector<32x8xf32> to vector<32x8xbf16>
      %c0_214 = arith.constant 0 : index
      %c0_215 = arith.constant 0 : index
      %415 = vector.load %arg31[%c0_214, %c0_215] : memref<32x8xbf16, #tpu.memory_space<vmem>>, vector<32x8xbf16>
      tpu.vector_store %arg31[%c0_214, %c0_215], %414 {strides = array<i32>} : memref<32x8xbf16, #tpu.memory_space<vmem>>, vector<32x8xbf16>,
    } else {
    }
    %c0 = arith.constant 0 : index
    %c0_1 = arith.constant 0 : index
    %3 = vector.load %arg27[%c0, %c0_1] : memref<8x32xf32, #tpu.memory_space<vmem>>, vector<8x32xf32>
    %cst = arith.constant 0.000000e+00 : f32
    %4 = vector.broadcast %cst : f32 to vector<8x32xf32>
    %5 = arith.maximumf %3, %4 : vector<8x32xf32>
    %6 = math.absf %3 : vector<8x32xf32>
    %cst_2 = arith.constant 0.000000e+00 : f32
    %7 = vector.broadcast %cst_2 : f32 to vector<8x32xf32>
    %8 = arith.subf %7, %6 : vector<8x32xf32>
    %9 = math.exp %8 : vector<8x32xf32>
    %cst_3 = arith.constant 1.000000e+00 : f32
    %10 = vector.broadcast %cst_3 : f32 to vector<8x32xf32>
    %11 = arith.addf %10, %9 : vector<8x32xf32>
    %12 = math.log %11 : vector<8x32xf32>
    %13 = arith.addf %5, %12 : vector<8x32xf32>
    %cst_4 = arith.constant 0.693147182 : f32
    %14 = vector.broadcast %cst_4 : f32 to vector<8x32xf32>
    %15 = arith.subf %13, %14 : vector<8x32xf32>
    %c0_5 = arith.constant 0 : index
    %c0_6 = arith.constant 0 : index
    %c0_7 = arith.constant 0 : index
    %16 = vector.load %arg7[%c0_5, %c0_6, %c0_7] : memref<1x32x64xbf16, #tpu.memory_space<vmem>>, vector<1x32x64xbf16>
    %17 = vector.shape_cast %16 : vector<1x32x64xbf16> to vector<32x64xbf16>
    %18 = arith.truncf %15 : vector<8x32xf32> to vector<8x32xbf16>
    %cst_8 = arith.constant dense<0.000000e+00> : vector<8x64xf32>
    %19 = tpu.matmul %18, %17, %cst_8 {dimension_numbers = #tpu.dot_dimension_numbers<[1], [0], [0], [1], [0, 0, 1, 1], [], []>} : vector<8x32xbf16>, vector<32x64xbf16>, vector<8x64xf32> -> vector<8x64xf32>
    %c0_9 = arith.constant 0 : index
    %c0_10 = arith.constant 0 : index
    %c0_11 = arith.constant 0 : index
    %20 = vector.load %arg8[%c0_9, %c0_10, %c0_11] : memref<1x1x64xf32, #tpu.memory_space<vmem>>, vector<1x1x64xf32>
    %21 = vector.shape_cast %20 : vector<1x1x64xf32> to vector<1x64xf32>
    %22 = vector.broadcast %21 : vector<1x64xf32> to vector<8x64xf32>
    %23 = arith.addf %19, %22 : vector<8x64xf32>
    %24 = vector.extract_strided_slice %23 {offsets = [0, 0], sizes = [8, 32], strides = [1, 1]} : vector<8x64xf32> to vector<8x32xf32>
    %25 = vector.extract_strided_slice %23 {offsets = [0, 32], sizes = [8, 32], strides = [1, 1]} : vector<8x64xf32> to vector<8x32xf32>
    %c0_12 = arith.constant 0 : index
    %c0_13 = arith.constant 0 : index
    %26 = vector.load %arg31[%c0_12, %c0_13] : memref<32x8xbf16, #tpu.memory_space<vmem>>, vector<32x8xbf16>
    %27 = arith.truncf %25 : vector<8x32xf32> to vector<8x32xbf16>
    %cst_14 = arith.constant dense<0.000000e+00> : vector<32x32xf32>
    %28 = tpu.matmul %26, %27, %cst_14 {dimension_numbers = #tpu.dot_dimension_numbers<[1], [0], [0], [1], [0, 0, 1, 1], [], []>} : vector<32x8xbf16>, vector<8x32xbf16>, vector<32x32xf32> -> vector<32x32xf32>
    %c0_15 = arith.constant 0 : index
    %c0_16 = arith.constant 0 : index
    %29 = vector.load %arg30[%c0_15, %c0_16] : memref<32x5xf32, #tpu.memory_space<vmem>>, vector<32x5xf32>
    %c0_17 = arith.constant 0 : index
    %c0_18 = arith.constant 0 : index
    %c0_19 = arith.constant 0 : index
    %30 = vector.load %arg6[%c0_17, %c0_18, %c0_19] : memref<1x5x32xf32, #tpu.memory_space<vmem>>, vector<1x5x32xf32>
    %31 = vector.shape_cast %30 : vector<1x5x32xf32> to vector<5x32xf32>
    %cst_20 = arith.constant 0.000000e+00 : f32
    %32 = vector.broadcast %cst_20 : f32 to vector<32x32xf32>
    %33 = vector.extract_strided_slice %29 {offsets = [0, 0], sizes = [32, 1], strides = [1, 1]} : vector<32x5xf32> to vector<32x1xf32>
    %34 = vector.extract_strided_slice %31 {offsets = [0, 0], sizes = [1, 32], strides = [1, 1]} : vector<5x32xf32> to vector<1x32xf32>
    %35 = vector.broadcast %33 : vector<32x1xf32> to vector<32x32xf32>
    %36 = vector.broadcast %34 : vector<1x32xf32> to vector<32x32xf32>
    %37 = arith.mulf %35, %36 : vector<32x32xf32>
    %38 = arith.addf %32, %37 : vector<32x32xf32>
    %39 = vector.extract_strided_slice %29 {offsets = [0, 1], sizes = [32, 1], strides = [1, 1]} : vector<32x5xf32> to vector<32x1xf32>
    %40 = vector.extract_strided_slice %31 {offsets = [1, 0], sizes = [1, 32], strides = [1, 1]} : vector<5x32xf32> to vector<1x32xf32>
    %41 = vector.broadcast %39 : vector<32x1xf32> to vector<32x32xf32>
    %42 = vector.broadcast %40 : vector<1x32xf32> to vector<32x32xf32>
    %43 = arith.mulf %41, %42 : vector<32x32xf32>
    %44 = arith.addf %38, %43 : vector<32x32xf32>
    %45 = vector.extract_strided_slice %29 {offsets = [0, 2], sizes = [32, 1], strides = [1, 1]} : vector<32x5xf32> to vector<32x1xf32>
    %46 = vector.extract_strided_slice %31 {offsets = [2, 0], sizes = [1, 32], strides = [1, 1]} : vector<5x32xf32> to vector<1x32xf32>
    %47 = vector.broadcast %45 : vector<32x1xf32> to vector<32x32xf32>
    %48 = vector.broadcast %46 : vector<1x32xf32> to vector<32x32xf32>
    %49 = arith.mulf %47, %48 : vector<32x32xf32>
    %50 = arith.addf %44, %49 : vector<32x32xf32>
    %51 = vector.extract_strided_slice %29 {offsets = [0, 3], sizes = [32, 1], strides = [1, 1]} : vector<32x5xf32> to vector<32x1xf32>
    %52 = vector.extract_strided_slice %31 {offsets = [3, 0], sizes = [1, 32], strides = [1, 1]} : vector<5x32xf32> to vector<1x32xf32>
    %53 = vector.broadcast %51 : vector<32x1xf32> to vector<32x32xf32>
    %54 = vector.broadcast %52 : vector<1x32xf32> to vector<32x32xf32>
    %55 = arith.mulf %53, %54 : vector<32x32xf32>
    %56 = arith.addf %50, %55 : vector<32x32xf32>
    %57 = vector.extract_strided_slice %29 {offsets = [0, 4], sizes = [32, 1], strides = [1, 1]} : vector<32x5xf32> to vector<32x1xf32>
    %58 = vector.extract_strided_slice %31 {offsets = [4, 0], sizes = [1, 32], strides = [1, 1]} : vector<5x32xf32> to vector<1x32xf32>
    %59 = vector.broadcast %57 : vector<32x1xf32> to vector<32x32xf32>
    %60 = vector.broadcast %58 : vector<1x32xf32> to vector<32x32xf32>
    %61 = arith.mulf %59, %60 : vector<32x32xf32>
    %62 = arith.addf %56, %61 : vector<32x32xf32>
    %63 = arith.mulf %62, %28 : vector<32x32xf32>
    %64 = tpu.iota {dimensions = array<i32: 0>} : vector<32x128xi32>
    %65 = tpu.iota {dimensions = array<i32: 1>} : vector<32x128xi32>
    %c4_i32 = arith.constant 4 : i32
    %66 = vector.broadcast %c4_i32 : i32 to vector<32x128xi32>
    %67 = arith.muli %64, %66 : vector<32x128xi32>
    %68 = arith.cmpi sge, %65, %67 : vector<32x128xi32>
    %c4_i32_21 = arith.constant 4 : i32
    %69 = vector.broadcast %c4_i32_21 : i32 to vector<32x128xi32>
    %70 = arith.muli %64, %69 : vector<32x128xi32>
    %c4_i32_22 = arith.constant 4 : i32
    %71 = vector.broadcast %c4_i32_22 : i32 to vector<32x128xi32>
    %72 = arith.addi %70, %71 : vector<32x128xi32>
    %73 = arith.cmpi slt, %65, %72 : vector<32x128xi32>
    %74 = arith.andi %68, %73 : vector<32x128xi1>
    %cst_23 = arith.constant 1.000000e+00 : f32
    %cst_24 = arith.constant 0.000000e+00 : f32
    %75 = vector.broadcast %cst_23 : f32 to vector<32x128xf32>
    %76 = vector.broadcast %cst_24 : f32 to vector<32x128xf32>
    %77 = arith.select %74, %75, %76 : vector<32x128xi1>, vector<32x128xf32>
    %78 = arith.truncf %77 : vector<32x128xf32> to vector<32x128xbf16>
    %79 = arith.truncf %24 : vector<8x32xf32> to vector<8x32xbf16>
    %cst_25 = arith.constant dense<0.000000e+00> : vector<8x128xf32>
    %80 = tpu.matmul %79, %78, %cst_25 {dimension_numbers = #tpu.dot_dimension_numbers<[1], [0], [0], [1], [0, 0, 1, 1], [], []>} : vector<8x32xbf16>, vector<32x128xbf16>, vector<8x128xf32> -> vector<8x128xf32>
    %cst_26 = arith.constant 0.000000e+00 : f32
    %81 = vector.broadcast %cst_26 : f32 to vector<8x32xf32>
    %82 = vector.extract_strided_slice %80 {offsets = [0, 0], sizes = [8, 32], strides = [1, 1]} : vector<8x128xf32> to vector<8x32xf32>
    %83 = vector.extract_strided_slice %63 {offsets = [0, 0], sizes = [8, 32], strides = [1, 1]} : vector<32x32xf32> to vector<8x32xf32>
    %84 = arith.mulf %82, %83 : vector<8x32xf32>
    %85 = arith.addf %81, %84 : vector<8x32xf32>
    %86 = vector.extract_strided_slice %80 {offsets = [0, 32], sizes = [8, 32], strides = [1, 1]} : vector<8x128xf32> to vector<8x32xf32>
    %87 = vector.extract_strided_slice %63 {offsets = [8, 0], sizes = [8, 32], strides = [1, 1]} : vector<32x32xf32> to vector<8x32xf32>
    %88 = arith.mulf %86, %87 : vector<8x32xf32>
    %89 = arith.addf %85, %88 : vector<8x32xf32>
    %90 = vector.extract_strided_slice %80 {offsets = [0, 64], sizes = [8, 32], strides = [1, 1]} : vector<8x128xf32> to vector<8x32xf32>
    %91 = vector.extract_strided_slice %63 {offsets = [16, 0], sizes = [8, 32], strides = [1, 1]} : vector<32x32xf32> to vector<8x32xf32>
    %92 = arith.mulf %90, %91 : vector<8x32xf32>
    %93 = arith.addf %89, %92 : vector<8x32xf32>
    %94 = vector.extract_strided_slice %80 {offsets = [0, 96], sizes = [8, 32], strides = [1, 1]} : vector<8x128xf32> to vector<8x32xf32>
    %95 = vector.extract_strided_slice %63 {offsets = [24, 0], sizes = [8, 32], strides = [1, 1]} : vector<32x32xf32> to vector<8x32xf32>
    %96 = arith.mulf %94, %95 : vector<8x32xf32>
    %97 = arith.addf %93, %96 : vector<8x32xf32>
    %98 = tpu.iota {dimensions = array<i32: 0>} : vector<32x4xi32>
    %99 = arith.sitofp %98 : vector<32x4xi32> to vector<32x4xf32>
    %100 = tpu.iota {dimensions = array<i32: 1>} : vector<32x4xi32>
    %101 = arith.sitofp %100 : vector<32x4xi32> to vector<32x4xf32>
    %cst_27 = arith.constant 0.000000e+00 : f32
    %102 = vector.broadcast %cst_27 : f32 to vector<32x4xf32>
    %103 = arith.addf %99, %102 : vector<32x4xf32>
    %cst_28 = arith.constant 4.000000e+00 : f32
    %104 = vector.broadcast %cst_28 : f32 to vector<32x4xf32>
    %105 = arith.divf %103, %104 : vector<32x4xf32>
    %106 = math.floor %105 : vector<32x4xf32>
    %cst_29 = arith.constant 4.000000e+00 : f32
    %107 = vector.broadcast %cst_29 : f32 to vector<32x4xf32>
    %108 = arith.mulf %106, %107 : vector<32x4xf32>
    %109 = arith.subf %103, %108 : vector<32x4xf32>
    %110 = arith.subf %109, %101 : vector<32x4xf32>
    %111 = math.absf %110 : vector<32x4xf32>
    %cst_30 = arith.constant 5.000000e-01 : f32
    %112 = vector.broadcast %cst_30 : f32 to vector<32x4xf32>
    %113 = arith.cmpf olt, %111, %112 : vector<32x4xf32>
    %cst_31 = arith.constant 1.000000e+00 : f32
    %cst_32 = arith.constant 0.000000e+00 : f32
    %114 = vector.broadcast %cst_31 : f32 to vector<32x4xf32>
    %115 = vector.broadcast %cst_32 : f32 to vector<32x4xf32>
    %116 = arith.select %113, %114, %115 : vector<32x4xi1>, vector<32x4xf32>
    %117 = arith.truncf %116 : vector<32x4xf32> to vector<32x4xbf16>
    %118 = arith.truncf %97 : vector<8x32xf32> to vector<8x32xbf16>
    %cst_33 = arith.constant dense<0.000000e+00> : vector<8x4xf32>
    %119 = tpu.matmul %118, %117, %cst_33 {dimension_numbers = #tpu.dot_dimension_numbers<[1], [0], [0], [1], [0, 0, 1, 1], [], []>} : vector<8x32xbf16>, vector<32x4xbf16>, vector<8x4xf32> -> vector<8x4xf32>
    %cst_34 = arith.constant dense<0xFF800000> : vector<8xf32>
    %120 = vector.multi_reduction <maximumf>, %119, %cst_34 [1] : vector<8x4xf32> to vector<8xf32>
    %121 = vector.shape_cast %120 : vector<8xf32> to vector<8x1xf32>
    %122 = vector.broadcast %121 : vector<8x1xf32> to vector<8x4xf32>
    %123 = arith.subf %119, %122 : vector<8x4xf32>
    %124 = math.exp %123 : vector<8x4xf32>
    %cst_35 = arith.constant dense<0.000000e+00> : vector<8xf32>
    %125 = vector.multi_reduction <add>, %124, %cst_35 [1] : vector<8x4xf32> to vector<8xf32>
    %126 = vector.shape_cast %125 : vector<8xf32> to vector<8x1xf32>
    %127 = tpu.reciprocal %126 : vector<8x1xf32> -> vector<8x1xf32>
    %128 = vector.broadcast %127 : vector<8x1xf32> to vector<8x4xf32>
    %129 = arith.mulf %124, %128 : vector<8x4xf32>
    %cst_36 = arith.constant 0.000000e+00 : f32
    %130 = vector.broadcast %cst_36 : f32 to vector<8x32xf32>
    %131 = vector.extract_strided_slice %129 {offsets = [0, 0], sizes = [8, 1], strides = [1, 1]} : vector<8x4xf32> to vector<8x1xf32>
    %132 = vector.extract_strided_slice %63 {offsets = [0, 0], sizes = [8, 32], strides = [1, 1]} : vector<32x32xf32> to vector<8x32xf32>
    %133 = vector.broadcast %131 : vector<8x1xf32> to vector<8x32xf32>
    %134 = arith.mulf %133, %132 : vector<8x32xf32>
    %135 = arith.addf %130, %134 : vector<8x32xf32>
    %136 = vector.extract_strided_slice %129 {offsets = [0, 1], sizes = [8, 1], strides = [1, 1]} : vector<8x4xf32> to vector<8x1xf32>
    %137 = vector.extract_strided_slice %63 {offsets = [8, 0], sizes = [8, 32], strides = [1, 1]} : vector<32x32xf32> to vector<8x32xf32>
    %138 = vector.broadcast %136 : vector<8x1xf32> to vector<8x32xf32>
    %139 = arith.mulf %138, %137 : vector<8x32xf32>
    %140 = arith.addf %135, %139 : vector<8x32xf32>
    %141 = vector.extract_strided_slice %129 {offsets = [0, 2], sizes = [8, 1], strides = [1, 1]} : vector<8x4xf32> to vector<8x1xf32>
    %142 = vector.extract_strided_slice %63 {offsets = [16, 0], sizes = [8, 32], strides = [1, 1]} : vector<32x32xf32> to vector<8x32xf32>
    %143 = vector.broadcast %141 : vector<8x1xf32> to vector<8x32xf32>
    %144 = arith.mulf %143, %142 : vector<8x32xf32>
    %145 = arith.addf %140, %144 : vector<8x32xf32>
    %146 = vector.extract_strided_slice %129 {offsets = [0, 3], sizes = [8, 1], strides = [1, 1]} : vector<8x4xf32> to vector<8x1xf32>
    %147 = vector.extract_strided_slice %63 {offsets = [24, 0], sizes = [8, 32], strides = [1, 1]} : vector<32x32xf32> to vector<8x32xf32>
    %148 = vector.broadcast %146 : vector<8x1xf32> to vector<8x32xf32>
    %149 = arith.mulf %148, %147 : vector<8x32xf32>
    %150 = arith.addf %145, %149 : vector<8x32xf32>
    %151 = arith.addf %24, %150 : vector<8x32xf32>
    %cst_37 = arith.constant 0.000000e+00 : f32
    %152 = vector.broadcast %cst_37 : f32 to vector<8x32xf32>
    %153 = arith.maximumf %151, %152 : vector<8x32xf32>
    %154 = math.absf %151 : vector<8x32xf32>
    %cst_38 = arith.constant 0.000000e+00 : f32
    %155 = vector.broadcast %cst_38 : f32 to vector<8x32xf32>
    %156 = arith.subf %155, %154 : vector<8x32xf32>
    %157 = math.exp %156 : vector<8x32xf32>
    %cst_39 = arith.constant 1.000000e+00 : f32
    %158 = vector.broadcast %cst_39 : f32 to vector<8x32xf32>
    %159 = arith.addf %158, %157 : vector<8x32xf32>
    %160 = math.log %159 : vector<8x32xf32>
    %161 = arith.addf %153, %160 : vector<8x32xf32>
    %cst_40 = arith.constant 0.693147182 : f32
    %162 = vector.broadcast %cst_40 : f32 to vector<8x32xf32>
    %163 = arith.subf %161, %162 : vector<8x32xf32>
    %c0_41 = arith.constant 0 : index
    %c0_42 = arith.constant 0 : index
    %c0_43 = arith.constant 0 : index
    %c0_44 = arith.constant 0 : index
    %164 = vector.load %arg9[%c0_41, %c0_42, %c0_43, %c0_44] : memref<1x2x32x32xbf16, #tpu.memory_space<vmem>>, vector<1x1x32x32xbf16>
    %165 = vector.shape_cast %164 : vector<1x1x32x32xbf16> to vector<32x32xbf16>
    %166 = arith.truncf %163 : vector<8x32xf32> to vector<8x32xbf16>
    %cst_45 = arith.constant dense<0.000000e+00> : vector<8x32xf32>
    %167 = tpu.matmul %166, %165, %cst_45 {dimension_numbers = #tpu.dot_dimension_numbers<[1], [0], [0], [1], [0, 0, 1, 1], [], []>} : vector<8x32xbf16>, vector<32x32xbf16>, vector<8x32xf32> -> vector<8x32xf32>
    %c0_46 = arith.constant 0 : index
    %c0_47 = arith.constant 0 : index
    %c0_48 = arith.constant 0 : index
    %c0_49 = arith.constant 0 : index
    %168 = vector.load %arg10[%c0_46, %c0_47, %c0_48, %c0_49] : memref<1x2x1x32xf32, #tpu.memory_space<vmem>>, vector<1x1x1x32xf32>
    %169 = vector.shape_cast %168 : vector<1x1x1x32xf32> to vector<1x32xf32>
    %170 = vector.broadcast %169 : vector<1x32xf32> to vector<8x32xf32>
    %171 = arith.addf %167, %170 : vector<8x32xf32>
    %c0_50 = arith.constant 0 : index
    %c0_51 = arith.constant 0 : index
    %c0_52 = arith.constant 0 : index
    %c0_53 = arith.constant 0 : index
    %172 = vector.load %arg11[%c0_50, %c0_51, %c0_52, %c0_53] : memref<1x2x32x32xbf16, #tpu.memory_space<vmem>>, vector<1x1x32x32xbf16>
    %173 = vector.shape_cast %172 : vector<1x1x32x32xbf16> to vector<32x32xbf16>
    %174 = arith.truncf %171 : vector<8x32xf32> to vector<8x32xbf16>
    %cst_54 = arith.constant dense<0.000000e+00> : vector<8x32xf32>
    %175 = tpu.matmul %174, %173, %cst_54 {dimension_numbers = #tpu.dot_dimension_numbers<[1], [0], [0], [1], [0, 0, 1, 1], [], []>} : vector<8x32xbf16>, vector<32x32xbf16>, vector<8x32xf32> -> vector<8x32xf32>
    %176 = arith.addf %151, %175 : vector<8x32xf32>
    %c0_55 = arith.constant 0 : index
    %c0_56 = arith.constant 0 : index
    %c0_57 = arith.constant 0 : index
    %c0_58 = arith.constant 0 : index
    %177 = vector.load %arg12[%c0_55, %c0_56, %c0_57, %c0_58] : memref<1x2x1x32xf32, #tpu.memory_space<vmem>>, vector<1x1x1x32xf32>
    %178 = vector.shape_cast %177 : vector<1x1x1x32xf32> to vector<1x32xf32>
    %179 = vector.broadcast %178 : vector<1x32xf32> to vector<8x32xf32>
    %180 = arith.addf %176, %179 : vector<8x32xf32>
    %cst_59 = arith.constant 0.000000e+00 : f32
    %181 = vector.broadcast %cst_59 : f32 to vector<8x32xf32>
    %182 = arith.maximumf %180, %181 : vector<8x32xf32>
    %183 = math.absf %180 : vector<8x32xf32>
    %cst_60 = arith.constant 0.000000e+00 : f32
    %184 = vector.broadcast %cst_60 : f32 to vector<8x32xf32>
    %185 = arith.subf %184, %183 : vector<8x32xf32>
    %186 = math.exp %185 : vector<8x32xf32>
    %cst_61 = arith.constant 1.000000e+00 : f32
    %187 = vector.broadcast %cst_61 : f32 to vector<8x32xf32>
    %188 = arith.addf %187, %186 : vector<8x32xf32>
    %189 = math.log %188 : vector<8x32xf32>
    %190 = arith.addf %182, %189 : vector<8x32xf32>
    %cst_62 = arith.constant 0.693147182 : f32
    %191 = vector.broadcast %cst_62 : f32 to vector<8x32xf32>
    %192 = arith.subf %190, %191 : vector<8x32xf32>
    %c0_63 = arith.constant 0 : index
    %c1 = arith.constant 1 : index
    %c0_64 = arith.constant 0 : index
    %c0_65 = arith.constant 0 : index
    %193 = vector.load %arg9[%c0_63, %c1, %c0_64, %c0_65] : memref<1x2x32x32xbf16, #tpu.memory_space<vmem>>, vector<1x1x32x32xbf16>
    %194 = vector.shape_cast %193 : vector<1x1x32x32xbf16> to vector<32x32xbf16>
    %195 = arith.truncf %192 : vector<8x32xf32> to vector<8x32xbf16>
    %cst_66 = arith.constant dense<0.000000e+00> : vector<8x32xf32>
    %196 = tpu.matmul %195, %194, %cst_66 {dimension_numbers = #tpu.dot_dimension_numbers<[1], [0], [0], [1], [0, 0, 1, 1], [], []>} : vector<8x32xbf16>, vector<32x32xbf16>, vector<8x32xf32> -> vector<8x32xf32>
    %c0_67 = arith.constant 0 : index
    %c1_68 = arith.constant 1 : index
    %c0_69 = arith.constant 0 : index
    %c0_70 = arith.constant 0 : index
    %197 = vector.load %arg10[%c0_67, %c1_68, %c0_69, %c0_70] : memref<1x2x1x32xf32, #tpu.memory_space<vmem>>, vector<1x1x1x32xf32>
    %198 = vector.shape_cast %197 : vector<1x1x1x32xf32> to vector<1x32xf32>
    %199 = vector.broadcast %198 : vector<1x32xf32> to vector<8x32xf32>
    %200 = arith.addf %196, %199 : vector<8x32xf32>
    %c0_71 = arith.constant 0 : index
    %c1_72 = arith.constant 1 : index
    %c0_73 = arith.constant 0 : index
    %c0_74 = arith.constant 0 : index
    %201 = vector.load %arg11[%c0_71, %c1_72, %c0_73, %c0_74] : memref<1x2x32x32xbf16, #tpu.memory_space<vmem>>, vector<1x1x32x32xbf16>
    %202 = vector.shape_cast %201 : vector<1x1x32x32xbf16> to vector<32x32xbf16>
    %203 = arith.truncf %200 : vector<8x32xf32> to vector<8x32xbf16>
    %cst_75 = arith.constant dense<0.000000e+00> : vector<8x32xf32>
    %204 = tpu.matmul %203, %202, %cst_75 {dimension_numbers = #tpu.dot_dimension_numbers<[1], [0], [0], [1], [0, 0, 1, 1], [], []>} : vector<8x32xbf16>, vector<32x32xbf16>, vector<8x32xf32> -> vector<8x32xf32>
    %205 = arith.addf %180, %204 : vector<8x32xf32>
    %c0_76 = arith.constant 0 : index
    %c1_77 = arith.constant 1 : index
    %c0_78 = arith.constant 0 : index
    %c0_79 = arith.constant 0 : index
    %206 = vector.load %arg12[%c0_76, %c1_77, %c0_78, %c0_79] : memref<1x2x1x32xf32, #tpu.memory_space<vmem>>, vector<1x1x1x32xf32>
    %207 = vector.shape_cast %206 : vector<1x1x1x32xf32> to vector<1x32xf32>
    %208 = vector.broadcast %207 : vector<1x32xf32> to vector<8x32xf32>
    %209 = arith.addf %205, %208 : vector<8x32xf32>
    %cst_80 = arith.constant 0.000000e+00 : f32
    %210 = vector.broadcast %cst_80 : f32 to vector<8x32xf32>
    %211 = arith.maximumf %209, %210 : vector<8x32xf32>
    %212 = math.absf %209 : vector<8x32xf32>
    %cst_81 = arith.constant 0.000000e+00 : f32
    %213 = vector.broadcast %cst_81 : f32 to vector<8x32xf32>
    %214 = arith.subf %213, %212 : vector<8x32xf32>
    %215 = math.exp %214 : vector<8x32xf32>
    %cst_82 = arith.constant 1.000000e+00 : f32
    %216 = vector.broadcast %cst_82 : f32 to vector<8x32xf32>
    %217 = arith.addf %216, %215 : vector<8x32xf32>
    %218 = math.log %217 : vector<8x32xf32>
    %219 = arith.addf %211, %218 : vector<8x32xf32>
    %cst_83 = arith.constant 0.693147182 : f32
    %220 = vector.broadcast %cst_83 : f32 to vector<8x32xf32>
    %221 = arith.subf %219, %220 : vector<8x32xf32>
    %c0_84 = arith.constant 0 : index
    %c0_85 = arith.constant 0 : index
    %c0_86 = arith.constant 0 : index
    %222 = vector.load %arg13[%c0_84, %c0_85, %c0_86] : memref<1x1x32xf32, #tpu.memory_space<vmem>>, vector<1x1x32xf32>
    %223 = vector.shape_cast %222 : vector<1x1x32xf32> to vector<1x32xf32>
    %224 = vector.broadcast %223 : vector<1x32xf32> to vector<8x32xf32>
    %225 = arith.mulf %224, %3 : vector<8x32xf32>
    %c0_87 = arith.constant 0 : index
    %c0_88 = arith.constant 0 : index
    %c0_89 = arith.constant 0 : index
    %226 = vector.load %arg14[%c0_87, %c0_88, %c0_89] : memref<1x32x32xbf16, #tpu.memory_space<vmem>>, vector<1x32x32xbf16>
    %227 = vector.shape_cast %226 : vector<1x32x32xbf16> to vector<32x32xbf16>
    %228 = arith.truncf %221 : vector<8x32xf32> to vector<8x32xbf16>
    %cst_90 = arith.constant dense<0.000000e+00> : vector<8x32xf32>
    %229 = tpu.matmul %228, %227, %cst_90 {dimension_numbers = #tpu.dot_dimension_numbers<[1], [0], [0], [1], [0, 0, 1, 1], [], []>} : vector<8x32xbf16>, vector<32x32xbf16>, vector<8x32xf32> -> vector<8x32xf32>
    %230 = arith.addf %225, %229 : vector<8x32xf32>
    %c0_91 = arith.constant 0 : index
    %c0_92 = arith.constant 0 : index
    %c0_93 = arith.constant 0 : index
    %231 = vector.load %arg15[%c0_91, %c0_92, %c0_93] : memref<1x1x32xf32, #tpu.memory_space<vmem>>, vector<1x1x32xf32>
    %232 = vector.shape_cast %231 : vector<1x1x32xf32> to vector<1x32xf32>
    %233 = vector.broadcast %232 : vector<1x32xf32> to vector<8x32xf32>
    %234 = arith.addf %230, %233 : vector<8x32xf32>
    %cst_94 = arith.constant 0.000000e+00 : f32
    %235 = vector.broadcast %cst_94 : f32 to vector<8x32xf32>
    %236 = arith.maximumf %234, %235 : vector<8x32xf32>
    %237 = math.absf %234 : vector<8x32xf32>
    %cst_95 = arith.constant 0.000000e+00 : f32
    %238 = vector.broadcast %cst_95 : f32 to vector<8x32xf32>
    %239 = arith.subf %238, %237 : vector<8x32xf32>
    %240 = math.exp %239 : vector<8x32xf32>
    %cst_96 = arith.constant 1.000000e+00 : f32
    %241 = vector.broadcast %cst_96 : f32 to vector<8x32xf32>
    %242 = arith.addf %241, %240 : vector<8x32xf32>
    %243 = math.log %242 : vector<8x32xf32>
    %244 = arith.addf %236, %243 : vector<8x32xf32>
    %cst_97 = arith.constant 0.693147182 : f32
    %245 = vector.broadcast %cst_97 : f32 to vector<8x32xf32>
    %246 = arith.subf %244, %245 : vector<8x32xf32>
    %c0_98 = arith.constant 0 : index
    %c0_99 = arith.constant 0 : index
    %c0_100 = arith.constant 0 : index
    %c0_101 = arith.constant 0 : index
    %247 = vector.load %arg16[%c0_98, %c0_99, %c0_100, %c0_101] : memref<1x2x32x32xbf16, #tpu.memory_space<vmem>>, vector<1x1x32x32xbf16>
    %248 = vector.shape_cast %247 : vector<1x1x32x32xbf16> to vector<32x32xbf16>
    %249 = arith.truncf %246 : vector<8x32xf32> to vector<8x32xbf16>
    %cst_102 = arith.constant dense<0.000000e+00> : vector<8x32xf32>
    %250 = tpu.matmul %249, %248, %cst_102 {dimension_numbers = #tpu.dot_dimension_numbers<[1], [0], [0], [1], [0, 0, 1, 1], [], []>} : vector<8x32xbf16>, vector<32x32xbf16>, vector<8x32xf32> -> vector<8x32xf32>
    %c0_103 = arith.constant 0 : index
    %c0_104 = arith.constant 0 : index
    %c0_105 = arith.constant 0 : index
    %c0_106 = arith.constant 0 : index
    %251 = vector.load %arg17[%c0_103, %c0_104, %c0_105, %c0_106] : memref<1x2x1x32xf32, #tpu.memory_space<vmem>>, vector<1x1x1x32xf32>
    %252 = vector.shape_cast %251 : vector<1x1x1x32xf32> to vector<1x32xf32>
    %253 = vector.broadcast %252 : vector<1x32xf32> to vector<8x32xf32>
    %254 = arith.addf %250, %253 : vector<8x32xf32>
    %c0_107 = arith.constant 0 : index
    %c0_108 = arith.constant 0 : index
    %c0_109 = arith.constant 0 : index
    %c0_110 = arith.constant 0 : index
    %255 = vector.load %arg18[%c0_107, %c0_108, %c0_109, %c0_110] : memref<1x2x32x32xbf16, #tpu.memory_space<vmem>>, vector<1x1x32x32xbf16>
    %256 = vector.shape_cast %255 : vector<1x1x32x32xbf16> to vector<32x32xbf16>
    %257 = arith.truncf %254 : vector<8x32xf32> to vector<8x32xbf16>
    %cst_111 = arith.constant dense<0.000000e+00> : vector<8x32xf32>
    %258 = tpu.matmul %257, %256, %cst_111 {dimension_numbers = #tpu.dot_dimension_numbers<[1], [0], [0], [1], [0, 0, 1, 1], [], []>} : vector<8x32xbf16>, vector<32x32xbf16>, vector<8x32xf32> -> vector<8x32xf32>
    %259 = arith.addf %234, %258 : vector<8x32xf32>
    %c0_112 = arith.constant 0 : index
    %c0_113 = arith.constant 0 : index
    %c0_114 = arith.constant 0 : index
    %c0_115 = arith.constant 0 : index
    %260 = vector.load %arg19[%c0_112, %c0_113, %c0_114, %c0_115] : memref<1x2x1x32xf32, #tpu.memory_space<vmem>>, vector<1x1x1x32xf32>
    %261 = vector.shape_cast %260 : vector<1x1x1x32xf32> to vector<1x32xf32>
    %262 = vector.broadcast %261 : vector<1x32xf32> to vector<8x32xf32>
    %263 = arith.addf %259, %262 : vector<8x32xf32>
    %cst_116 = arith.constant 0.000000e+00 : f32
    %264 = vector.broadcast %cst_116 : f32 to vector<8x32xf32>
    %265 = arith.maximumf %263, %264 : vector<8x32xf32>
    %266 = math.absf %263 : vector<8x32xf32>
    %cst_117 = arith.constant 0.000000e+00 : f32
    %267 = vector.broadcast %cst_117 : f32 to vector<8x32xf32>
    %268 = arith.subf %267, %266 : vector<8x32xf32>
    %269 = math.exp %268 : vector<8x32xf32>
    %cst_118 = arith.constant 1.000000e+00 : f32
    %270 = vector.broadcast %cst_118 : f32 to vector<8x32xf32>
    %271 = arith.addf %270, %269 : vector<8x32xf32>
    %272 = math.log %271 : vector<8x32xf32>
    %273 = arith.addf %265, %272 : vector<8x32xf32>
    %cst_119 = arith.constant 0.693147182 : f32
    %274 = vector.broadcast %cst_119 : f32 to vector<8x32xf32>
    %275 = arith.subf %273, %274 : vector<8x32xf32>
    %c0_120 = arith.constant 0 : index
    %c1_121 = arith.constant 1 : index
    %c0_122 = arith.constant 0 : index
    %c0_123 = arith.constant 0 : index
    %276 = vector.load %arg16[%c0_120, %c1_121, %c0_122, %c0_123] : memref<1x2x32x32xbf16, #tpu.memory_space<vmem>>, vector<1x1x32x32xbf16>
    %277 = vector.shape_cast %276 : vector<1x1x32x32xbf16> to vector<32x32xbf16>
    %278 = arith.truncf %275 : vector<8x32xf32> to vector<8x32xbf16>
    %cst_124 = arith.constant dense<0.000000e+00> : vector<8x32xf32>
    %279 = tpu.matmul %278, %277, %cst_124 {dimension_numbers = #tpu.dot_dimension_numbers<[1], [0], [0], [1], [0, 0, 1, 1], [], []>} : vector<8x32xbf16>, vector<32x32xbf16>, vector<8x32xf32> -> vector<8x32xf32>
    %c0_125 = arith.constant 0 : index
    %c1_126 = arith.constant 1 : index
    %c0_127 = arith.constant 0 : index
    %c0_128 = arith.constant 0 : index
    %280 = vector.load %arg17[%c0_125, %c1_126, %c0_127, %c0_128] : memref<1x2x1x32xf32, #tpu.memory_space<vmem>>, vector<1x1x1x32xf32>
    %281 = vector.shape_cast %280 : vector<1x1x1x32xf32> to vector<1x32xf32>
    %282 = vector.broadcast %281 : vector<1x32xf32> to vector<8x32xf32>
    %283 = arith.addf %279, %282 : vector<8x32xf32>
    %c0_129 = arith.constant 0 : index
    %c1_130 = arith.constant 1 : index
    %c0_131 = arith.constant 0 : index
    %c0_132 = arith.constant 0 : index
    %284 = vector.load %arg18[%c0_129, %c1_130, %c0_131, %c0_132] : memref<1x2x32x32xbf16, #tpu.memory_space<vmem>>, vector<1x1x32x32xbf16>
    %285 = vector.shape_cast %284 : vector<1x1x32x32xbf16> to vector<32x32xbf16>
    %286 = arith.truncf %283 : vector<8x32xf32> to vector<8x32xbf16>
    %cst_133 = arith.constant dense<0.000000e+00> : vector<8x32xf32>
    %287 = tpu.matmul %286, %285, %cst_133 {dimension_numbers = #tpu.dot_dimension_numbers<[1], [0], [0], [1], [0, 0, 1, 1], [], []>} : vector<8x32xbf16>, vector<32x32xbf16>, vector<8x32xf32> -> vector<8x32xf32>
    %288 = arith.addf %263, %287 : vector<8x32xf32>
    %c0_134 = arith.constant 0 : index
    %c1_135 = arith.constant 1 : index
    %c0_136 = arith.constant 0 : index
    %c0_137 = arith.constant 0 : index
    %289 = vector.load %arg19[%c0_134, %c1_135, %c0_136, %c0_137] : memref<1x2x1x32xf32, #tpu.memory_space<vmem>>, vector<1x1x1x32xf32>
    %290 = vector.shape_cast %289 : vector<1x1x1x32xf32> to vector<1x32xf32>
    %291 = vector.broadcast %290 : vector<1x32xf32> to vector<8x32xf32>
    %292 = arith.addf %288, %291 : vector<8x32xf32>
    %c0_138 = arith.constant 0 : index
    %c0_139 = arith.constant 0 : index
    %293 = vector.load %arg27[%c0_138, %c0_139] : memref<8x32xf32, #tpu.memory_space<vmem>>, vector<8x32xf32>
    tpu.vector_store %arg27[%c0_138, %c0_139], %292 {strides = array<i32>} : memref<8x32xf32, #tpu.memory_space<vmem>>, vector<8x32xf32>,
    %cst_140 = arith.constant 0.000000e+00 : f32
    %294 = vector.broadcast %cst_140 : f32 to vector<8x32xf32>
    %295 = arith.maximumf %292, %294 : vector<8x32xf32>
    %296 = math.absf %292 : vector<8x32xf32>
    %cst_141 = arith.constant 0.000000e+00 : f32
    %297 = vector.broadcast %cst_141 : f32 to vector<8x32xf32>
    %298 = arith.subf %297, %296 : vector<8x32xf32>
    %299 = math.exp %298 : vector<8x32xf32>
    %cst_142 = arith.constant 1.000000e+00 : f32
    %300 = vector.broadcast %cst_142 : f32 to vector<8x32xf32>
    %301 = arith.addf %300, %299 : vector<8x32xf32>
    %302 = math.log %301 : vector<8x32xf32>
    %303 = arith.addf %295, %302 : vector<8x32xf32>
    %cst_143 = arith.constant 0.693147182 : f32
    %304 = vector.broadcast %cst_143 : f32 to vector<8x32xf32>
    %305 = arith.subf %303, %304 : vector<8x32xf32>
    %c0_144 = arith.constant 0 : index
    %c0_145 = arith.constant 0 : index
    %c0_146 = arith.constant 0 : index
    %c0_147 = arith.constant 0 : index
    %306 = vector.load %arg20[%c0_144, %c0_145, %c0_146, %c0_147] : memref<1x1x32x32xbf16, #tpu.memory_space<vmem>>, vector<1x1x32x32xbf16>
    %307 = vector.shape_cast %306 : vector<1x1x32x32xbf16> to vector<32x32xbf16>
    %308 = arith.truncf %305 : vector<8x32xf32> to vector<8x32xbf16>
    %cst_148 = arith.constant dense<0.000000e+00> : vector<8x32xf32>
    %309 = tpu.matmul %308, %307, %cst_148 {dimension_numbers = #tpu.dot_dimension_numbers<[1], [0], [0], [1], [0, 0, 1, 1], [], []>} : vector<8x32xbf16>, vector<32x32xbf16>, vector<8x32xf32> -> vector<8x32xf32>
    %c0_149 = arith.constant 0 : index
    %c0_150 = arith.constant 0 : index
    %c0_151 = arith.constant 0 : index
    %c0_152 = arith.constant 0 : index
    %310 = vector.load %arg21[%c0_149, %c0_150, %c0_151, %c0_152] : memref<1x1x1x32xf32, #tpu.memory_space<vmem>>, vector<1x1x1x32xf32>
    %311 = vector.shape_cast %310 : vector<1x1x1x32xf32> to vector<1x32xf32>
    %312 = vector.broadcast %311 : vector<1x32xf32> to vector<8x32xf32>
    %313 = arith.addf %309, %312 : vector<8x32xf32>
    %c0_153 = arith.constant 0 : index
    %c0_154 = arith.constant 0 : index
    %c0_155 = arith.constant 0 : index
    %c0_156 = arith.constant 0 : index
    %314 = vector.load %arg22[%c0_153, %c0_154, %c0_155, %c0_156] : memref<1x1x32x32xbf16, #tpu.memory_space<vmem>>, vector<1x1x32x32xbf16>
    %315 = vector.shape_cast %314 : vector<1x1x32x32xbf16> to vector<32x32xbf16>
    %316 = arith.truncf %313 : vector<8x32xf32> to vector<8x32xbf16>
    %cst_157 = arith.constant dense<0.000000e+00> : vector<8x32xf32>
    %317 = tpu.matmul %316, %315, %cst_157 {dimension_numbers = #tpu.dot_dimension_numbers<[1], [0], [0], [1], [0, 0, 1, 1], [], []>} : vector<8x32xbf16>, vector<32x32xbf16>, vector<8x32xf32> -> vector<8x32xf32>
    %318 = arith.addf %292, %317 : vector<8x32xf32>
    %c0_158 = arith.constant 0 : index
    %c0_159 = arith.constant 0 : index
    %c0_160 = arith.constant 0 : index
    %c0_161 = arith.constant 0 : index
    %319 = vector.load %arg23[%c0_158, %c0_159, %c0_160, %c0_161] : memref<1x1x1x32xf32, #tpu.memory_space<vmem>>, vector<1x1x1x32xf32>
    %320 = vector.shape_cast %319 : vector<1x1x1x32xf32> to vector<1x32xf32>
    %321 = vector.broadcast %320 : vector<1x32xf32> to vector<8x32xf32>
    %322 = arith.addf %318, %321 : vector<8x32xf32>
    %cst_162 = arith.constant 0.000000e+00 : f32
    %323 = vector.broadcast %cst_162 : f32 to vector<8x32xf32>
    %324 = arith.maximumf %322, %323 : vector<8x32xf32>
    %325 = math.absf %322 : vector<8x32xf32>
    %cst_163 = arith.constant 0.000000e+00 : f32
    %326 = vector.broadcast %cst_163 : f32 to vector<8x32xf32>
    %327 = arith.subf %326, %325 : vector<8x32xf32>
    %328 = math.exp %327 : vector<8x32xf32>
    %cst_164 = arith.constant 1.000000e+00 : f32
    %329 = vector.broadcast %cst_164 : f32 to vector<8x32xf32>
    %330 = arith.addf %329, %328 : vector<8x32xf32>
    %331 = math.log %330 : vector<8x32xf32>
    %332 = arith.addf %324, %331 : vector<8x32xf32>
    %cst_165 = arith.constant 0.693147182 : f32
    %333 = vector.broadcast %cst_165 : f32 to vector<8x32xf32>
    %334 = arith.subf %332, %333 : vector<8x32xf32>
    %c0_166 = arith.constant 0 : index
    %c0_167 = arith.constant 0 : index
    %c0_168 = arith.constant 0 : index
    %335 = vector.load %arg24[%c0_166, %c0_167, %c0_168] : memref<1x32x2xbf16, #tpu.memory_space<vmem>>, vector<1x32x2xbf16>
    %336 = vector.shape_cast %335 : vector<1x32x2xbf16> to vector<32x2xbf16>
    %337 = arith.truncf %334 : vector<8x32xf32> to vector<8x32xbf16>
    %cst_169 = arith.constant dense<0.000000e+00> : vector<8x2xf32>
    %338 = tpu.matmul %337, %336, %cst_169 {dimension_numbers = #tpu.dot_dimension_numbers<[1], [0], [0], [1], [0, 0, 1, 1], [], []>} : vector<8x32xbf16>, vector<32x2xbf16>, vector<8x2xf32> -> vector<8x2xf32>
    %c0_170 = arith.constant 0 : index
    %c0_171 = arith.constant 0 : index
    %339 = vector.load %arg28[%c0_170, %c0_171] : memref<8x2xf32, #tpu.memory_space<vmem>>, vector<8x2xf32>
    %340 = arith.addf %339, %338 : vector<8x2xf32>
    %c0_172 = arith.constant 0 : index
    %c0_173 = arith.constant 0 : index
    %341 = vector.load %arg28[%c0_172, %c0_173] : memref<8x2xf32, #tpu.memory_space<vmem>>, vector<8x2xf32>
    tpu.vector_store %arg28[%c0_172, %c0_173], %340 {strides = array<i32>} : memref<8x2xf32, #tpu.memory_space<vmem>>, vector<8x2xf32>,
    %342 = arith.mulf %338, %338 : vector<8x2xf32>
    %cst_174 = arith.constant 0.000000e+00 : f32
    %343 = vector.broadcast %cst_174 : f32 to vector<8x2xf32>
    %344 = arith.addf %342, %343 : vector<8x2xf32>
    %cst_175 = arith.constant 1.000000e-07 : f32
    %345 = vector.broadcast %cst_175 : f32 to vector<8x2xf32>
    %346 = arith.addf %344, %345 : vector<8x2xf32>
    %347 = arith.divf %342, %346 : vector<8x2xf32>
    %cst_176 = arith.constant dense<0.000000e+00> : vector<8xf32>
    %348 = vector.multi_reduction <add>, %347, %cst_176 [1] : vector<8x2xf32> to vector<8xf32>
    %349 = vector.shape_cast %348 : vector<8xf32> to vector<8x1xf32>
    %cst_177 = arith.constant dense<0.000000e+00> : vector<1xf32>
    %350 = vector.multi_reduction <add>, %349, %cst_177 [0] : vector<8x1xf32> to vector<1xf32>
    %351 = vector.shape_cast %350 : vector<1xf32> to vector<1x1xf32>
    %cst_178 = arith.constant 1.600000e+01 : f32
    %352 = vector.broadcast %cst_178 : f32 to vector<1x1xf32>
    %353 = arith.divf %351, %352 : vector<1x1xf32>
    %c0_i32_179 = arith.constant 0 : i32
    %354 = arith.cmpi sgt, %arg0, %c0_i32_179 : i32
    %355 = arith.extui %354 : i1 to i32
    %c0_i32_180 = arith.constant 0 : i32
    %356 = arith.cmpi ne, %355, %c0_i32_180 : i32
    scf.if %356 {
      %c0_182 = arith.constant 0 : index
      %c0_183 = arith.constant 0 : index
      %360 = vector.load %arg29[%c0_182, %c0_183] : memref<1x1xf32, #tpu.memory_space<vmem>>, vector<1x1xf32>
      %361 = arith.addf %360, %353 : vector<1x1xf32>
      %c0_184 = arith.constant 0 : index
      %c0_185 = arith.constant 0 : index
      %362 = vector.load %arg29[%c0_184, %c0_185] : memref<1x1xf32, #tpu.memory_space<vmem>>, vector<1x1xf32>
      tpu.vector_store %arg29[%c0_184, %c0_185], %361 {strides = array<i32>} : memref<1x1xf32, #tpu.memory_space<vmem>>, vector<1x1xf32>,
    } else {
    }
    %c1_i32 = arith.constant 1 : i32
    %357 = arith.cmpi eq, %arg0, %c1_i32 : i32
    %358 = arith.extui %357 : i1 to i32
    %c0_i32_181 = arith.constant 0 : i32
    %359 = arith.cmpi ne, %358, %c0_i32_181 : i32
    scf.if %359 {
      %c0_182 = arith.constant 0 : index
      %c0_183 = arith.constant 0 : index
      %360 = vector.load %arg28[%c0_182, %c0_183] : memref<8x2xf32, #tpu.memory_space<vmem>>, vector<8x2xf32>
      %c0_184 = arith.constant 0 : index
      %c0_185 = arith.constant 0 : index
      %361 = vector.load %arg25[%c0_184, %c0_185] : memref<8x2xf32, #tpu.memory_space<vmem>>, vector<8x2xf32>
      tpu.vector_store %arg25[%c0_184, %c0_185], %360 {strides = array<i32>} : memref<8x2xf32, #tpu.memory_space<vmem>>, vector<8x2xf32>,
      %c0_186 = arith.constant 0 : index
      %c0_187 = arith.constant 0 : index
      %362 = vector.load %arg29[%c0_186, %c0_187] : memref<1x1xf32, #tpu.memory_space<vmem>>, vector<1x1xf32>
      %c0_188 = arith.constant 0 : index
      %c0_189 = arith.constant 0 : index
      %363 = vector.load %arg26[%c0_188, %c0_189] : memref<1x1xf32, #tpu.memory_space<vmem>>, vector<1x1xf32>
      tpu.vector_store %arg26[%c0_188, %c0_189], %362 {strides = array<i32>} : memref<1x1xf32, #tpu.memory_space<vmem>>, vector<1x1xf32>,
    } else {
    }
    return
  }
  func.func @transform_0(%arg0: i32) -> (i32, i32) {
    %c0_i32 = arith.constant 0 : i32
    %c0_i32_0 = arith.constant 0 : i32
    %c0_i32_1 = arith.constant 0 : i32
    return %c0_i32, %c0_i32_0 : i32, i32
  }
  func.func @transform_1(%arg0: i32) -> (i32, i32) {
    %c0_i32 = arith.constant 0 : i32
    %c0_i32_0 = arith.constant 0 : i32
    %c0_i32_1 = arith.constant 0 : i32
    return %c0_i32, %c0_i32_0 : i32, i32
  }
  func.func @transform_2(%arg0: i32) -> (i32, i32) {
    %c0_i32 = arith.constant 0 : i32
    %c0_i32_0 = arith.constant 0 : i32
    %c0_i32_1 = arith.constant 0 : i32
    return %c0_i32, %c0_i32_0 : i32, i32
  }
  func.func @transform_3(%arg0: i32) -> (i32, i32) {
    %c0_i32 = arith.constant 0 : i32
    %c0_i32_0 = arith.constant 0 : i32
    %c0_i32_1 = arith.constant 0 : i32
    return %c0_i32, %c0_i32_0 : i32, i32
  }
  func.func @transform_4(%arg0: i32) -> (i32, i32) {
    %c0_i32 = arith.constant 0 : i32
    %c0_i32_0 = arith.constant 0 : i32
    %c0_i32_1 = arith.constant 0 : i32
    return %c0_i32, %c0_i32_0 : i32, i32
  }
  func.func @transform_5(%arg0: i32) -> (i32, i32, i32) {
    %c0_i32 = arith.constant 0 : i32
    %c0_i32_0 = arith.constant 0 : i32
    %c0_i32_1 = arith.constant 0 : i32
    return %arg0, %c0_i32, %c0_i32_0 : i32, i32, i32
  }
  func.func @transform_6(%arg0: i32) -> (i32, i32, i32) {
    %c0_i32 = arith.constant 0 : i32
    %c0_i32_0 = arith.constant 0 : i32
    %c0_i32_1 = arith.constant 0 : i32
    return %arg0, %c0_i32, %c0_i32_0 : i32, i32, i32
  }
  func.func @transform_7(%arg0: i32) -> (i32, i32, i32) {
    %c0_i32 = arith.constant 0 : i32
    %c0_i32_0 = arith.constant 0 : i32
    %c0_i32_1 = arith.constant 0 : i32
    return %arg0, %c0_i32, %c0_i32_0 : i32, i32, i32
  }
  func.func @transform_8(%arg0: i32) -> (i32, i32, i32, i32) {
    %c0_i32 = arith.constant 0 : i32
    %c0_i32_0 = arith.constant 0 : i32
    %c0_i32_1 = arith.constant 0 : i32
    %c0_i32_2 = arith.constant 0 : i32
    return %arg0, %c0_i32, %c0_i32_0, %c0_i32_1 : i32, i32, i32, i32
  }
  func.func @transform_9(%arg0: i32) -> (i32, i32, i32, i32) {
    %c0_i32 = arith.constant 0 : i32
    %c0_i32_0 = arith.constant 0 : i32
    %c0_i32_1 = arith.constant 0 : i32
    %c0_i32_2 = arith.constant 0 : i32
    return %arg0, %c0_i32, %c0_i32_0, %c0_i32_1 : i32, i32, i32, i32
  }
  func.func @transform_10(%arg0: i32) -> (i32, i32, i32, i32) {
    %c0_i32 = arith.constant 0 : i32
    %c0_i32_0 = arith.constant 0 : i32
    %c0_i32_1 = arith.constant 0 : i32
    %c0_i32_2 = arith.constant 0 : i32
    return %arg0, %c0_i32, %c0_i32_0, %c0_i32_1 : i32, i32, i32, i32
  }
  func.func @transform_11(%arg0: i32) -> (i32, i32, i32, i32) {
    %c0_i32 = arith.constant 0 : i32
    %c0_i32_0 = arith.constant 0 : i32
    %c0_i32_1 = arith.constant 0 : i32
    %c0_i32_2 = arith.constant 0 : i32
    return %arg0, %c0_i32, %c0_i32_0, %c0_i32_1 : i32, i32, i32, i32
  }
  func.func @transform_12(%arg0: i32) -> (i32, i32, i32) {
    %c0_i32 = arith.constant 0 : i32
    %c0_i32_0 = arith.constant 0 : i32
    %c0_i32_1 = arith.constant 0 : i32
    return %arg0, %c0_i32, %c0_i32_0 : i32, i32, i32
  }
  func.func @transform_13(%arg0: i32) -> (i32, i32, i32) {
    %c0_i32 = arith.constant 0 : i32
    %c0_i32_0 = arith.constant 0 : i32
    %c0_i32_1 = arith.constant 0 : i32
    return %arg0, %c0_i32, %c0_i32_0 : i32, i32, i32
  }
  func.func @transform_14(%arg0: i32) -> (i32, i32, i32) {
    %c0_i32 = arith.constant 0 : i32
    %c0_i32_0 = arith.constant 0 : i32
    %c0_i32_1 = arith.constant 0 : i32
    return %arg0, %c0_i32, %c0_i32_0 : i32, i32, i32
  }
  func.func @transform_15(%arg0: i32) -> (i32, i32, i32, i32) {
    %c0_i32 = arith.constant 0 : i32
    %c0_i32_0 = arith.constant 0 : i32
    %c0_i32_1 = arith.constant 0 : i32
    %c0_i32_2 = arith.constant 0 : i32
    return %arg0, %c0_i32, %c0_i32_0, %c0_i32_1 : i32, i32, i32, i32
  }
  func.func @transform_16(%arg0: i32) -> (i32, i32, i32, i32) {
    %c0_i32 = arith.constant 0 : i32
    %c0_i32_0 = arith.constant 0 : i32
    %c0_i32_1 = arith.constant 0 : i32
    %c0_i32_2 = arith.constant 0 : i32
    return %arg0, %c0_i32, %c0_i32_0, %c0_i32_1 : i32, i32, i32, i32
  }
  func.func @transform_17(%arg0: i32) -> (i32, i32, i32, i32) {
    %c0_i32 = arith.constant 0 : i32
    %c0_i32_0 = arith.constant 0 : i32
    %c0_i32_1 = arith.constant 0 : i32
    %c0_i32_2 = arith.constant 0 : i32
    return %arg0, %c0_i32, %c0_i32_0, %c0_i32_1 : i32, i32, i32, i32
  }
  func.func @transform_18(%arg0: i32) -> (i32, i32, i32, i32) {
    %c0_i32 = arith.constant 0 : i32
    %c0_i32_0 = arith.constant 0 : i32
    %c0_i32_1 = arith.constant 0 : i32
    %c0_i32_2 = arith.constant 0 : i32
    return %arg0, %c0_i32, %c0_i32_0, %c0_i32_1 : i32, i32, i32, i32
  }
  func.func @transform_19(%arg0: i32) -> (i32, i32, i32, i32) {
    %c0_i32 = arith.constant 0 : i32
    %c0_i32_0 = arith.constant 0 : i32
    %c0_i32_1 = arith.constant 0 : i32
    %c0_i32_2 = arith.constant 0 : i32
    return %arg0, %c0_i32, %c0_i32_0, %c0_i32_1 : i32, i32, i32, i32
  }
  func.func @transform_20(%arg0: i32) -> (i32, i32, i32, i32) {
    %c0_i32 = arith.constant 0 : i32
    %c0_i32_0 = arith.constant 0 : i32
    %c0_i32_1 = arith.constant 0 : i32
    %c0_i32_2 = arith.constant 0 : i32
    return %arg0, %c0_i32, %c0_i32_0, %c0_i32_1 : i32, i32, i32, i32
  }
  func.func @transform_21(%arg0: i32) -> (i32, i32, i32, i32) {
    %c0_i32 = arith.constant 0 : i32
    %c0_i32_0 = arith.constant 0 : i32
    %c0_i32_1 = arith.constant 0 : i32
    %c0_i32_2 = arith.constant 0 : i32
    return %arg0, %c0_i32, %c0_i32_0, %c0_i32_1 : i32, i32, i32, i32
  }
  func.func @transform_22(%arg0: i32) -> (i32, i32, i32, i32) {
    %c0_i32 = arith.constant 0 : i32
    %c0_i32_0 = arith.constant 0 : i32
    %c0_i32_1 = arith.constant 0 : i32
    %c0_i32_2 = arith.constant 0 : i32
    return %arg0, %c0_i32, %c0_i32_0, %c0_i32_1 : i32, i32, i32, i32
  }
  func.func @transform_23(%arg0: i32) -> (i32, i32, i32) {
    %c0_i32 = arith.constant 0 : i32
    %c0_i32_0 = arith.constant 0 : i32
    %c0_i32_1 = arith.constant 0 : i32
    return %arg0, %c0_i32, %c0_i32_0 : i32, i32, i32
  }
  func.func @transform_24(%arg0: i32) -> (i32, i32) {
    %c0_i32 = arith.constant 0 : i32
    %c0_i32_0 = arith.constant 0 : i32
    %c0_i32_1 = arith.constant 0 : i32
    return %c0_i32, %c0_i32_0 : i32, i32
  }
  func.func @transform_25(%arg0: i32) -> (i32, i32) {
    %c0_i32 = arith.constant 0 : i32
    %c0_i32_0 = arith.constant 0 : i32
    %c0_i32_1 = arith.constant 0 : i32
    return %c0_i32, %c0_i32_0 : i32, i32
  }
}

</mosaic_0001>

<llo_original>
// kernel: tpu_custom_call.1
$region0: #{tpu_custom_call.1}
  #allocation0 [shape = 'u32[]', space=smem, size = 0x4, offset = 0x4, fixed_abs, tag = 'smem constant byte address 0x4 - core index']
  #allocation1 [shape = 'u32[144,128]{1,0:T(1,128)}', space=vmem, size = 0x12000, scoped, tag = 'internal scratch']
  #allocation2 [shape = 'f32[8,32]{1,0:T(8,128)}', space=vmem, size = 0x1000, scoped, tag = 'scratch operand']
  #allocation3 [shape = 'f32[8,2]{1,0:T(8,128)}', space=vmem, size = 0x1000, scoped, tag = 'scratch operand']
  #allocation4 [shape = 'f32[1,1]{1,0:T(1,128)}', space=vmem, size = 0x200, scoped, tag = 'scratch operand']
  #allocation5 [shape = 'f32[32,5]{1,0:T(8,128)}', space=vmem, size = 0x4000, scoped, tag = 'scratch operand']
  #allocation6 [shape = 'bf16[32,8]{1,0:T(16,128)(2,1)}', space=vmem, size = 0x2000, scoped, tag = 'scratch operand']
  %s0 = inlined_call_operand.vmem [shape: s32[32,1], index: 0, kind: input, shape index: {}]
  %s1 = inlined_call_operand.vmem [shape: f32[32,1], index: 1, kind: input, shape index: {}]
  %s2 = inlined_call_operand.hbm [shape: f32[1,5], index: 2, kind: input, shape index: {}]
  %s3 = inlined_call_operand.hbm [shape: f32[1,5], index: 3, kind: input, shape index: {}]
  %s4 = inlined_call_operand.hbm [shape: f32[8,32], index: 4, kind: input, shape index: {}]
  %s5 = inlined_call_operand.vmem [shape: f32[2,5,32], index: 5, kind: input, shape index: {}]
  %s6 = inlined_call_operand.hbm [shape: bf16[2,32,64], index: 6, kind: input, shape index: {}]
  %s7 = inlined_call_operand.hbm [shape: f32[2,1,64], index: 7, kind: input, shape index: {}]
  %s8 = inlined_call_operand.vmem [shape: bf16[2,2,32,32], index: 8, kind: input, shape index: {}]
  %s9 = inlined_call_operand.hbm [shape: f32[2,2,1,32], index: 9, kind: input, shape index: {}]
  %s10 = inlined_call_operand.vmem [shape: bf16[2,2,32,32], index: 10, kind: input, shape index: {}]
  %s11 = inlined_call_operand.hbm [shape: f32[2,2,1,32], index: 11, kind: input, shape index: {}]
  %s12 = inlined_call_operand.vmem [shape: f32[2,1,32], index: 12, kind: input, shape index: {}]
  %s13 = inlined_call_operand.vmem [shape: bf16[2,32,32], index: 13, kind: input, shape index: {}]
  %s14 = inlined_call_operand.hbm [shape: f32[2,1,32], index: 14, kind: input, shape index: {}]
  %s15 = inlined_call_operand.hbm [shape: bf16[2,2,32,32], index: 15, kind: input, shape index: {}]
  %s16 = inlined_call_operand.hbm [shape: f32[2,2,1,32], index: 16, kind: input, shape index: {}]
  %s17 = inlined_call_operand.hbm [shape: bf16[2,2,32,32], index: 17, kind: input, shape index: {}]
  %s18 = inlined_call_operand.hbm [shape: f32[2,2,1,32], index: 18, kind: input, shape index: {}]
  %s19 = inlined_call_operand.vmem [shape: bf16[2,1,32,32], index: 19, kind: input, shape index: {}]
  %s20 = inlined_call_operand.vmem [shape: f32[2,1,1,32], index: 20, kind: input, shape index: {}]
  %s21 = inlined_call_operand.hbm [shape: bf16[2,1,32,32], index: 21, kind: input, shape index: {}]
  %s22 = inlined_call_operand.vmem [shape: f32[2,1,1,32], index: 22, kind: input, shape index: {}]
  %s23 = inlined_call_operand.vmem [shape: bf16[2,32,2], index: 23, kind: input, shape index: {}]
  %s24 = inlined_call_operand.vmem [shape: f32[8,2], index: 24, kind: output, shape index: {0}]
  %s25 = inlined_call_operand.hbm [shape: f32[1,1], index: 25, kind: output, shape index: {1}]
  %26 = xla_tuple %s24, %s25
  %s27 = sld [smem:[#allocation0]]
  $region201: #{tpu_custom_call.1} parent=0
    _
  %s29 = ssub.s32 1, %s27
  %s30 = scalar_select 0, %s29, %s27
  $region1: #{tpu_custom_call.1} parent=0
    #allocation7 [shape = 'u8[512]{0}', space=vmem, size = 0x400, scoped, tag = 'input window, operand 2, single buffered']
    #allocation8 [shape = 's32[2]{0}', space=sflag, size = 0x8, scoped, tag = 'scoped memory for tpu_custom_call.1']
    #allocation9 [shape = 's32[2]{0}', space=sflag, size = 0x8, scoped, tag = 'scoped memory for tpu_custom_call.1']
    #allocation10 [shape = 'u8[512]{0}', space=vmem, size = 0x400, scoped, tag = 'input window, operand 3, single buffered']
    #allocation11 [shape = 's32[1]{0}', space=sflag, size = 0x4, scoped, tag = 'scoped memory for tpu_custom_call.1']
    #allocation12 [shape = 'u8[4096]{0}', space=vmem, size = 0x1000, scoped, tag = 'input window, operand 4, single buffered']
    #allocation13 [shape = 'u8[16384]{0}', space=vmem, size = 0x4000, scoped, tag = 'input window, operand 6']
    #allocation14 [shape = 's32[2]{0}', space=sflag, size = 0x8, scoped, tag = 'scoped memory for tpu_custom_call.1']
    #allocation15 [shape = 'u8[1024]{0}', space=vmem, size = 0x400, scoped, tag = 'input window, operand 7']
    #allocation16 [shape = 'u8[2048]{0}', space=vmem, size = 0x800, scoped, tag = 'input window, operand 9']
    #allocation17 [shape = 's32[2]{0}', space=sflag, size = 0x8, scoped, tag = 'scoped memory for tpu_custom_call.1']
    #allocation18 [shape = 'u8[2048]{0}', space=vmem, size = 0x800, scoped, tag = 'input window, operand 11']
    #allocation19 [shape = 'u8[1024]{0}', space=vmem, size = 0x400, scoped, tag = 'input window, operand 14']
    #allocation20 [shape = 's32[2]{0}', space=sflag, size = 0x8, scoped, tag = 'scoped memory for tpu_custom_call.1']
    #allocation21 [shape = 'u8[32768]{0}', space=vmem, size = 0x8000, scoped, tag = 'input window, operand 15']
    #allocation22 [shape = 'u8[2048]{0}', space=vmem, size = 0x800, scoped, tag = 'input window, operand 16']
    #allocation23 [shape = 's32[2]{0}', space=sflag, size = 0x8, scoped, tag = 'scoped memory for tpu_custom_call.1']
    #allocation24 [shape = 'u8[32768]{0}', space=vmem, size = 0x8000, scoped, tag = 'input window, operand 17']
    #allocation25 [shape = 'u8[2048]{0}', space=vmem, size = 0x800, scoped, tag = 'input window, operand 18']
    #allocation26 [shape = 's32[2]{0}', space=sflag, size = 0x8, scoped, tag = 'scoped memory for tpu_custom_call.1']
    #allocation27 [shape = 'u8[16384]{0}', space=vmem, size = 0x4000, scoped, tag = 'input window, operand 21']
    #allocation28 [shape = 'u8[512]{0}', space=vmem, size = 0x400, scoped, tag = 'output window, operand 1, single buffered']
    %31 = vsyncpa [#allocation8], 0
    %32 = vsyncpa [#allocation11], 0
    %33 = vsyncpa [#allocation14], 0
    %s34 = scalar_lea.sflag [#allocation14], 1
    %35 = vsyncpa %s34, 0
    %36 = vsyncpa [#allocation17], 0
    %s37 = scalar_lea.sflag [#allocation17], 1
    %38 = vsyncpa %s37, 0
    %39 = vsyncpa [#allocation20], 0
    %s40 = scalar_lea.sflag [#allocation20], 1
    %41 = vsyncpa %s40, 0
    %42 = vsyncpa [#allocation23], 0
    %s43 = scalar_lea.sflag [#allocation23], 1
    %44 = vsyncpa %s43, 0
    %45 = vsyncpa [#allocation26], 0
    %s46 = scalar_lea.sflag [#allocation26], 1
    %47 = vsyncpa %s46, 0
    %48 = vsyncpa [#allocation9], 0
    loop: start=0, step=1, limit=4
    $region2: #{tpu_custom_call.1} parent=1 // loop_pre_header
      _
    $region3: #{tpu_custom_call.1} parent=1 // loop_header
      %s50 = sphi 0, %s54
      %p51 = scmp.ge.s32.totalorder %s50, 4
      %s58 = sphi 0, %s58
      %s60 = sphi 0, %s58
      %s61 = sphi 0, %s60
      %s75 = sphi 0, %s61
      %s79 = sphi 0, %s79
      %s81 = sphi 0, %s79
      %s82 = sphi 0, %s81
      %s96 = sphi 0, %s82
      %s100 = sphi 0, %s100
      %s102 = sphi 0, %s100
      %s103 = sphi 0, %s102
      %s117 = sphi 0, %s103
      %s121 = sphi 0, %s121
      %s123 = sphi 0, %s121
      %s124 = sphi 0, %s123
      %s138 = sphi 0, %s124
      %s142 = sphi 0, %s142
      %s144 = sphi 0, %s142
      %s145 = sphi 0, %s144
      %s159 = sphi 0, %s145
      %s165 = sphi 0, %s167
      %s168 = sphi 0, %s165
      %s169 = sphi 0, %s168
      %s185 = sphi 0, %s169
      %s191 = sphi 0, %s193
      %s194 = sphi 0, %s191
      %s195 = sphi 0, %s194
      %s211 = sphi 0, %s195
      %s217 = sphi 0, %s219
      %s220 = sphi 0, %s217
      %s221 = sphi 0, %s220
      %s237 = sphi 0, %s221
      %s243 = sphi 0, %s245
      %s246 = sphi 0, %s243
      %s247 = sphi 0, %s246
      %s263 = sphi 0, %s247
      %s269 = sphi 0, %s271
      %s272 = sphi 0, %s269
      %s273 = sphi 0, %s272
      %s289 = sphi 0, %s273
      %s295 = sphi 0, %s297
      %s298 = sphi 0, %s295
      %s299 = sphi 0, %s298
      %s315 = sphi 0, %s299
      %s321 = sphi 0, %s323
      %s324 = sphi 0, %s321
      %s325 = sphi 0, %s324
      %s341 = sphi 0, %s325
      %s347 = sphi 0, %s349
      %s350 = sphi 0, %s347
      %s351 = sphi 0, %s350
      %s367 = sphi 0, %s351
      %s373 = sphi 0, %s375
      %s376 = sphi 0, %s373
      %s377 = sphi 0, %s376
      %s393 = sphi 0, %s377
      %s399 = sphi 0, %s401
      %s402 = sphi 0, %s399
      %s403 = sphi 0, %s402
      %s419 = sphi 0, %s403
      %s425 = sphi 0, %s427
      %s428 = sphi 0, %s425
      %s429 = sphi 0, %s428
      %s445 = sphi 0, %s429
      %s451 = sphi 0, %s453
      %s454 = sphi 0, %s451
      %s455 = sphi 0, %s454
      %s471 = sphi 0, %s455
      %s477 = sphi 0, %s479
      %s480 = sphi 0, %s477
      %s481 = sphi 0, %s480
      %s497 = sphi 0, %s481
      %s503 = sphi 0, %s505
      %s506 = sphi 0, %s503
      %s507 = sphi 0, %s506
      %s523 = sphi 0, %s507
      %s529 = sphi 0, %s531
      %s532 = sphi 0, %s529
      %s533 = sphi 0, %s532
      %s549 = sphi 0, %s533
      %s555 = sphi 0, %s557
      %s558 = sphi 0, %s555
      %s559 = sphi 0, %s558
      %s575 = sphi 0, %s559
      %s581 = sphi 0, %s583
      %s584 = sphi 0, %s581
      %s585 = sphi 0, %s584
      %s601 = sphi 0, %s585
      %s607 = sphi 0, %s609
      %s610 = sphi 0, %s607
      %s611 = sphi 0, %s610
      %s627 = sphi 0, %s611
      %s633 = sphi 0, %s635
      %s636 = sphi 0, %s633
      %s637 = sphi 0, %s636
      %s653 = sphi 0, %s637
      %s657 = sphi 0, %s657
      %s659 = sphi 0, %s657
      %s660 = sphi 0, %s659
      %s674 = sphi 0, %s660
      %s678 = sphi 0, %s678
      %s680 = sphi 0, %s678
      %s681 = sphi 0, %s680
      %s695 = sphi 0, %s681
    $region4: #{tpu_custom_call.1} parent=1 // loop_header_branch
      %53 = sbr.rel (%p51) target = $region8
    $region5: #{tpu_custom_call.1} parent=1 // loop_body
      %s55 = ssub.s32 %s50, 1
      %s56 = ssub.s32 %s50, 2
      %s57 = sadd.s32 %s50, 1
      %s59 = sadd.s32 %s58, 1
      %p62 = scmp.eq.s32.totalorder %s50, 1
      %p63 = scmp.ne.s32.totalorder %s58, %s60
      %p64 = scmp.eq.s32.totalorder %s50, 0
      %p65 = por %p63, %p64
      %p66 = scmp.ne.s32.totalorder %s58, %s60
      %p67 = scmp.eq.s32.totalorder %s55, 1
      %p68 = por %p66, %p67
      %p69 = scmp.ne.s32.totalorder %s60, %s61
      %p70 = scmp.eq.s32.totalorder %s55, 0
      %p71 = por %p69, %p70
      %p72 = scmp.ne.s32.totalorder %s60, %s61
      %p73 = scmp.eq.s32.totalorder %s56, 1
      %p74 = por %p72, %p73
      %p76 = scmp.ne.s32.totalorder %s61, %s75
      %p77 = scmp.eq.s32.totalorder %s56, 0
      %p78 = por %p76, %p77
      %s80 = sadd.s32 %s79, 1
      %p83 = scmp.eq.s32.totalorder %s50, 1
      %p84 = scmp.ne.s32.totalorder %s79, %s81
      %p85 = scmp.eq.s32.totalorder %s50, 0
      %p86 = por %p84, %p85
      %p87 = scmp.ne.s32.totalorder %s79, %s81
      %p88 = scmp.eq.s32.totalorder %s55, 1
      %p89 = por %p87, %p88
      %p90 = scmp.ne.s32.totalorder %s81, %s82
      %p91 = scmp.eq.s32.totalorder %s55, 0
      %p92 = por %p90, %p91
      %p93 = scmp.ne.s32.totalorder %s81, %s82
      %p94 = scmp.eq.s32.totalorder %s56, 1
      %p95 = por %p93, %p94
      %p97 = scmp.ne.s32.totalorder %s82, %s96
      %p98 = scmp.eq.s32.totalorder %s56, 0
      %p99 = por %p97, %p98
      %s101 = sadd.s32 %s100, 1
      %p104 = scmp.eq.s32.totalorder %s50, 1
      %p105 = scmp.ne.s32.totalorder %s100, %s102
      %p106 = scmp.eq.s32.totalorder %s50, 0
      %p107 = por %p105, %p106
      %p108 = scmp.ne.s32.totalorder %s100, %s102
      %p109 = scmp.eq.s32.totalorder %s55, 1
      %p110 = por %p108, %p109
      %p111 = scmp.ne.s32.totalorder %s102, %s103
      %p112 = scmp.eq.s32.totalorder %s55, 0
      %p113 = por %p111, %p112
      %p114 = scmp.ne.s32.totalorder %s102, %s103
      %p115 = scmp.eq.s32.totalorder %s56, 1
      %p116 = por %p114, %p115
      %p118 = scmp.ne.s32.totalorder %s103, %s117
      %p119 = scmp.eq.s32.totalorder %s56, 0
      %p120 = por %p118, %p119
      %s122 = sadd.s32 %s121, 1
      %p125 = scmp.eq.s32.totalorder %s50, 1
      %p126 = scmp.ne.s32.totalorder %s121, %s123
      %p127 = scmp.eq.s32.totalorder %s50, 0
      %p128 = por %p126, %p127
      %p129 = scmp.ne.s32.totalorder %s121, %s123
      %p130 = scmp.eq.s32.totalorder %s55, 1
      %p131 = por %p129, %p130
      %p132 = scmp.ne.s32.totalorder %s123, %s124
      %p133 = scmp.eq.s32.totalorder %s55, 0
      %p134 = por %p132, %p133
      %p135 = scmp.ne.s32.totalorder %s123, %s124
      %p136 = scmp.eq.s32.totalorder %s56, 1
      %p137 = por %p135, %p136
      %p139 = scmp.ne.s32.totalorder %s124, %s138
      %p140 = scmp.eq.s32.totalorder %s56, 0
      %p141 = por %p139, %p140
      %s143 = sadd.s32 %s142, 1
      %p146 = scmp.eq.s32.totalorder %s50, 1
      %p147 = scmp.ne.s32.totalorder %s142, %s144
      %p148 = scmp.eq.s32.totalorder %s50, 0
      %p149 = por %p147, %p148
      %p150 = scmp.ne.s32.totalorder %s142, %s144
      %p151 = scmp.eq.s32.totalorder %s55, 1
      %p152 = por %p150, %p151
      %p153 = scmp.ne.s32.totalorder %s144, %s145
      %p154 = scmp.eq.s32.totalorder %s55, 0
      %p155 = por %p153, %p154
      %p156 = scmp.ne.s32.totalorder %s144, %s145
      %p157 = scmp.eq.s32.totalorder %s56, 1
      %p158 = por %p156, %p157
      %p160 = scmp.ne.s32.totalorder %s145, %s159
      %p161 = scmp.eq.s32.totalorder %s56, 0
      %p162 = por %p160, %p161
      %s163 = ssub.s32 %s50, %s57
      %p164 = scmp.eq.s32.totalorder %s163, 0
      %s166 = sadd.s32 %s165, 1
      %s167 = scalar_select %p164, %s165, %s166
      %p170 = pneg %p164
      %p171 = scmp.eq.s32.totalorder %s50, 1
      %p172 = por %p170, %p171
      %p173 = scmp.ne.s32.totalorder %s165, %s168
      %p174 = scmp.eq.s32.totalorder %s50, 0
      %p175 = por %p173, %p174
      %p176 = scmp.ne.s32.totalorder %s165, %s168
      %p177 = scmp.eq.s32.totalorder %s55, 1
      %p178 = por %p176, %p177
      %p179 = scmp.ne.s32.totalorder %s168, %s169
      %p180 = scmp.eq.s32.totalorder %s55, 0
      %p181 = por %p179, %p180
      %p182 = scmp.ne.s32.totalorder %s168, %s169
      %p183 = scmp.eq.s32.totalorder %s56, 1
      %p184 = por %p182, %p183
      %p186 = scmp.ne.s32.totalorder %s169, %s185
      %p187 = scmp.eq.s32.totalorder %s56, 0
      %p188 = por %p186, %p187
      %s189 = ssub.s32 %s50, %s57
      %p190 = scmp.eq.s32.totalorder %s189, 0
      %s192 = sadd.s32 %s191, 1
      %s193 = scalar_select %p190, %s191, %s192
      %p196 = pneg %p190
      %p197 = scmp.eq.s32.totalorder %s50, 1
      %p198 = por %p196, %p197
      %p199 = scmp.ne.s32.totalorder %s191, %s194
      %p200 = scmp.eq.s32.totalorder %s50, 0
      %p201 = por %p199, %p200
      %p202 = scmp.ne.s32.totalorder %s191, %s194
      %p203 = scmp.eq.s32.totalorder %s55, 1
      %p204 = por %p202, %p203
      %p205 = scmp.ne.s32.totalorder %s194, %s195
      %p206 = scmp.eq.s32.totalorder %s55, 0
      %p207 = por %p205, %p206
      %p208 = scmp.ne.s32.totalorder %s194, %s195
      %p209 = scmp.eq.s32.totalorder %s56, 1
      %p210 = por %p208, %p209
      %p212 = scmp.ne.s32.totalorder %s195, %s211
      %p213 = scmp.eq.s32.totalorder %s56, 0
      %p214 = por %p212, %p213
      %s215 = ssub.s32 %s50, %s57
      %p216 = scmp.eq.s32.totalorder %s215, 0
      %s218 = sadd.s32 %s217, 1
      %s219 = scalar_select %p216, %s217, %s218
      %p222 = pneg %p216
      %p223 = scmp.eq.s32.totalorder %s50, 1
      %p224 = por %p222, %p223
      %p225 = scmp.ne.s32.totalorder %s217, %s220
      %p226 = scmp.eq.s32.totalorder %s50, 0
      %p227 = por %p225, %p226
      %p228 = scmp.ne.s32.totalorder %s217, %s220
      %p229 = scmp.eq.s32.totalorder %s55, 1
      %p230 = por %p228, %p229
      %p231 = scmp.ne.s32.totalorder %s220, %s221
      %p232 = scmp.eq.s32.totalorder %s55, 0
      %p233 = por %p231, %p232
      %p234 = scmp.ne.s32.totalorder %s220, %s221
      %p235 = scmp.eq.s32.totalorder %s56, 1
      %p236 = por %p234, %p235
      %p238 = scmp.ne.s32.totalorder %s221, %s237
      %p239 = scmp.eq.s32.totalorder %s56, 0
      %p240 = por %p238, %p239
      %s241 = ssub.s32 %s50, %s57
      %p242 = scmp.eq.s32.totalorder %s241, 0
      %s244 = sadd.s32 %s243, 1
      %s245 = scalar_select %p242, %s243, %s244
      %p248 = pneg %p242
      %p249 = scmp.eq.s32.totalorder %s50, 1
      %p250 = por %p248, %p249
      %p251 = scmp.ne.s32.totalorder %s243, %s246
      %p252 = scmp.eq.s32.totalorder %s50, 0
      %p253 = por %p251, %p252
      %p254 = scmp.ne.s32.totalorder %s243, %s246
      %p255 = scmp.eq.s32.totalorder %s55, 1
      %p256 = por %p254, %p255
      %p257 = scmp.ne.s32.totalorder %s246, %s247
      %p258 = scmp.eq.s32.totalorder %s55, 0
      %p259 = por %p257, %p258
      %p260 = scmp.ne.s32.totalorder %s246, %s247
      %p261 = scmp.eq.s32.totalorder %s56, 1
      %p262 = por %p260, %p261
      %p264 = scmp.ne.s32.totalorder %s247, %s263
      %p265 = scmp.eq.s32.totalorder %s56, 0
      %p266 = por %p264, %p265
      %s267 = ssub.s32 %s50, %s57
      %p268 = scmp.eq.s32.totalorder %s267, 0
      %s270 = sadd.s32 %s269, 1
      %s271 = scalar_select %p268, %s269, %s270
      %p274 = pneg %p268
      %p275 = scmp.eq.s32.totalorder %s50, 1
      %p276 = por %p274, %p275
      %p277 = scmp.ne.s32.totalorder %s269, %s272
      %p278 = scmp.eq.s32.totalorder %s50, 0
      %p279 = por %p277, %p278
      %p280 = scmp.ne.s32.totalorder %s269, %s272
      %p281 = scmp.eq.s32.totalorder %s55, 1
      %p282 = por %p280, %p281
      %p283 = scmp.ne.s32.totalorder %s272, %s273
      %p284 = scmp.eq.s32.totalorder %s55, 0
      %p285 = por %p283, %p284
      %p286 = scmp.ne.s32.totalorder %s272, %s273
      %p287 = scmp.eq.s32.totalorder %s56, 1
      %p288 = por %p286, %p287
      %p290 = scmp.ne.s32.totalorder %s273, %s289
      %p291 = scmp.eq.s32.totalorder %s56, 0
      %p292 = por %p290, %p291
      %s293 = ssub.s32 %s50, %s57
      %p294 = scmp.eq.s32.totalorder %s293, 0
      %s296 = sadd.s32 %s295, 1
      %s297 = scalar_select %p294, %s295, %s296
      %p300 = pneg %p294
      %p301 = scmp.eq.s32.totalorder %s50, 1
      %p302 = por %p300, %p301
      %p303 = scmp.ne.s32.totalorder %s295, %s298
      %p304 = scmp.eq.s32.totalorder %s50, 0
      %p305 = por %p303, %p304
      %p306 = scmp.ne.s32.totalorder %s295, %s298
      %p307 = scmp.eq.s32.totalorder %s55, 1
      %p308 = por %p306, %p307
      %p309 = scmp.ne.s32.totalorder %s298, %s299
      %p310 = scmp.eq.s32.totalorder %s55, 0
      %p311 = por %p309, %p310
      %p312 = scmp.ne.s32.totalorder %s298, %s299
      %p313 = scmp.eq.s32.totalorder %s56, 1
      %p314 = por %p312, %p313
      %p316 = scmp.ne.s32.totalorder %s299, %s315
      %p317 = scmp.eq.s32.totalorder %s56, 0
      %p318 = por %p316, %p317
      %s319 = ssub.s32 %s50, %s57
      %p320 = scmp.eq.s32.totalorder %s319, 0
      %s322 = sadd.s32 %s321, 1
      %s323 = scalar_select %p320, %s321, %s322
      %p326 = pneg %p320
      %p327 = scmp.eq.s32.totalorder %s50, 1
      %p328 = por %p326, %p327
      %p329 = scmp.ne.s32.totalorder %s321, %s324
      %p330 = scmp.eq.s32.totalorder %s50, 0
      %p331 = por %p329, %p330
      %p332 = scmp.ne.s32.totalorder %s321, %s324
      %p333 = scmp.eq.s32.totalorder %s55, 1
      %p334 = por %p332, %p333
      %p335 = scmp.ne.s32.totalorder %s324, %s325
      %p336 = scmp.eq.s32.totalorder %s55, 0
      %p337 = por %p335, %p336
      %p338 = scmp.ne.s32.totalorder %s324, %s325
      %p339 = scmp.eq.s32.totalorder %s56, 1
      %p340 = por %p338, %p339
      %p342 = scmp.ne.s32.totalorder %s325, %s341
      %p343 = scmp.eq.s32.totalorder %s56, 0
      %p344 = por %p342, %p343
      %s345 = ssub.s32 %s50, %s57
      %p346 = scmp.eq.s32.totalorder %s345, 0
      %s348 = sadd.s32 %s347, 1
      %s349 = scalar_select %p346, %s347, %s348
      %p352 = pneg %p346
      %p353 = scmp.eq.s32.totalorder %s50, 1
      %p354 = por %p352, %p353
      %p355 = scmp.ne.s32.totalorder %s347, %s350
      %p356 = scmp.eq.s32.totalorder %s50, 0
      %p357 = por %p355, %p356
      %p358 = scmp.ne.s32.totalorder %s347, %s350
      %p359 = scmp.eq.s32.totalorder %s55, 1
      %p360 = por %p358, %p359
      %p361 = scmp.ne.s32.totalorder %s350, %s351
      %p362 = scmp.eq.s32.totalorder %s55, 0
      %p363 = por %p361, %p362
      %p364 = scmp.ne.s32.totalorder %s350, %s351
      %p365 = scmp.eq.s32.totalorder %s56, 1
      %p366 = por %p364, %p365
      %p368 = scmp.ne.s32.totalorder %s351, %s367
      %p369 = scmp.eq.s32.totalorder %s56, 0
      %p370 = por %p368, %p369
      %s371 = ssub.s32 %s50, %s57
      %p372 = scmp.eq.s32.totalorder %s371, 0
      %s374 = sadd.s32 %s373, 1
      %s375 = scalar_select %p372, %s373, %s374
      %p378 = pneg %p372
      %p379 = scmp.eq.s32.totalorder %s50, 1
      %p380 = por %p378, %p379
      %p381 = scmp.ne.s32.totalorder %s373, %s376
      %p382 = scmp.eq.s32.totalorder %s50, 0
      %p383 = por %p381, %p382
      %p384 = scmp.ne.s32.totalorder %s373, %s376
      %p385 = scmp.eq.s32.totalorder %s55, 1
      %p386 = por %p384, %p385
      %p387 = scmp.ne.s32.totalorder %s376, %s377
      %p388 = scmp.eq.s32.totalorder %s55, 0
      %p389 = por %p387, %p388
      %p390 = scmp.ne.s32.totalorder %s376, %s377
      %p391 = scmp.eq.s32.totalorder %s56, 1
      %p392 = por %p390, %p391
      %p394 = scmp.ne.s32.totalorder %s377, %s393
      %p395 = scmp.eq.s32.totalorder %s56, 0
      %p396 = por %p394, %p395
      %s397 = ssub.s32 %s50, %s57
      %p398 = scmp.eq.s32.totalorder %s397, 0
      %s400 = sadd.s32 %s399, 1
      %s401 = scalar_select %p398, %s399, %s400
      %p404 = pneg %p398
      %p405 = scmp.eq.s32.totalorder %s50, 1
      %p406 = por %p404, %p405
      %p407 = scmp.ne.s32.totalorder %s399, %s402
      %p408 = scmp.eq.s32.totalorder %s50, 0
      %p409 = por %p407, %p408
      %p410 = scmp.ne.s32.totalorder %s399, %s402
      %p411 = scmp.eq.s32.totalorder %s55, 1
      %p412 = por %p410, %p411
      %p413 = scmp.ne.s32.totalorder %s402, %s403
      %p414 = scmp.eq.s32.totalorder %s55, 0
      %p415 = por %p413, %p414
      %p416 = scmp.ne.s32.totalorder %s402, %s403
      %p417 = scmp.eq.s32.totalorder %s56, 1
      %p418 = por %p416, %p417
      %p420 = scmp.ne.s32.totalorder %s403, %s419
      %p421 = scmp.eq.s32.totalorder %s56, 0
      %p422 = por %p420, %p421
      %s423 = ssub.s32 %s50, %s57
      %p424 = scmp.eq.s32.totalorder %s423, 0
      %s426 = sadd.s32 %s425, 1
      %s427 = scalar_select %p424, %s425, %s426
      %p430 = pneg %p424
      %p431 = scmp.eq.s32.totalorder %s50, 1
      %p432 = por %p430, %p431
      %p433 = scmp.ne.s32.totalorder %s425, %s428
      %p434 = scmp.eq.s32.totalorder %s50, 0
      %p435 = por %p433, %p434
      %p436 = scmp.ne.s32.totalorder %s425, %s428
      %p437 = scmp.eq.s32.totalorder %s55, 1
      %p438 = por %p436, %p437
      %p439 = scmp.ne.s32.totalorder %s428, %s429
      %p440 = scmp.eq.s32.totalorder %s55, 0
      %p441 = por %p439, %p440
      %p442 = scmp.ne.s32.totalorder %s428, %s429
      %p443 = scmp.eq.s32.totalorder %s56, 1
      %p444 = por %p442, %p443
      %p446 = scmp.ne.s32.totalorder %s429, %s445
      %p447 = scmp.eq.s32.totalorder %s56, 0
      %p448 = por %p446, %p447
      %s449 = ssub.s32 %s50, %s57
      %p450 = scmp.eq.s32.totalorder %s449, 0
      %s452 = sadd.s32 %s451, 1
      %s453 = scalar_select %p450, %s451, %s452
      %p456 = pneg %p450
      %p457 = scmp.eq.s32.totalorder %s50, 1
      %p458 = por %p456, %p457
      %p459 = scmp.ne.s32.totalorder %s451, %s454
      %p460 = scmp.eq.s32.totalorder %s50, 0
      %p461 = por %p459, %p460
      %p462 = scmp.ne.s32.totalorder %s451, %s454
      %p463 = scmp.eq.s32.totalorder %s55, 1
      %p464 = por %p462, %p463
      %p465 = scmp.ne.s32.totalorder %s454, %s455
      %p466 = scmp.eq.s32.totalorder %s55, 0
      %p467 = por %p465, %p466
      %p468 = scmp.ne.s32.totalorder %s454, %s455
      %p469 = scmp.eq.s32.totalorder %s56, 1
      %p470 = por %p468, %p469
      %p472 = scmp.ne.s32.totalorder %s455, %s471
      %p473 = scmp.eq.s32.totalorder %s56, 0
      %p474 = por %p472, %p473
      %s475 = ssub.s32 %s50, %s57
      %p476 = scmp.eq.s32.totalorder %s475, 0
      %s478 = sadd.s32 %s477, 1
      %s479 = scalar_select %p476, %s477, %s478
      %p482 = pneg %p476
      %p483 = scmp.eq.s32.totalorder %s50, 1
      %p484 = por %p482, %p483
      %p485 = scmp.ne.s32.totalorder %s477, %s480
      %p486 = scmp.eq.s32.totalorder %s50, 0
      %p487 = por %p485, %p486
      %p488 = scmp.ne.s32.totalorder %s477, %s480
      %p489 = scmp.eq.s32.totalorder %s55, 1
      %p490 = por %p488, %p489
      %p491 = scmp.ne.s32.totalorder %s480, %s481
      %p492 = scmp.eq.s32.totalorder %s55, 0
      %p493 = por %p491, %p492
      %p494 = scmp.ne.s32.totalorder %s480, %s481
      %p495 = scmp.eq.s32.totalorder %s56, 1
      %p496 = por %p494, %p495
      %p498 = scmp.ne.s32.totalorder %s481, %s497
      %p499 = scmp.eq.s32.totalorder %s56, 0
      %p500 = por %p498, %p499
      %s501 = ssub.s32 %s50, %s57
      %p502 = scmp.eq.s32.totalorder %s501, 0
      %s504 = sadd.s32 %s503, 1
      %s505 = scalar_select %p502, %s503, %s504
      %p508 = pneg %p502
      %p509 = scmp.eq.s32.totalorder %s50, 1
      %p510 = por %p508, %p509
      %p511 = scmp.ne.s32.totalorder %s503, %s506
      %p512 = scmp.eq.s32.totalorder %s50, 0
      %p513 = por %p511, %p512
      %p514 = scmp.ne.s32.totalorder %s503, %s506
      %p515 = scmp.eq.s32.totalorder %s55, 1
      %p516 = por %p514, %p515
      %p517 = scmp.ne.s32.totalorder %s506, %s507
      %p518 = scmp.eq.s32.totalorder %s55, 0
      %p519 = por %p517, %p518
      %p520 = scmp.ne.s32.totalorder %s506, %s507
      %p521 = scmp.eq.s32.totalorder %s56, 1
      %p522 = por %p520, %p521
      %p524 = scmp.ne.s32.totalorder %s507, %s523
      %p525 = scmp.eq.s32.totalorder %s56, 0
      %p526 = por %p524, %p525
      %s527 = ssub.s32 %s50, %s57
      %p528 = scmp.eq.s32.totalorder %s527, 0
      %s530 = sadd.s32 %s529, 1
      %s531 = scalar_select %p528, %s529, %s530
      %p534 = pneg %p528
      %p535 = scmp.eq.s32.totalorder %s50, 1
      %p536 = por %p534, %p535
      %p537 = scmp.ne.s32.totalorder %s529, %s532
      %p538 = scmp.eq.s32.totalorder %s50, 0
      %p539 = por %p537, %p538
      %p540 = scmp.ne.s32.totalorder %s529, %s532
      %p541 = scmp.eq.s32.totalorder %s55, 1
      %p542 = por %p540, %p541
      %p543 = scmp.ne.s32.totalorder %s532, %s533
      %p544 = scmp.eq.s32.totalorder %s55, 0
      %p545 = por %p543, %p544
      %p546 = scmp.ne.s32.totalorder %s532, %s533
      %p547 = scmp.eq.s32.totalorder %s56, 1
      %p548 = por %p546, %p547
      %p550 = scmp.ne.s32.totalorder %s533, %s549
      %p551 = scmp.eq.s32.totalorder %s56, 0
      %p552 = por %p550, %p551
      %s553 = ssub.s32 %s50, %s57
      %p554 = scmp.eq.s32.totalorder %s553, 0
      %s556 = sadd.s32 %s555, 1
      %s557 = scalar_select %p554, %s555, %s556
      %p560 = pneg %p554
      %p561 = scmp.eq.s32.totalorder %s50, 1
      %p562 = por %p560, %p561
      %p563 = scmp.ne.s32.totalorder %s555, %s558
      %p564 = scmp.eq.s32.totalorder %s50, 0
      %p565 = por %p563, %p564
      %p566 = scmp.ne.s32.totalorder %s555, %s558
      %p567 = scmp.eq.s32.totalorder %s55, 1
      %p568 = por %p566, %p567
      %p569 = scmp.ne.s32.totalorder %s558, %s559
      %p570 = scmp.eq.s32.totalorder %s55, 0
      %p571 = por %p569, %p570
      %p572 = scmp.ne.s32.totalorder %s558, %s559
      %p573 = scmp.eq.s32.totalorder %s56, 1
      %p574 = por %p572, %p573
      %p576 = scmp.ne.s32.totalorder %s559, %s575
      %p577 = scmp.eq.s32.totalorder %s56, 0
      %p578 = por %p576, %p577
      %s579 = ssub.s32 %s50, %s57
      %p580 = scmp.eq.s32.totalorder %s579, 0
      %s582 = sadd.s32 %s581, 1
      %s583 = scalar_select %p580, %s581, %s582
      %p586 = pneg %p580
      %p587 = scmp.eq.s32.totalorder %s50, 1
      %p588 = por %p586, %p587
      %p589 = scmp.ne.s32.totalorder %s581, %s584
      %p590 = scmp.eq.s32.totalorder %s50, 0
      %p591 = por %p589, %p590
      %p592 = scmp.ne.s32.totalorder %s581, %s584
      %p593 = scmp.eq.s32.totalorder %s55, 1
      %p594 = por %p592, %p593
      %p595 = scmp.ne.s32.totalorder %s584, %s585
      %p596 = scmp.eq.s32.totalorder %s55, 0
      %p597 = por %p595, %p596
      %p598 = scmp.ne.s32.totalorder %s584, %s585
      %p599 = scmp.eq.s32.totalorder %s56, 1
      %p600 = por %p598, %p599
      %p602 = scmp.ne.s32.totalorder %s585, %s601
      %p603 = scmp.eq.s32.totalorder %s56, 0
      %p604 = por %p602, %p603
      %s605 = ssub.s32 %s50, %s57
      %p606 = scmp.eq.s32.totalorder %s605, 0
      %s608 = sadd.s32 %s607, 1
      %s609 = scalar_select %p606, %s607, %s608
      %p612 = pneg %p606
      %p613 = scmp.eq.s32.totalorder %s50, 1
      %p614 = por %p612, %p613
      %p615 = scmp.ne.s32.totalorder %s607, %s610
      %p616 = scmp.eq.s32.totalorder %s50, 0
      %p617 = por %p615, %p616
      %p618 = scmp.ne.s32.totalorder %s607, %s610
      %p619 = scmp.eq.s32.totalorder %s55, 1
      %p620 = por %p618, %p619
      %p621 = scmp.ne.s32.totalorder %s610, %s611
      %p622 = scmp.eq.s32.totalorder %s55, 0
      %p623 = por %p621, %p622
      %p624 = scmp.ne.s32.totalorder %s610, %s611
      %p625 = scmp.eq.s32.totalorder %s56, 1
      %p626 = por %p624, %p625
      %p628 = scmp.ne.s32.totalorder %s611, %s627
      %p629 = scmp.eq.s32.totalorder %s56, 0
      %p630 = por %p628, %p629
      %s631 = ssub.s32 %s50, %s57
      %p632 = scmp.eq.s32.totalorder %s631, 0
      %s634 = sadd.s32 %s633, 1
      %s635 = scalar_select %p632, %s633, %s634
      %p638 = pneg %p632
      %p639 = scmp.eq.s32.totalorder %s50, 1
      %p640 = por %p638, %p639
      %p641 = scmp.ne.s32.totalorder %s633, %s636
      %p642 = scmp.eq.s32.totalorder %s50, 0
      %p643 = por %p641, %p642
      %p644 = scmp.ne.s32.totalorder %s633, %s636
      %p645 = scmp.eq.s32.totalorder %s55, 1
      %p646 = por %p644, %p645
      %p647 = scmp.ne.s32.totalorder %s636, %s637
      %p648 = scmp.eq.s32.totalorder %s55, 0
      %p649 = por %p647, %p648
      %p650 = scmp.ne.s32.totalorder %s636, %s637
      %p651 = scmp.eq.s32.totalorder %s56, 1
      %p652 = por %p650, %p651
      %p654 = scmp.ne.s32.totalorder %s637, %s653
      %p655 = scmp.eq.s32.totalorder %s56, 0
      %p656 = por %p654, %p655
      %s658 = sadd.s32 %s657, 1
      %p661 = scmp.eq.s32.totalorder %s50, 1
      %p662 = scmp.ne.s32.totalorder %s657, %s659
      %p663 = scmp.eq.s32.totalorder %s50, 0
      %p664 = por %p662, %p663
      %p665 = scmp.ne.s32.totalorder %s657, %s659
      %p666 = scmp.eq.s32.totalorder %s55, 1
      %p667 = por %p665, %p666
      %p668 = scmp.ne.s32.totalorder %s659, %s660
      %p669 = scmp.eq.s32.totalorder %s55, 0
      %p670 = por %p668, %p669
      %p671 = scmp.ne.s32.totalorder %s659, %s660
      %p672 = scmp.eq.s32.totalorder %s56, 1
      %p673 = por %p671, %p672
      %p675 = scmp.ne.s32.totalorder %s660, %s674
      %p676 = scmp.eq.s32.totalorder %s56, 0
      %p677 = por %p675, %p676
      %s679 = sadd.s32 %s678, 1
      %p682 = scmp.eq.s32.totalorder %s50, 1
      %p683 = scmp.ne.s32.totalorder %s678, %s680
      %p684 = scmp.eq.s32.totalorder %s50, 0
      %p685 = por %p683, %p684
      %p686 = scmp.ne.s32.totalorder %s678, %s680
      %p687 = scmp.eq.s32.totalorder %s55, 1
      %p688 = por %p686, %p687
      %p689 = scmp.ne.s32.totalorder %s680, %s681
      %p690 = scmp.eq.s32.totalorder %s55, 0
      %p691 = por %p689, %p690
      %p692 = scmp.ne.s32.totalorder %s680, %s681
      %p693 = scmp.eq.s32.totalorder %s56, 1
      %p694 = por %p692, %p693
      %p696 = scmp.ne.s32.totalorder %s681, %s695
      %p697 = scmp.eq.s32.totalorder %s56, 0
      %p698 = por %p696, %p697
      %p699 = scmp.le.s32.totalorder 1, %s50
      %p700 = scmp.lt.s32.totalorder %s50, 3
      %p701 = pnand %p699, %p700
      %p702 = pneg %p701
      // Predicated region
      $region9: #{tpu_custom_call.1} parent=5 // pred_check
        _
      $region10: #{tpu_custom_call.1} parent=5 // pred_check_branch
        %704 = sbr.rel (%p701) target = $region12
      $region11: #{tpu_custom_call.1} parent=5 // pred_region
        %s705 = ssub.s32 %s50, 1
        // Predicated region
        $region13: #{tpu_custom_call.1} parent=11 // pred_check
          %p706 = pneg %p71
        $region14: #{tpu_custom_call.1} parent=11 // pred_check_branch
          %708 = sbr.rel (%p706) target = $region16
        $region15: #{tpu_custom_call.1} parent=11 // pred_region
          _
        $region16: #{tpu_custom_call.1} parent=11 // pred_fallthru
          _
        // Predicated region
        $region17: #{tpu_custom_call.1} parent=11 // pred_check
          %p709 = pneg %p92
        $region18: #{tpu_custom_call.1} parent=11 // pred_check_branch
          %711 = sbr.rel (%p709) target = $region20
        $region19: #{tpu_custom_call.1} parent=11 // pred_region
          _
        $region20: #{tpu_custom_call.1} parent=11 // pred_fallthru
          _
        // Predicated region
        $region21: #{tpu_custom_call.1} parent=11 // pred_check
          %p712 = pneg %p113
        $region22: #{tpu_custom_call.1} parent=11 // pred_check_branch
          %714 = sbr.rel (%p712) target = $region24
        $region23: #{tpu_custom_call.1} parent=11 // pred_region
          %s716 = ssub.s32 16, 16
          %717 = vsyncadd [#allocation8], %s716
          %s719 = sshll.u32 [#allocation7], 4
          %s720 = int_to_ptr.vmem [resolvable:$true] %s719
          %722 = dma.hbm_to_vmem [thread:$0]  %s2, 16, %s720, [#allocation8]
        $region24: #{tpu_custom_call.1} parent=11 // pred_fallthru
          _
        // Predicated region
        $region25: #{tpu_custom_call.1} parent=11 // pred_check
          %p723 = pneg %p134
        $region26: #{tpu_custom_call.1} parent=11 // pred_check_branch
          %725 = sbr.rel (%p723) target = $region28
        $region27: #{tpu_custom_call.1} parent=11 // pred_region
          %s727 = ssub.s32 16, 16
          %728 = vsyncadd [#allocation11], %s727
          %s730 = sshll.u32 [#allocation10], 4
          %s731 = int_to_ptr.vmem [resolvable:$true] %s730
          %733 = dma.hbm_to_vmem [thread:$0]  %s3, 16, %s731, [#allocation11]
        $region28: #{tpu_custom_call.1} parent=11 // pred_fallthru
          _
        // Predicated region
        $region29: #{tpu_custom_call.1} parent=11 // pred_check
          %p734 = pneg %p155
        $region30: #{tpu_custom_call.1} parent=11 // pred_check_branch
          %736 = sbr.rel (%p734) target = $region32
        $region31: #{tpu_custom_call.1} parent=11 // pred_region
          %s738 = ssub.s32 128, 128
          %739 = vsyncadd [#allocation11], %s738
          %s741 = sshll.u32 [#allocation12], 4
          %s742 = int_to_ptr.vmem [resolvable:$true] %s741
          %744 = dma.hbm_to_vmem [thread:$0]  %s4, 128, %s742, [#allocation11]
        $region32: #{tpu_custom_call.1} parent=11 // pred_fallthru
          _
      $region12: #{tpu_custom_call.1} parent=5 // pred_fallthru
        _
      %p745 = scmp.lt.s32.totalorder %s50, 2
      // Predicated region
      $region33: #{tpu_custom_call.1} parent=5 // pred_check
        %p746 = pneg %p745
      $region34: #{tpu_custom_call.1} parent=5 // pred_check_branch
        %748 = sbr.rel (%p746) target = $region36
      $region35: #{tpu_custom_call.1} parent=5 // pred_region
        // Predicated region
        $region37: #{tpu_custom_call.1} parent=35 // pred_check
          %p749 = pneg %p175
        $region38: #{tpu_custom_call.1} parent=35 // pred_check_branch
          %751 = sbr.rel (%p749) target = $region40
        $region39: #{tpu_custom_call.1} parent=35 // pred_region
          %p752 = scmp.lt.s32.totalorder %s50, 1
          %s753 = scalar_select %p752, %s50, 1
          %s754 = smul.addr %s753, 8
          %s755 = scalar_lea.vmem %s5, %s754
        $region40: #{tpu_custom_call.1} parent=35 // pred_fallthru
          _
        // Predicated region
        $region41: #{tpu_custom_call.1} parent=35 // pred_check
          %p756 = pneg %p201
        $region42: #{tpu_custom_call.1} parent=35 // pred_check_branch
          %758 = sbr.rel (%p756) target = $region44
        $region43: #{tpu_custom_call.1} parent=35 // pred_region
          %s759 = sand.u32 %s50, 1
          %s760 = scalar_lea.sflag [#allocation14], %s759
          %s761 = sand.u32 %s191, 1
          %s762 = smul.addr %s761, 16
          %s763 = scalar_lea.vmem [#allocation13], %s762
          %s765 = ssub.s32 256, 256
          %766 = vsyncadd %s760, %s765
          %s767 = smul.addr %s50, 4
          %s768 = smul.addr %s767, 64
          %s769 = scalar_lea.hbm %s6, %s768
          %s770 = sshll.u32 %s763, 4
          %s771 = int_to_ptr.vmem [resolvable:$true] %s770
          %776 = dma.hbm_to_vmem [thread:$0]  %s769, 256, %s771, %s760, 64, 64, 4
        $region44: #{tpu_custom_call.1} parent=35 // pred_fallthru
          _
        // Predicated region
        $region45: #{tpu_custom_call.1} parent=35 // pred_check
          %p777 = pneg %p227
        $region46: #{tpu_custom_call.1} parent=35 // pred_check_branch
          %779 = sbr.rel (%p777) target = $region48
        $region47: #{tpu_custom_call.1} parent=35 // pred_region
          %s780 = sand.u32 %s50, 1
          %s781 = scalar_lea.sflag [#allocation14], %s780
          %s782 = sand.u32 %s217, 1
          %s783 = scalar_lea.vmem [#allocation15], %s782
          %s785 = ssub.s32 16, 16
          %786 = vsyncadd %s781, %s785
          %s787 = smul.addr %s50, 16
          %s788 = scalar_lea.hbm %s7, %s787
          %s790 = sshll.u32 %s783, 4
          %s791 = int_to_ptr.vmem [resolvable:$true] %s790
          %793 = dma.hbm_to_vmem [thread:$0]  %s788, 16, %s791, %s781
        $region48: #{tpu_custom_call.1} parent=35 // pred_fallthru
          _
        // Predicated region
        $region49: #{tpu_custom_call.1} parent=35 // pred_check
          %p794 = pneg %p253
        $region50: #{tpu_custom_call.1} parent=35 // pred_check_branch
          %796 = sbr.rel (%p794) target = $region52
        $region51: #{tpu_custom_call.1} parent=35 // pred_region
          %p797 = scmp.lt.s32.totalorder %s50, 1
          %s798 = scalar_select %p797, %s50, 1
          %s799 = smul.addr %s798, 8
          %s800 = smul.addr %s799, 4
          %s801 = scalar_lea.vmem %s8, %s800
        $region52: #{tpu_custom_call.1} parent=35 // pred_fallthru
          _
        // Predicated region
        $region53: #{tpu_custom_call.1} parent=35 // pred_check
          %p802 = pneg %p279
        $region54: #{tpu_custom_call.1} parent=35 // pred_check_branch
          %804 = sbr.rel (%p802) target = $region56
        $region55: #{tpu_custom_call.1} parent=35 // pred_region
          %s805 = sand.u32 %s50, 1
          %s806 = scalar_lea.sflag [#allocation17], %s805
          %s807 = sand.u32 %s269, 1
          %s808 = smul.addr %s807, 2
          %s809 = scalar_lea.vmem [#allocation16], %s808
          %s811 = ssub.s32 32, 32
          %812 = vsyncadd %s806, %s811
          %s813 = smul.addr %s50, 2
          %s814 = smul.addr %s813, 16
          %s815 = scalar_lea.hbm %s9, %s814
          %s816 = sshll.u32 %s809, 4
          %s817 = int_to_ptr.vmem [resolvable:$true] %s816
          %822 = dma.hbm_to_vmem [thread:$0]  %s815, 32, %s817, %s806, 16, 16, 1
        $region56: #{tpu_custom_call.1} parent=35 // pred_fallthru
          _
        // Predicated region
        $region57: #{tpu_custom_call.1} parent=35 // pred_check
          %p823 = pneg %p305
        $region58: #{tpu_custom_call.1} parent=35 // pred_check_branch
          %825 = sbr.rel (%p823) target = $region60
        $region59: #{tpu_custom_call.1} parent=35 // pred_region
          %p826 = scmp.lt.s32.totalorder %s50, 1
          %s827 = scalar_select %p826, %s50, 1
          %s828 = smul.addr %s827, 8
          %s829 = smul.addr %s828, 4
          %s830 = scalar_lea.vmem %s10, %s829
        $region60: #{tpu_custom_call.1} parent=35 // pred_fallthru
          _
        // Predicated region
        $region61: #{tpu_custom_call.1} parent=35 // pred_check
          %p831 = pneg %p331
        $region62: #{tpu_custom_call.1} parent=35 // pred_check_branch
          %833 = sbr.rel (%p831) target = $region64
        $region63: #{tpu_custom_call.1} parent=35 // pred_region
          %s834 = sand.u32 %s50, 1
          %s835 = scalar_lea.sflag [#allocation17], %s834
          %s836 = sand.u32 %s321, 1
          %s837 = smul.addr %s836, 2
          %s838 = scalar_lea.vmem [#allocation18], %s837
          %s840 = ssub.s32 32, 32
          %841 = vsyncadd %s835, %s840
          %s842 = smul.addr %s50, 2
          %s843 = smul.addr %s842, 16
          %s844 = scalar_lea.hbm %s11, %s843
          %s845 = sshll.u32 %s838, 4
          %s846 = int_to_ptr.vmem [resolvable:$true] %s845
          %851 = dma.hbm_to_vmem [thread:$0]  %s844, 32, %s846, %s835, 16, 16, 1
        $region64: #{tpu_custom_call.1} parent=35 // pred_fallthru
          _
        // Predicated region
        $region65: #{tpu_custom_call.1} parent=35 // pred_check
          %p852 = pneg %p357
        $region66: #{tpu_custom_call.1} parent=35 // pred_check_branch
          %854 = sbr.rel (%p852) target = $region68
        $region67: #{tpu_custom_call.1} parent=35 // pred_region
          %p855 = scmp.lt.s32.totalorder %s50, 1
          %s856 = scalar_select %p855, %s50, 1
          %s857 = scalar_lea.vmem %s12, %s856
        $region68: #{tpu_custom_call.1} parent=35 // pred_fallthru
          _
        // Predicated region
        $region69: #{tpu_custom_call.1} parent=35 // pred_check
          %p858 = pneg %p383
        $region70: #{tpu_custom_call.1} parent=35 // pred_check_branch
          %860 = sbr.rel (%p858) target = $region72
        $region71: #{tpu_custom_call.1} parent=35 // pred_region
          %p861 = scmp.lt.s32.totalorder %s50, 1
          %s862 = scalar_select %p861, %s50, 1
          %s863 = smul.addr %s862, 4
          %s864 = smul.addr %s863, 4
          %s865 = scalar_lea.vmem %s13, %s864
        $region72: #{tpu_custom_call.1} parent=35 // pred_fallthru
          _
        // Predicated region
        $region73: #{tpu_custom_call.1} parent=35 // pred_check
          %p866 = pneg %p409
        $region74: #{tpu_custom_call.1} parent=35 // pred_check_branch
          %868 = sbr.rel (%p866) target = $region76
        $region75: #{tpu_custom_call.1} parent=35 // pred_region
          %s869 = sand.u32 %s50, 1
          %s870 = scalar_lea.sflag [#allocation20], %s869
          %s871 = sand.u32 %s399, 1
          %s872 = scalar_lea.vmem [#allocation19], %s871
          %s874 = ssub.s32 16, 16
          %875 = vsyncadd %s870, %s874
          %s876 = smul.addr %s50, 16
          %s877 = scalar_lea.hbm %s14, %s876
          %s879 = sshll.u32 %s872, 4
          %s880 = int_to_ptr.vmem [resolvable:$true] %s879
          %882 = dma.hbm_to_vmem [thread:$0]  %s877, 16, %s880, %s870
        $region76: #{tpu_custom_call.1} parent=35 // pred_fallthru
          _
        // Predicated region
        $region77: #{tpu_custom_call.1} parent=35 // pred_check
          %p883 = pneg %p435
        $region78: #{tpu_custom_call.1} parent=35 // pred_check_branch
          %885 = sbr.rel (%p883) target = $region80
        $region79: #{tpu_custom_call.1} parent=35 // pred_region
          %s886 = sand.u32 %s50, 1
          %s887 = scalar_lea.sflag [#allocation20], %s886
          %s888 = sand.u32 %s425, 1
          %s889 = smul.addr %s888, 32
          %s890 = scalar_lea.vmem [#allocation21], %s889
          %s892 = ssub.s32 512, 512
          %893 = vsyncadd %s887, %s892
          %s894 = smul.addr %s50, 8
          %s895 = smul.addr %s894, 64
          %s896 = scalar_lea.hbm %s15, %s895
          %s897 = sshll.u32 %s890, 4
          %s898 = int_to_ptr.vmem [resolvable:$true] %s897
          %903 = dma.hbm_to_vmem [thread:$0]  %s896, 512, %s898, %s887, 64, 64, 4
        $region80: #{tpu_custom_call.1} parent=35 // pred_fallthru
          _
        // Predicated region
        $region81: #{tpu_custom_call.1} parent=35 // pred_check
          %p904 = pneg %p461
        $region82: #{tpu_custom_call.1} parent=35 // pred_check_branch
          %906 = sbr.rel (%p904) target = $region84
        $region83: #{tpu_custom_call.1} parent=35 // pred_region
          %s907 = sand.u32 %s50, 1
          %s908 = scalar_lea.sflag [#allocation23], %s907
          %s909 = sand.u32 %s451, 1
          %s910 = smul.addr %s909, 2
          %s911 = scalar_lea.vmem [#allocation22], %s910
          %s913 = ssub.s32 32, 32
          %914 = vsyncadd %s908, %s913
          %s915 = smul.addr %s50, 2
          %s916 = smul.addr %s915, 16
          %s917 = scalar_lea.hbm %s16, %s916
          %s918 = sshll.u32 %s911, 4
          %s919 = int_to_ptr.vmem [resolvable:$true] %s918
          %924 = dma.hbm_to_vmem [thread:$0]  %s917, 32, %s919, %s908, 16, 16, 1
        $region84: #{tpu_custom_call.1} parent=35 // pred_fallthru
          _
        // Predicated region
        $region85: #{tpu_custom_call.1} parent=35 // pred_check
          %p925 = pneg %p487
        $region86: #{tpu_custom_call.1} parent=35 // pred_check_branch
          %927 = sbr.rel (%p925) target = $region88
        $region87: #{tpu_custom_call.1} parent=35 // pred_region
          %s928 = sand.u32 %s50, 1
          %s929 = scalar_lea.sflag [#allocation23], %s928
          %s930 = sand.u32 %s477, 1
          %s931 = smul.addr %s930, 32
          %s932 = scalar_lea.vmem [#allocation24], %s931
          %s934 = ssub.s32 512, 512
          %935 = vsyncadd %s929, %s934
          %s936 = smul.addr %s50, 8
          %s937 = smul.addr %s936, 64
          %s938 = scalar_lea.hbm %s17, %s937
          %s939 = sshll.u32 %s932, 4
          %s940 = int_to_ptr.vmem [resolvable:$true] %s939
          %945 = dma.hbm_to_vmem [thread:$0]  %s938, 512, %s940, %s929, 64, 64, 4
        $region88: #{tpu_custom_call.1} parent=35 // pred_fallthru
          _
        // Predicated region
        $region89: #{tpu_custom_call.1} parent=35 // pred_check
          %p946 = pneg %p513
        $region90: #{tpu_custom_call.1} parent=35 // pred_check_branch
          %948 = sbr.rel (%p946) target = $region92
        $region91: #{tpu_custom_call.1} parent=35 // pred_region
          %s949 = sand.u32 %s50, 1
          %s950 = scalar_lea.sflag [#allocation26], %s949
          %s951 = sand.u32 %s503, 1
          %s952 = smul.addr %s951, 2
          %s953 = scalar_lea.vmem [#allocation25], %s952
          %s955 = ssub.s32 32, 32
          %956 = vsyncadd %s950, %s955
          %s957 = smul.addr %s50, 2
          %s958 = smul.addr %s957, 16
          %s959 = scalar_lea.hbm %s18, %s958
          %s960 = sshll.u32 %s953, 4
          %s961 = int_to_ptr.vmem [resolvable:$true] %s960
          %966 = dma.hbm_to_vmem [thread:$0]  %s959, 32, %s961, %s950, 16, 16, 1
        $region92: #{tpu_custom_call.1} parent=35 // pred_fallthru
          _
        // Predicated region
        $region93: #{tpu_custom_call.1} parent=35 // pred_check
          %p967 = pneg %p539
        $region94: #{tpu_custom_call.1} parent=35 // pred_check_branch
          %969 = sbr.rel (%p967) target = $region96
        $region95: #{tpu_custom_call.1} parent=35 // pred_region
          %p970 = scmp.lt.s32.totalorder %s50, 1
          %s971 = scalar_select %p970, %s50, 1
          %s972 = smul.addr %s971, 4
          %s973 = smul.addr %s972, 4
          %s974 = scalar_lea.vmem %s19, %s973
        $region96: #{tpu_custom_call.1} parent=35 // pred_fallthru
          _
        // Predicated region
        $region97: #{tpu_custom_call.1} parent=35 // pred_check
          %p975 = pneg %p565
        $region98: #{tpu_custom_call.1} parent=35 // pred_check_branch
          %977 = sbr.rel (%p975) target = $region100
        $region99: #{tpu_custom_call.1} parent=35 // pred_region
          %p978 = scmp.lt.s32.totalorder %s50, 1
          %s979 = scalar_select %p978, %s50, 1
          %s980 = scalar_lea.vmem %s20, %s979
        $region100: #{tpu_custom_call.1} parent=35 // pred_fallthru
          _
        // Predicated region
        $region101: #{tpu_custom_call.1} parent=35 // pred_check
          %p981 = pneg %p591
        $region102: #{tpu_custom_call.1} parent=35 // pred_check_branch
          %983 = sbr.rel (%p981) target = $region104
        $region103: #{tpu_custom_call.1} parent=35 // pred_region
          %s984 = sand.u32 %s50, 1
          %s985 = scalar_lea.sflag [#allocation26], %s984
          %s986 = sand.u32 %s581, 1
          %s987 = smul.addr %s986, 16
          %s988 = scalar_lea.vmem [#allocation27], %s987
          %s990 = ssub.s32 256, 256
          %991 = vsyncadd %s985, %s990
          %s992 = smul.addr %s50, 4
          %s993 = smul.addr %s992, 64
          %s994 = scalar_lea.hbm %s21, %s993
          %s995 = sshll.u32 %s988, 4
          %s996 = int_to_ptr.vmem [resolvable:$true] %s995
          %1001 = dma.hbm_to_vmem [thread:$0]  %s994, 256, %s996, %s985, 64, 64, 4
        $region104: #{tpu_custom_call.1} parent=35 // pred_fallthru
          _
        // Predicated region
        $region105: #{tpu_custom_call.1} parent=35 // pred_check
          %p1002 = pneg %p617
        $region106: #{tpu_custom_call.1} parent=35 // pred_check_branch
          %1004 = sbr.rel (%p1002) target = $region108
        $region107: #{tpu_custom_call.1} parent=35 // pred_region
          %p1005 = scmp.lt.s32.totalorder %s50, 1
          %s1006 = scalar_select %p1005, %s50, 1
          %s1007 = scalar_lea.vmem %s22, %s1006
        $region108: #{tpu_custom_call.1} parent=35 // pred_fallthru
          _
        // Predicated region
        $region109: #{tpu_custom_call.1} parent=35 // pred_check
          %p1008 = pneg %p643
        $region110: #{tpu_custom_call.1} parent=35 // pred_check_branch
          %1010 = sbr.rel (%p1008) target = $region112
        $region111: #{tpu_custom_call.1} parent=35 // pred_region
          %p1011 = scmp.lt.s32.totalorder %s50, 1
          %s1012 = scalar_select %p1011, %s50, 1
          %s1013 = smul.addr %s1012, 4
          %s1014 = smul.addr %s1013, 4
          %s1015 = scalar_lea.vmem %s23, %s1014
        $region112: #{tpu_custom_call.1} parent=35 // pred_fallthru
          _
      $region36: #{tpu_custom_call.1} parent=5 // pred_fallthru
        _
      %p1016 = scmp.le.s32.totalorder 1, %s50
      %p1017 = scmp.lt.s32.totalorder %s50, 3
      %p1018 = pnand %p1016, %p1017
      %p1019 = pneg %p1018
      // Predicated region
      $region113: #{tpu_custom_call.1} parent=5 // pred_check
        _
      $region114: #{tpu_custom_call.1} parent=5 // pred_check_branch
        %1021 = sbr.rel (%p1018) target = $region116
      $region115: #{tpu_custom_call.1} parent=5 // pred_region
        %s1022 = ssub.s32 %s50, 1
        // Predicated region
        $region117: #{tpu_custom_call.1} parent=115 // pred_check
          %p1023 = pneg %p113
        $region118: #{tpu_custom_call.1} parent=115 // pred_check_branch
          %1025 = sbr.rel (%p1023) target = $region120
        $region119: #{tpu_custom_call.1} parent=115 // pred_region
          %1026 = dma.done [#allocation8], 16
        $region120: #{tpu_custom_call.1} parent=115 // pred_fallthru
          _
        // Predicated region
        $region121: #{tpu_custom_call.1} parent=115 // pred_check
          %p1027 = pneg %p134
        $region122: #{tpu_custom_call.1} parent=115 // pred_check_branch
          %1029 = sbr.rel (%p1027) target = $region124
        $region123: #{tpu_custom_call.1} parent=115 // pred_region
          %1030 = dma.done [#allocation11], 16
        $region124: #{tpu_custom_call.1} parent=115 // pred_fallthru
          _
        // Predicated region
        $region125: #{tpu_custom_call.1} parent=115 // pred_check
          %p1031 = pneg %p155
        $region126: #{tpu_custom_call.1} parent=115 // pred_check_branch
          %1033 = sbr.rel (%p1031) target = $region128
        $region127: #{tpu_custom_call.1} parent=115 // pred_region
          %1034 = dma.done [#allocation11], 128
        $region128: #{tpu_custom_call.1} parent=115 // pred_fallthru
          _
        %s1035 = sand.u32 %s55, 1
        %s1036 = scalar_lea.sflag [#allocation14], %s1035
        %s1037 = sand.u32 %s194, 1
        %s1038 = smul.addr %s1037, 16
        %s1039 = scalar_lea.vmem [#allocation13], %s1038
        // Predicated region
        $region129: #{tpu_custom_call.1} parent=115 // pred_check
          %p1040 = pneg %p207
        $region130: #{tpu_custom_call.1} parent=115 // pred_check_branch
          %1042 = sbr.rel (%p1040) target = $region132
        $region131: #{tpu_custom_call.1} parent=115 // pred_region
          %1043 = dma.done %s1036, 256
        $region132: #{tpu_custom_call.1} parent=115 // pred_fallthru
          _
        %s1044 = sand.u32 %s55, 1
        %s1045 = scalar_lea.sflag [#allocation14], %s1044
        %s1046 = sand.u32 %s220, 1
        %s1047 = scalar_lea.vmem [#allocation15], %s1046
        // Predicated region
        $region133: #{tpu_custom_call.1} parent=115 // pred_check
          %p1048 = pneg %p233
        $region134: #{tpu_custom_call.1} parent=115 // pred_check_branch
          %1050 = sbr.rel (%p1048) target = $region136
        $region135: #{tpu_custom_call.1} parent=115 // pred_region
          %1051 = dma.done %s1045, 16
        $region136: #{tpu_custom_call.1} parent=115 // pred_fallthru
          _
        %s1052 = sand.u32 %s55, 1
        %s1053 = scalar_lea.sflag [#allocation17], %s1052
        %s1054 = sand.u32 %s272, 1
        %s1055 = smul.addr %s1054, 2
        %s1056 = scalar_lea.vmem [#allocation16], %s1055
        // Predicated region
        $region137: #{tpu_custom_call.1} parent=115 // pred_check
          %p1057 = pneg %p285
        $region138: #{tpu_custom_call.1} parent=115 // pred_check_branch
          %1059 = sbr.rel (%p1057) target = $region140
        $region139: #{tpu_custom_call.1} parent=115 // pred_region
          %1060 = dma.done %s1053, 32
        $region140: #{tpu_custom_call.1} parent=115 // pred_fallthru
          _
        %s1061 = sand.u32 %s55, 1
        %s1062 = scalar_lea.sflag [#allocation17], %s1061
        %s1063 = sand.u32 %s324, 1
        %s1064 = smul.addr %s1063, 2
        %s1065 = scalar_lea.vmem [#allocation18], %s1064
        // Predicated region
        $region141: #{tpu_custom_call.1} parent=115 // pred_check
          %p1066 = pneg %p337
        $region142: #{tpu_custom_call.1} parent=115 // pred_check_branch
          %1068 = sbr.rel (%p1066) target = $region144
        $region143: #{tpu_custom_call.1} parent=115 // pred_region
          %1069 = dma.done %s1062, 32
        $region144: #{tpu_custom_call.1} parent=115 // pred_fallthru
          _
        %s1070 = sand.u32 %s55, 1
        %s1071 = scalar_lea.sflag [#allocation20], %s1070
        %s1072 = sand.u32 %s402, 1
        %s1073 = scalar_lea.vmem [#allocation19], %s1072
        // Predicated region
        $region145: #{tpu_custom_call.1} parent=115 // pred_check
          %p1074 = pneg %p415
        $region146: #{tpu_custom_call.1} parent=115 // pred_check_branch
          %1076 = sbr.rel (%p1074) target = $region148
        $region147: #{tpu_custom_call.1} parent=115 // pred_region
          %1077 = dma.done %s1071, 16
        $region148: #{tpu_custom_call.1} parent=115 // pred_fallthru
          _
        %s1078 = sand.u32 %s55, 1
        %s1079 = scalar_lea.sflag [#allocation20], %s1078
        %s1080 = sand.u32 %s428, 1
        %s1081 = smul.addr %s1080, 32
        %s1082 = scalar_lea.vmem [#allocation21], %s1081
        // Predicated region
        $region149: #{tpu_custom_call.1} parent=115 // pred_check
          %p1083 = pneg %p441
        $region150: #{tpu_custom_call.1} parent=115 // pred_check_branch
          %1085 = sbr.rel (%p1083) target = $region152
        $region151: #{tpu_custom_call.1} parent=115 // pred_region
          %1086 = dma.done %s1079, 512
        $region152: #{tpu_custom_call.1} parent=115 // pred_fallthru
          _
        %s1087 = sand.u32 %s55, 1
        %s1088 = scalar_lea.sflag [#allocation23], %s1087
        %s1089 = sand.u32 %s454, 1
        %s1090 = smul.addr %s1089, 2
        %s1091 = scalar_lea.vmem [#allocation22], %s1090
        // Predicated region
        $region153: #{tpu_custom_call.1} parent=115 // pred_check
          %p1092 = pneg %p467
        $region154: #{tpu_custom_call.1} parent=115 // pred_check_branch
          %1094 = sbr.rel (%p1092) target = $region156
        $region155: #{tpu_custom_call.1} parent=115 // pred_region
          %1095 = dma.done %s1088, 32
        $region156: #{tpu_custom_call.1} parent=115 // pred_fallthru
          _
        %s1096 = sand.u32 %s55, 1
        %s1097 = scalar_lea.sflag [#allocation23], %s1096
        %s1098 = sand.u32 %s480, 1
        %s1099 = smul.addr %s1098, 32
        %s1100 = scalar_lea.vmem [#allocation24], %s1099
        // Predicated region
        $region157: #{tpu_custom_call.1} parent=115 // pred_check
          %p1101 = pneg %p493
        $region158: #{tpu_custom_call.1} parent=115 // pred_check_branch
          %1103 = sbr.rel (%p1101) target = $region160
        $region159: #{tpu_custom_call.1} parent=115 // pred_region
          %1104 = dma.done %s1097, 512
        $region160: #{tpu_custom_call.1} parent=115 // pred_fallthru
          _
        %s1105 = sand.u32 %s55, 1
        %s1106 = scalar_lea.sflag [#allocation26], %s1105
        %s1107 = sand.u32 %s506, 1
        %s1108 = smul.addr %s1107, 2
        %s1109 = scalar_lea.vmem [#allocation25], %s1108
        // Predicated region
        $region161: #{tpu_custom_call.1} parent=115 // pred_check
          %p1110 = pneg %p519
        $region162: #{tpu_custom_call.1} parent=115 // pred_check_branch
          %1112 = sbr.rel (%p1110) target = $region164
        $region163: #{tpu_custom_call.1} parent=115 // pred_region
          %1113 = dma.done %s1106, 32
        $region164: #{tpu_custom_call.1} parent=115 // pred_fallthru
          _
        %s1114 = sand.u32 %s55, 1
        %s1115 = scalar_lea.sflag [#allocation26], %s1114
        %s1116 = sand.u32 %s584, 1
        %s1117 = smul.addr %s1116, 16
        %s1118 = scalar_lea.vmem [#allocation27], %s1117
        // Predicated region
        $region165: #{tpu_custom_call.1} parent=115 // pred_check
          %p1119 = pneg %p597
        $region166: #{tpu_custom_call.1} parent=115 // pred_check_branch
          %1121 = sbr.rel (%p1119) target = $region168
        $region167: #{tpu_custom_call.1} parent=115 // pred_region
          %1122 = dma.done %s1115, 256
        $region168: #{tpu_custom_call.1} parent=115 // pred_fallthru
          _
        %p1123 = pneg %p71
        %p1124 = pneg %p68
        %p1125 = pneg %p92
        %p1126 = pneg %p89
        %p1127 = pneg %p113
        %p1128 = pneg %p110
        %p1129 = pneg %p134
        %p1130 = pneg %p131
        %p1131 = pneg %p155
        %p1132 = pneg %p152
        %p1133 = scmp.lt.s32.totalorder %s55, 1
        %s1134 = scalar_select %p1133, %s55, 1
        %s1135 = smul.addr %s1134, 8
        %s1136 = scalar_lea.vmem %s5, %s1135
        %p1137 = pneg %p181
        %p1138 = pneg %p178
        %s1139 = sand.u32 %s55, 1
        %s1140 = scalar_lea.sflag [#allocation14], %s1139
        %s1141 = sand.u32 %s194, 1
        %s1142 = smul.addr %s1141, 16
        %s1143 = scalar_lea.vmem [#allocation13], %s1142
        %p1144 = pneg %p207
        %p1145 = pneg %p204
        %s1146 = sand.u32 %s55, 1
        %s1147 = scalar_lea.sflag [#allocation14], %s1146
        %s1148 = sand.u32 %s220, 1
        %s1149 = scalar_lea.vmem [#allocation15], %s1148
        %p1150 = pneg %p233
        %p1151 = pneg %p230
        %p1152 = scmp.lt.s32.totalorder %s55, 1
        %s1153 = scalar_select %p1152, %s55, 1
        %s1154 = smul.addr %s1153, 8
        %s1155 = smul.addr %s1154, 4
        %s1156 = scalar_lea.vmem %s8, %s1155
        %p1157 = pneg %p259
        %p1158 = pneg %p256
        %s1159 = sand.u32 %s55, 1
        %s1160 = scalar_lea.sflag [#allocation17], %s1159
        %s1161 = sand.u32 %s272, 1
        %s1162 = smul.addr %s1161, 2
        %s1163 = scalar_lea.vmem [#allocation16], %s1162
        %p1164 = pneg %p285
        %p1165 = pneg %p282
        %p1166 = scmp.lt.s32.totalorder %s55, 1
        %s1167 = scalar_select %p1166, %s55, 1
        %s1168 = smul.addr %s1167, 8
        %s1169 = smul.addr %s1168, 4
        %s1170 = scalar_lea.vmem %s10, %s1169
        %p1171 = pneg %p311
        %p1172 = pneg %p308
        %s1173 = sand.u32 %s55, 1
        %s1174 = scalar_lea.sflag [#allocation17], %s1173
        %s1175 = sand.u32 %s324, 1
        %s1176 = smul.addr %s1175, 2
        %s1177 = scalar_lea.vmem [#allocation18], %s1176
        %p1178 = pneg %p337
        %p1179 = pneg %p334
        %p1180 = scmp.lt.s32.totalorder %s55, 1
        %s1181 = scalar_select %p1180, %s55, 1
        %s1182 = scalar_lea.vmem %s12, %s1181
        %p1183 = pneg %p363
        %p1184 = pneg %p360
        %p1185 = scmp.lt.s32.totalorder %s55, 1
        %s1186 = scalar_select %p1185, %s55, 1
        %s1187 = smul.addr %s1186, 4
        %s1188 = smul.addr %s1187, 4
        %s1189 = scalar_lea.vmem %s13, %s1188
        %p1190 = pneg %p389
        %p1191 = pneg %p386
        %s1192 = sand.u32 %s55, 1
        %s1193 = scalar_lea.sflag [#allocation20], %s1192
        %s1194 = sand.u32 %s402, 1
        %s1195 = scalar_lea.vmem [#allocation19], %s1194
        %p1196 = pneg %p415
        %p1197 = pneg %p412
        %s1198 = sand.u32 %s55, 1
        %s1199 = scalar_lea.sflag [#allocation20], %s1198
        %s1200 = sand.u32 %s428, 1
        %s1201 = smul.addr %s1200, 32
        %s1202 = scalar_lea.vmem [#allocation21], %s1201
        %p1203 = pneg %p441
        %p1204 = pneg %p438
        %s1205 = sand.u32 %s55, 1
        %s1206 = scalar_lea.sflag [#allocation23], %s1205
        %s1207 = sand.u32 %s454, 1
        %s1208 = smul.addr %s1207, 2
        %s1209 = scalar_lea.vmem [#allocation22], %s1208
        %p1210 = pneg %p467
        %p1211 = pneg %p464
        %s1212 = sand.u32 %s55, 1
        %s1213 = scalar_lea.sflag [#allocation23], %s1212
        %s1214 = sand.u32 %s480, 1
        %s1215 = smul.addr %s1214, 32
        %s1216 = scalar_lea.vmem [#allocation24], %s1215
        %p1217 = pneg %p493
        %p1218 = pneg %p490
        %s1219 = sand.u32 %s55, 1
        %s1220 = scalar_lea.sflag [#allocation26], %s1219
        %s1221 = sand.u32 %s506, 1
        %s1222 = smul.addr %s1221, 2
        %s1223 = scalar_lea.vmem [#allocation25], %s1222
        %p1224 = pneg %p519
        %p1225 = pneg %p516
        %p1226 = scmp.lt.s32.totalorder %s55, 1
        %s1227 = scalar_select %p1226, %s55, 1
        %s1228 = smul.addr %s1227, 4
        %s1229 = smul.addr %s1228, 4
        %s1230 = scalar_lea.vmem %s19, %s1229
        %p1231 = pneg %p545
        %p1232 = pneg %p542
        %p1233 = scmp.lt.s32.totalorder %s55, 1
        %s1234 = scalar_select %p1233, %s55, 1
        %s1235 = scalar_lea.vmem %s20, %s1234
        %p1236 = pneg %p571
        %p1237 = pneg %p568
        %s1238 = sand.u32 %s55, 1
        %s1239 = scalar_lea.sflag [#allocation26], %s1238
        %s1240 = sand.u32 %s584, 1
        %s1241 = smul.addr %s1240, 16
        %s1242 = scalar_lea.vmem [#allocation27], %s1241
        %p1243 = pneg %p597
        %p1244 = pneg %p594
        %p1245 = scmp.lt.s32.totalorder %s55, 1
        %s1246 = scalar_select %p1245, %s55, 1
        %s1247 = scalar_lea.vmem %s22, %s1246
        %p1248 = pneg %p623
        %p1249 = pneg %p620
        %p1250 = scmp.lt.s32.totalorder %s55, 1
        %s1251 = scalar_select %p1250, %s55, 1
        %s1252 = smul.addr %s1251, 4
        %s1253 = smul.addr %s1252, 4
        %s1254 = scalar_lea.vmem %s23, %s1253
        %p1255 = pneg %p649
        %p1256 = pneg %p646
        %p1257 = pneg %p670
        %p1258 = pneg %p667
        %p1259 = pneg %p691
        %p1260 = pneg %p688
        %p1261 = scmp.lt.s32.totalorder %s55, 1
        %s1262 = scalar_select %p1261, %s55, 1
        %s1263 = smul.addr %s1262, 8
        %s1264 = scalar_lea.vmem %s5, %s1263
        %p1265 = scmp.lt.s32.totalorder %s55, 1
        %s1266 = scalar_select %p1265, %s55, 1
        %s1267 = smul.addr %s1266, 8
        %s1268 = smul.addr %s1267, 4
        %s1269 = scalar_lea.vmem %s8, %s1268
        %p1270 = scmp.lt.s32.totalorder %s55, 1
        %s1271 = scalar_select %p1270, %s55, 1
        %s1272 = smul.addr %s1271, 8
        %s1273 = smul.addr %s1272, 4
        %s1274 = scalar_lea.vmem %s10, %s1273
        %p1275 = scmp.lt.s32.totalorder %s55, 1
        %s1276 = scalar_select %p1275, %s55, 1
        %s1277 = scalar_lea.vmem %s12, %s1276
        %p1278 = scmp.lt.s32.totalorder %s55, 1
        %s1279 = scalar_select %p1278, %s55, 1
        %s1280 = smul.addr %s1279, 4
        %s1281 = smul.addr %s1280, 4
        %s1282 = scalar_lea.vmem %s13, %s1281
        %p1283 = scmp.lt.s32.totalorder %s55, 1
        %s1284 = scalar_select %p1283, %s55, 1
        %s1285 = smul.addr %s1284, 4
        %s1286 = smul.addr %s1285, 4
        %s1287 = scalar_lea.vmem %s19, %s1286
        %p1288 = scmp.lt.s32.totalorder %s55, 1
        %s1289 = scalar_select %p1288, %s55, 1
        %s1290 = scalar_lea.vmem %s20, %s1289
        %p1291 = scmp.lt.s32.totalorder %s55, 1
        %s1292 = scalar_select %p1291, %s55, 1
        %s1293 = scalar_lea.vmem %s22, %s1292
        %p1294 = scmp.lt.s32.totalorder %s55, 1
        %s1295 = scalar_select %p1294, %s55, 1
        %s1296 = smul.addr %s1295, 4
        %s1297 = smul.addr %s1296, 4
        %s1298 = scalar_lea.vmem %s23, %s1297
        %p1300 = scmp.eq.s32.totalorder %s55, 0
        // Predicated region
        $region169: #{tpu_custom_call.1} parent=115 // pred_check
          %p1301 = pneg %p1300
        $region170: #{tpu_custom_call.1} parent=115 // pred_check_branch
          %1303 = sbr.rel (%p1301) target = $region172
        $region171: #{tpu_custom_call.1} parent=115 // pred_region
          %v1304 = vld [vmem:[#allocation12] sm:$0xff]
          %vm1305 = vcmask 261120
          %1306 = vst.msk [vmem:[#allocation2] sm:$0xff] %vm1305, %v1304
          %vm1307 = vcmask 15360
          %1308 = vst.msk [vmem:[#allocation3] sm:$0xff] %vm1307, 0.0
          %vm1309 = vcmask 0
          %1310 = vst.msk [vmem:[#allocation4] sm:$0x1] %vm1309, 0.0
          %v1311 = vld [vmem:[%s1] sm:$0xff]
          %v1312 = vld [vmem:[%s1 + $0x8] sm:$0xff]
          %v1313 = vld [vmem:[%s1 + $0x10] sm:$0xff]
          %v1314 = vld [vmem:[%s1 + $0x18] sm:$0xff]
          %v1315 = vmax.f32 %v1311, 0.0
          %v1316 = vmax.f32 %v1312, 0.0
          %v1317 = vmax.f32 %v1313, 0.0
          %v1318 = vmax.f32 %v1314, 0.0
          %v1319 = vrsqrt.pop %v1315
          %v1320 = vmul.f32 %v1315, %v1319
          %vm1321 = vcmp.eq.f32.partialorder %v1315, inf
          %v1322 = vsel %vm1321, %v1315, %v1320
          %vm1323 = vcmp.eq.f32.partialorder %v1315, 0.0
          %v1324 = vand.u32 %v1315, 2147483648
          %v1325 = vsel %vm1323, %v1324, %v1322
          %v1326 = vrsqrt.pop %v1316
          %v1327 = vmul.f32 %v1316, %v1326
          %vm1328 = vcmp.eq.f32.partialorder %v1316, inf
          %v1329 = vsel %vm1328, %v1316, %v1327
          %vm1330 = vcmp.eq.f32.partialorder %v1316, 0.0
          %v1331 = vand.u32 %v1316, 2147483648
          %v1332 = vsel %vm1330, %v1331, %v1329
          %v1333 = vrsqrt.pop %v1317
          %v1334 = vmul.f32 %v1317, %v1333
          %vm1335 = vcmp.eq.f32.partialorder %v1317, inf
          %v1336 = vsel %vm1335, %v1317, %v1334
          %vm1337 = vcmp.eq.f32.partialorder %v1317, 0.0
          %v1338 = vand.u32 %v1317, 2147483648
          %v1339 = vsel %vm1337, %v1338, %v1336
          %v1340 = vrsqrt.pop %v1318
          %v1341 = vmul.f32 %v1318, %v1340
          %vm1342 = vcmp.eq.f32.partialorder %v1318, inf
          %v1343 = vsel %vm1342, %v1318, %v1341
          %vm1344 = vcmp.eq.f32.partialorder %v1318, 0.0
          %v1345 = vand.u32 %v1318, 2147483648
          %v1346 = vsel %vm1344, %v1345, %v1343
          %v1347 = vmul.f32 %v1325, 0.1
          %v1348 = vmul.f32 %v1332, 0.1
          %v1349 = vmul.f32 %v1339, 0.1
          %v1350 = vmul.f32 %v1346, 0.1
          %v1351 = vmul.f32 %v1347, %v1347
          %v1352 = vmul.f32 %v1348, %v1348
          %v1353 = vmul.f32 %v1349, %v1349
          %v1354 = vmul.f32 %v1350, %v1350
          %v1355 = vmul.f32 %v1351, %v1347
          %v1356 = vmul.f32 %v1352, %v1348
          %v1357 = vmul.f32 %v1353, %v1349
          %v1358 = vmul.f32 %v1354, %v1350
          %v1359 = vmul.f32 %v1355, %v1347
          %v1360 = vmul.f32 %v1356, %v1348
          %v1361 = vmul.f32 %v1357, %v1349
          %v1362 = vmul.f32 %v1358, %v1350
          %v1363 = vmul.f32 %v1359, %v1347
          %v1364 = vmul.f32 %v1360, %v1348
          %v1365 = vmul.f32 %v1361, %v1349
          %v1366 = vmul.f32 %v1362, %v1350
          %vm1367 = vcmp.lt.f32.partialorder %v1347, 1.0
          %vm1368 = vcmp.lt.f32.partialorder %v1348, 1.0
          %vm1369 = vcmp.lt.f32.partialorder %v1349, 1.0
          %vm1370 = vcmp.lt.f32.partialorder %v1350, 1.0
          %v1371 = vmul.f32 %v1363, 6.0
          %v1372 = vmul.f32 %v1364, 6.0
          %v1373 = vmul.f32 %v1365, 6.0
          %v1374 = vmul.f32 %v1366, 6.0
          %v1375 = vsub.f32 1.0, %v1371
          %v1376 = vsub.f32 1.0, %v1372
          %v1377 = vsub.f32 1.0, %v1373
          %v1378 = vsub.f32 1.0, %v1374
          %v1379 = vmul.f32 %v1359, 15.0
          %v1380 = vmul.f32 %v1360, 15.0
          %v1381 = vmul.f32 %v1361, 15.0
          %v1382 = vmul.f32 %v1362, 15.0
          %v1383 = vadd.f32 %v1375, %v1379
          %v1384 = vadd.f32 %v1376, %v1380
          %v1385 = vadd.f32 %v1377, %v1381
          %v1386 = vadd.f32 %v1378, %v1382
          %v1387 = vmul.f32 %v1355, 10.0
          %v1388 = vmul.f32 %v1356, 10.0
          %v1389 = vmul.f32 %v1357, 10.0
          %v1390 = vmul.f32 %v1358, 10.0
          %v1391 = vsub.f32 %v1383, %v1387
          %v1392 = vsub.f32 %v1384, %v1388
          %v1393 = vsub.f32 %v1385, %v1389
          %v1394 = vsub.f32 %v1386, %v1390
          %v1395 = vsel %vm1367, %v1391, 0.0
          %v1396 = vsel %vm1368, %v1392, 0.0
          %v1397 = vsel %vm1369, %v1393, 0.0
          %v1398 = vsel %vm1370, %v1394, 0.0
          %v1399 = vld [vmem:[#allocation10] sm:$0x1]
          %v1400 = vsub.f32 0.0, %v1399
          %v1401 = vsub.f32 0.0, %v1325
          %v1402 = vsub.f32 0.0, %v1332
          %v1403 = vsub.f32 0.0, %v1339
          %v1404 = vsub.f32 0.0, %v1346
          %v1405 = vmul.f32 %v1401, 1.442695
          %v1406 = vpow.pop %v1405
          %v1407 = vmul.f32 %v1402, 1.442695
          %v1408 = vpow.pop %v1407
          %v1409 = vmul.f32 %v1403, 1.442695
          %v1410 = vpow.pop %v1409
          %v1411 = vmul.f32 %v1404, 1.442695
          %v1412 = vpow.pop %v1411
          %v1413 = vld [vmem:[#allocation7] sm:$0x1]
          %1415 = vset.pattern.permute.xlu0 0
          %1416 = vperm.xlu0 %1415, %v1406
          %v1417 = vpop.permute.xlu0 %1416
          %1420 = vset.pattern.permute.xlu0 0
          %1421 = vperm.xlu0 %1420, %v1408
          %v1422 = vpop.permute.xlu0 %1421
          %1425 = vset.pattern.permute.xlu0 0
          %1426 = vperm.xlu0 %1425, %v1410
          %v1427 = vpop.permute.xlu0 %1426
          %1430 = vset.pattern.permute.xlu0 0
          %1431 = vperm.xlu0 %1430, %v1412
          %v1432 = vpop.permute.xlu0 %1431
          %v1435 = vlaneseq
          %v1436 = vshrl.u32 %v1435, 7
          %v1437 = vsub.s32 0, %v1436
          %v1438 = vrot.slane %v1413, %v1437
          %v1440 = vsub.f32 %v1417, %v1438
          %v1441 = vsub.f32 %v1422, %v1438
          %v1442 = vsub.f32 %v1427, %v1438
          %v1443 = vsub.f32 %v1432, %v1438
          %v1444 = vmul.f32 %v1440, %v1440
          %v1445 = vmul.f32 %v1441, %v1441
          %v1446 = vmul.f32 %v1442, %v1442
          %v1447 = vmul.f32 %v1443, %v1443
          %v1449 = vlaneseq
          %v1450 = vshrl.u32 %v1449, 7
          %v1451 = vsub.s32 0, %v1450
          %v1452 = vrot.slane %v1400, %v1451
          %v1454 = vmul.f32 %v1452, %v1444
          %v1455 = vmul.f32 %v1452, %v1445
          %v1456 = vmul.f32 %v1452, %v1446
          %v1457 = vmul.f32 %v1452, %v1447
          %v1458 = vmul.f32 %v1454, 1.442695
          %v1459 = vpow.pop %v1458
          %v1460 = vmul.f32 %v1455, 1.442695
          %v1461 = vpow.pop %v1460
          %v1462 = vmul.f32 %v1456, 1.442695
          %v1463 = vpow.pop %v1462
          %v1464 = vmul.f32 %v1457, 1.442695
          %v1465 = vpow.pop %v1464
          %1467 = vset.pattern.permute.xlu0 0
          %1468 = vperm.xlu0 %1467, %v1395
          %v1469 = vpop.permute.xlu0 %1468
          %1472 = vset.pattern.permute.xlu0 0
          %1473 = vperm.xlu0 %1472, %v1396
          %v1474 = vpop.permute.xlu0 %1473
          %1477 = vset.pattern.permute.xlu0 0
          %1478 = vperm.xlu0 %1477, %v1397
          %v1479 = vpop.permute.xlu0 %1478
          %1482 = vset.pattern.permute.xlu0 0
          %1483 = vperm.xlu0 %1482, %v1398
          %v1484 = vpop.permute.xlu0 %1483
          %v1486 = vmul.f32 %v1469, %v1459
          %v1487 = vmul.f32 %v1474, %v1461
          %v1488 = vmul.f32 %v1479, %v1463
          %v1489 = vmul.f32 %v1484, %v1465
          %vm1490 = vcmask 39936
          %1491 = vst.msk [vmem:[#allocation5] sm:$0xff] %vm1490, %v1486
          %1492 = vst.msk [vmem:[#allocation5 + $0x8] sm:$0xff] %vm1490, %v1487
          %1493 = vst.msk [vmem:[#allocation5 + $0x10] sm:$0xff] %vm1490, %v1488
          %1494 = vst.msk [vmem:[#allocation5 + $0x18] sm:$0xff] %vm1490, %v1489
          %v1495 = vlaneseq
          %v1496 = vand.u32 %v1495, 127
          %v1497 = vld [vmem:[%s0] sm:$0xff]
          %v1498 = vld [vmem:[%s0 + $0x8] sm:$0xff]
          %v1499 = vld [vmem:[%s0 + $0x10] sm:$0xff]
          %v1500 = vld [vmem:[%s0 + $0x18] sm:$0xff]
          %1501 = vset.pattern.permute.xlu0 0
          %1502 = vperm.xlu0 %1501, %v1497
          %v1503 = vpop.permute.xlu0 %1502
          %1504 = vset.pattern.permute.xlu0 0
          %1505 = vperm.xlu0 %1504, %v1498
          %v1506 = vpop.permute.xlu0 %1505
          %1507 = vset.pattern.permute.xlu0 0
          %1508 = vperm.xlu0 %1507, %v1499
          %v1509 = vpop.permute.xlu0 %1508
          %1510 = vset.pattern.permute.xlu0 0
          %1511 = vperm.xlu0 %1510, %v1500
          %v1512 = vpop.permute.xlu0 %1511
          %vm1513 = vcmp.eq.s32.totalorder %v1503, %v1496
          %vm1514 = vcmp.eq.s32.totalorder %v1506, %v1496
          %vm1515 = vcmp.eq.s32.totalorder %v1509, %v1496
          %vm1516 = vcmp.eq.s32.totalorder %v1512, %v1496
          %v1517 = vsel %vm1513, 1.0, 0.0
          %v1518 = vsel %vm1514, 1.0, 0.0
          %v1519 = vsel %vm1515, 1.0, 0.0
          %v1520 = vsel %vm1516, 1.0, 0.0
          %v1521 = vpack.c.bf16 %v1518, %v1517
          %v1522 = vpack.c.bf16 %v1520, %v1519
          %vm1523 = vcmask 64512
          %1524 = vst.msk [vmem:[#allocation6] sm:$0xff] %vm1523, %v1521
          %1525 = vst.msk [vmem:[#allocation6 + $0x8] sm:$0xff] %vm1523, %v1522
        $region172: #{tpu_custom_call.1} parent=115 // pred_fallthru
          _
        %v1526 = vld [vmem:[#allocation2] sm:$0xff]
        %v1527 = vmax.f32 %v1526, 0.0
        %v1528 = vand.u32 2147483647, %v1526
        %v1529 = vsub.f32 0.0, %v1528
        %v1530 = vmul.f32 %v1529, 1.442695
        %v1531 = vpow.pop %v1530
        %v1532 = vadd.f32 %v1531, 1.0
        %v1533 = vlog2.pop %v1532
        %v1534 = vmul.f32 %v1533, 0.6931472
        %v1535 = vadd.f32 %v1527, %v1534
        %v1536 = vsub.f32 %v1535, 0.6931472
        %v1537 = vld [vmem:[%s1039] sm:$0xf]
        %v1538 = vld [vmem:[%s1039 + $0x4] sm:$0xf]
        %v1539 = vld [vmem:[%s1039 + $0x8] sm:$0xf]
        %v1540 = vld [vmem:[%s1039 + $0xc] sm:$0xf]
        %v1541 = vpack.c.bf16 %v1536, %v1536
        %v1542 = vld [vmem:[%s1047] sm:$0x1]
        %v1544 = vlaneseq
        %v1545 = vshrl.u32 %v1544, 7
        %v1546 = vsub.s32 0, %v1545
        %v1547 = vrot.slane %v1542, %v1546
        %v1553 = vunpack.c.l.b16 %v1537
        %v1554 = vunpack.c.l.b16 %v1538
        %v1555 = vunpack.c.l.b16 %v1539
        %v1556 = vunpack.c.l.b16 %v1540
        %v1557 = vpack.c.b16 %v1554, %v1553
        %v1558 = vpack.c.b16 %v1556, %v1555
        %vm1561 = vcmask 261120
        %v1563 = vsel %vm1561, %v1541, 0
        %1565 = vmatprep.subr.bf16.mxu0 0
        %1566 = vmatpush1.bf16.msra.mxu0 %v1557
        %1567 = vmatprep.subr.bf16.mxu0 0
        %1568 = vmatpush1.bf16.msra.mxu0 %v1558
        %1569 = vmatprep.subr.bf16.mxu0 0
        %1570 = vmatpush1.bf16.msra.mxu0 0
        %1571 = vmatprep.subr.bf16.mxu0 0
        %1572 = vmatpush1.bf16.msra.mxu0 0
        %1573 = vmatprep.subr.bf16.mxu0 0
        %1574 = vmatpush1.bf16.msra.mxu0 0
        %1575 = vmatprep.subr.bf16.mxu0 0
        %1576 = vmatpush1.bf16.msra.mxu0 0
        %1577 = vmatprep.subr.bf16.mxu0 0
        %1578 = vmatpush1.bf16.msra.mxu0 0
        %1579 = vmatprep.subr.bf16.mxu0 0
        %1580 = vmatpush1.bf16.msra.mxu0 0
        %1581 = vmatprep.subr.bf16.mxu0 0
        %1582 = vmatpush1.bf16.msra.mxu0 0
        %1583 = vmatprep.subr.bf16.mxu0 0
        %1584 = vmatpush1.bf16.msra.mxu0 0
        %1585 = vmatprep.subr.bf16.mxu0 0
        %1586 = vmatpush1.bf16.msra.mxu0 0
        %1587 = vmatprep.subr.bf16.mxu0 0
        %1588 = vmatpush1.bf16.msra.mxu0 0
        %1589 = vmatprep.subr.bf16.mxu0 0
        %1590 = vmatpush1.bf16.msra.mxu0 0
        %1591 = vmatprep.subr.bf16.mxu0 0
        %1592 = vmatpush1.bf16.msra.mxu0 0
        %1593 = vmatprep.subr.bf16.mxu0 0
        %1594 = vmatpush1.bf16.msra.mxu0 0
        %1595 = vmatprep.subr.bf16.mxu0 0
        %1596 = vmatpush1.bf16.msra.mxu0 0
        %1597 = vmatprep.mubr.bf16.mxu0 0
        %1598 = vmatmul.mubr.bf16.gmra.mrb[0].mxu0 %v1563
        %v1599 = vpop.f32.mrb[0].mxu0
        %v1600 = vadd.f32 %v1547, %v1599
        %v1601 = vpop.f32.mrb[0].mxu0
        %v1602 = vpop.f32.mrb[0].mxu0
        %v1603 = vpop.f32.mrb[0].mxu0
        %1604 = vdwg.mxu0
        %v1605 = vld [vmem:[#allocation6] sm:$0xff]
        %v1606 = vld [vmem:[#allocation6 + $0x8] sm:$0xff]
        %v1607 = vpack.c.bf16 %v1600, %v1600
        %1609 = vrot.lane.b32.xlu0 %v1607, 96
        %v1610 = vpop.permute.xlu0 %1609
        %vm1611 = vcmask 64512
        %v1613 = vsel %vm1611, %v1605, 0
        %v1616 = vsel %vm1611, %v1606, 0
        %vm1618 = vcmask 1043456
        %v1620 = vsel %vm1618, %v1610, 0
        %1622 = vmatprep.subr.bf16.mxu0 0
        %1623 = vmatpush1.bf16.msra.mxu0 %v1620
        %1624 = vmatprep.subr.bf16.mxu0 0
        %1625 = vmatpush1.bf16.msra.mxu0 0
        %1626 = vmatprep.subr.bf16.mxu0 0
        %1627 = vmatpush1.bf16.msra.mxu0 0
        %1628 = vmatprep.subr.bf16.mxu0 0
        %1629 = vmatpush1.bf16.msra.mxu0 0
        %1630 = vmatprep.subr.bf16.mxu0 0
        %1631 = vmatpush1.bf16.msra.mxu0 0
        %1632 = vmatprep.subr.bf16.mxu0 0
        %1633 = vmatpush1.bf16.msra.mxu0 0
        %1634 = vmatprep.subr.bf16.mxu0 0
        %1635 = vmatpush1.bf16.msra.mxu0 0
        %1636 = vmatprep.subr.bf16.mxu0 0
        %1637 = vmatpush1.bf16.msra.mxu0 0
        %1638 = vmatprep.subr.bf16.mxu0 0
        %1639 = vmatpush1.bf16.msra.mxu0 0
        %1640 = vmatprep.subr.bf16.mxu0 0
        %1641 = vmatpush1.bf16.msra.mxu0 0
        %1642 = vmatprep.subr.bf16.mxu0 0
        %1643 = vmatpush1.bf16.msra.mxu0 0
        %1644 = vmatprep.subr.bf16.mxu0 0
        %1645 = vmatpush1.bf16.msra.mxu0 0
        %1646 = vmatprep.subr.bf16.mxu0 0
        %1647 = vmatpush1.bf16.msra.mxu0 0
        %1648 = vmatprep.subr.bf16.mxu0 0
        %1649 = vmatpush1.bf16.msra.mxu0 0
        %1650 = vmatprep.subr.bf16.mxu0 0
        %1651 = vmatpush1.bf16.msra.mxu0 0
        %1652 = vmatprep.subr.bf16.mxu0 0
        %1653 = vmatpush1.bf16.msra.mxu0 0
        %1654 = vmatprep.mubr.bf16.mxu0 0
        %1655 = vmatmul.mubr.bf16.gmra.mrb[0].mxu0 %v1613
        %v1656 = vpop.f32.mrb[0].mxu0
        %v1657 = vadd.f32 0.0, %v1656
        %v1658 = vpop.f32.mrb[0].mxu0
        %v1659 = vpop.f32.mrb[0].mxu0
        %v1660 = vadd.f32 0.0, %v1659
        %v1661 = vpop.f32.mrb[0].mxu0
        %1662 = vmatprep.mubr.bf16.mxu0 0
        %1663 = vmatmul.mubr.bf16.gmra.mrb[0].mxu0 %v1616
        %v1664 = vpop.f32.mrb[0].mxu0
        %v1665 = vadd.f32 0.0, %v1664
        %v1666 = vpop.f32.mrb[0].mxu0
        %v1667 = vpop.f32.mrb[0].mxu0
        %v1668 = vadd.f32 0.0, %v1667
        %v1669 = vpop.f32.mrb[0].mxu0
        %1670 = vdwg.mxu0
        %v1671 = vld [vmem:[#allocation5] sm:$0xff]
        %v1672 = vld [vmem:[#allocation5 + $0x8] sm:$0xff]
        %v1673 = vld [vmem:[#allocation5 + $0x10] sm:$0xff]
        %v1674 = vld [vmem:[#allocation5 + $0x18] sm:$0xff]
        %v1675 = vld [vmem:[%s1264] sm:$0x1f]
        %1677 = vset.pattern.permute.xlu0 0
        %1678 = vperm.xlu0 %1677, %v1671
        %v1679 = vpop.permute.xlu0 %1678
        %1682 = vset.pattern.permute.xlu0 0
        %1683 = vperm.xlu0 %1682, %v1672
        %v1684 = vpop.permute.xlu0 %1683
        %1687 = vset.pattern.permute.xlu0 0
        %1688 = vperm.xlu0 %1687, %v1673
        %v1689 = vpop.permute.xlu0 %1688
        %1692 = vset.pattern.permute.xlu0 0
        %1693 = vperm.xlu0 %1692, %v1674
        %v1694 = vpop.permute.xlu0 %1693
        %v1696 = vlaneseq
        %v1697 = vshrl.u32 %v1696, 7
        %v1698 = vsub.s32 0, %v1697
        %v1699 = vrot.slane %v1675, %v1698
        %v1700 = vmul.f32 %v1679, %v1699
        %v1701 = vmul.f32 %v1684, %v1699
        %v1702 = vmul.f32 %v1689, %v1699
        %v1703 = vmul.f32 %v1694, %v1699
        %v1704 = vadd.f32 %v1700, 0.0
        %v1705 = vadd.f32 %v1701, 0.0
        %v1706 = vadd.f32 %v1702, 0.0
        %v1707 = vadd.f32 %v1703, 0.0
        %1708 = vset.pattern.permute.xlu0 1
        %1709 = vperm.xlu0 %1708, %v1671
        %v1710 = vpop.permute.xlu0 %1709
        %1712 = vset.pattern.permute.xlu0 1
        %1713 = vperm.xlu0 %1712, %v1672
        %v1714 = vpop.permute.xlu0 %1713
        %1716 = vset.pattern.permute.xlu0 1
        %1717 = vperm.xlu0 %1716, %v1673
        %v1718 = vpop.permute.xlu0 %1717
        %1720 = vset.pattern.permute.xlu0 1
        %1721 = vperm.xlu0 %1720, %v1674
        %v1722 = vpop.permute.xlu0 %1721
        %v1724 = vlaneseq
        %v1725 = vshrl.u32 %v1724, 7
        %v1726 = vsub.s32 1, %v1725
        %v1727 = vrot.slane %v1675, %v1726
        %v1728 = vmul.f32 %v1710, %v1727
        %v1729 = vmul.f32 %v1714, %v1727
        %v1730 = vmul.f32 %v1718, %v1727
        %v1731 = vmul.f32 %v1722, %v1727
        %v1732 = vadd.f32 %v1704, %v1728
        %v1733 = vadd.f32 %v1705, %v1729
        %v1734 = vadd.f32 %v1706, %v1730
        %v1735 = vadd.f32 %v1707, %v1731
        %1736 = vset.pattern.permute.xlu0 2
        %1737 = vperm.xlu0 %1736, %v1671
        %v1738 = vpop.permute.xlu0 %1737
        %1740 = vset.pattern.permute.xlu0 2
        %1741 = vperm.xlu0 %1740, %v1672
        %v1742 = vpop.permute.xlu0 %1741
        %1744 = vset.pattern.permute.xlu0 2
        %1745 = vperm.xlu0 %1744, %v1673
        %v1746 = vpop.permute.xlu0 %1745
        %1748 = vset.pattern.permute.xlu0 2
        %1749 = vperm.xlu0 %1748, %v1674
        %v1750 = vpop.permute.xlu0 %1749
        %v1752 = vlaneseq
        %v1753 = vshrl.u32 %v1752, 7
        %v1754 = vsub.s32 2, %v1753
        %v1755 = vrot.slane %v1675, %v1754
        %v1756 = vmul.f32 %v1738, %v1755
        %v1757 = vmul.f32 %v1742, %v1755
        %v1758 = vmul.f32 %v1746, %v1755
        %v1759 = vmul.f32 %v1750, %v1755
        %v1760 = vadd.f32 %v1732, %v1756
        %v1761 = vadd.f32 %v1733, %v1757
        %v1762 = vadd.f32 %v1734, %v1758
        %v1763 = vadd.f32 %v1735, %v1759
        %1764 = vset.pattern.permute.xlu0 3
        %1765 = vperm.xlu0 %1764, %v1671
        %v1766 = vpop.permute.xlu0 %1765
        %1768 = vset.pattern.permute.xlu0 3
        %1769 = vperm.xlu0 %1768, %v1672
        %v1770 = vpop.permute.xlu0 %1769
        %1772 = vset.pattern.permute.xlu0 3
        %1773 = vperm.xlu0 %1772, %v1673
        %v1774 = vpop.permute.xlu0 %1773
        %1776 = vset.pattern.permute.xlu0 3
        %1777 = vperm.xlu0 %1776, %v1674
        %v1778 = vpop.permute.xlu0 %1777
        %v1780 = vlaneseq
        %v1781 = vshrl.u32 %v1780, 7
        %v1782 = vsub.s32 3, %v1781
        %v1783 = vrot.slane %v1675, %v1782
        %v1784 = vmul.f32 %v1766, %v1783
        %v1785 = vmul.f32 %v1770, %v1783
        %v1786 = vmul.f32 %v1774, %v1783
        %v1787 = vmul.f32 %v1778, %v1783
        %v1788 = vadd.f32 %v1760, %v1784
        %v1789 = vadd.f32 %v1761, %v1785
        %v1790 = vadd.f32 %v1762, %v1786
        %v1791 = vadd.f32 %v1763, %v1787
        %1792 = vset.pattern.permute.xlu0 4
        %1793 = vperm.xlu0 %1792, %v1671
        %v1794 = vpop.permute.xlu0 %1793
        %1796 = vset.pattern.permute.xlu0 4
        %1797 = vperm.xlu0 %1796, %v1672
        %v1798 = vpop.permute.xlu0 %1797
        %1800 = vset.pattern.permute.xlu0 4
        %1801 = vperm.xlu0 %1800, %v1673
        %v1802 = vpop.permute.xlu0 %1801
        %1804 = vset.pattern.permute.xlu0 4
        %1805 = vperm.xlu0 %1804, %v1674
        %v1806 = vpop.permute.xlu0 %1805
        %v1808 = vlaneseq
        %v1809 = vshrl.u32 %v1808, 7
        %v1810 = vsub.s32 4, %v1809
        %v1811 = vrot.slane %v1675, %v1810
        %v1812 = vmul.f32 %v1794, %v1811
        %v1813 = vmul.f32 %v1798, %v1811
        %v1814 = vmul.f32 %v1802, %v1811
        %v1815 = vmul.f32 %v1806, %v1811
        %v1816 = vadd.f32 %v1788, %v1812
        %v1817 = vadd.f32 %v1789, %v1813
        %v1818 = vadd.f32 %v1790, %v1814
        %v1819 = vadd.f32 %v1791, %v1815
        %v1820 = vmul.f32 %v1816, %v1657
        %v1821 = vmul.f32 %v1817, %v1660
        %v1822 = vmul.f32 %v1818, %v1665
        %v1823 = vmul.f32 %v1819, %v1668
        %v1824 = vlaneseq
        %v1825 = vshrl.u32 %v1824, 7
        %v1826 = vadd.s32 %v1825, 8
        %v1827 = vadd.s32 %v1825, 16
        %v1828 = vadd.s32 %v1825, 24
        %v1829 = vlaneseq
        %v1830 = vand.u32 %v1829, 127
        %v1831 = vmul.u32 %v1825, 4
        %v1832 = vmul.u32 %v1826, 4
        %v1833 = vmul.u32 %v1827, 4
        %v1834 = vmul.u32 %v1828, 4
        %vm1835 = vcmp.ge.s32.totalorder %v1830, %v1831
        %vm1836 = vcmp.ge.s32.totalorder %v1830, %v1832
        %vm1837 = vcmp.ge.s32.totalorder %v1830, %v1833
        %vm1838 = vcmp.ge.s32.totalorder %v1830, %v1834
        %v1839 = vadd.s32 %v1831, 4
        %v1840 = vadd.s32 %v1832, 4
        %v1841 = vadd.s32 %v1833, 4
        %v1842 = vadd.s32 %v1834, 4
        %vm1843 = vcmp.lt.s32.totalorder %v1830, %v1839
        %vm1844 = vcmp.lt.s32.totalorder %v1830, %v1840
        %vm1845 = vcmp.lt.s32.totalorder %v1830, %v1841
        %vm1846 = vcmp.lt.s32.totalorder %v1830, %v1842
        %vm1847 = vmand %vm1835, %vm1843
        %vm1848 = vmand %vm1836, %vm1844
        %vm1849 = vmand %vm1837, %vm1845
        %vm1850 = vmand %vm1838, %vm1846
        %v1851 = vsel %vm1847, 1.0, 0.0
        %v1852 = vsel %vm1848, 1.0, 0.0
        %v1853 = vsel %vm1849, 1.0, 0.0
        %v1854 = vsel %vm1850, 1.0, 0.0
        %v1855 = vpack.c.bf16 %v1852, %v1851
        %v1856 = vpack.c.bf16 %v1854, %v1853
        %v1858 = vsel %vm1561, %v1607, 0
        %1860 = vmatprep.subr.bf16.mxu0 0
        %1861 = vmatpush1.bf16.msra.mxu0 %v1855
        %1862 = vmatprep.subr.bf16.mxu0 0
        %1863 = vmatpush1.bf16.msra.mxu0 %v1856
        %1864 = vmatprep.subr.bf16.mxu0 0
        %1865 = vmatpush1.bf16.msra.mxu0 0
        %1866 = vmatprep.subr.bf16.mxu0 0
        %1867 = vmatpush1.bf16.msra.mxu0 0
        %1868 = vmatprep.subr.bf16.mxu0 0
        %1869 = vmatpush1.bf16.msra.mxu0 0
        %1870 = vmatprep.subr.bf16.mxu0 0
        %1871 = vmatpush1.bf16.msra.mxu0 0
        %1872 = vmatprep.subr.bf16.mxu0 0
        %1873 = vmatpush1.bf16.msra.mxu0 0
        %1874 = vmatprep.subr.bf16.mxu0 0
        %1875 = vmatpush1.bf16.msra.mxu0 0
        %1876 = vmatprep.subr.bf16.mxu0 0
        %1877 = vmatpush1.bf16.msra.mxu0 0
        %1878 = vmatprep.subr.bf16.mxu0 0
        %1879 = vmatpush1.bf16.msra.mxu0 0
        %1880 = vmatprep.subr.bf16.mxu0 0
        %1881 = vmatpush1.bf16.msra.mxu0 0
        %1882 = vmatprep.subr.bf16.mxu0 0
        %1883 = vmatpush1.bf16.msra.mxu0 0
        %1884 = vmatprep.subr.bf16.mxu0 0
        %1885 = vmatpush1.bf16.msra.mxu0 0
        %1886 = vmatprep.subr.bf16.mxu0 0
        %1887 = vmatpush1.bf16.msra.mxu0 0
        %1888 = vmatprep.subr.bf16.mxu0 0
        %1889 = vmatpush1.bf16.msra.mxu0 0
        %1890 = vmatprep.subr.bf16.mxu0 0
        %1891 = vmatpush1.bf16.msra.mxu0 0
        %1892 = vmatprep.mubr.bf16.mxu0 0
        %1893 = vmatmul.mubr.bf16.gmra.mrb[0].mxu0 %v1858
        %v1894 = vpop.f32.mrb[0].mxu0
        %v1895 = vadd.f32 0.0, %v1894
        %v1896 = vpop.f32.mrb[0].mxu0
        %v1897 = vpop.f32.mrb[0].mxu0
        %v1898 = vpop.f32.mrb[0].mxu0
        %1899 = vdwg.mxu0
        %v1900 = vmul.f32 %v1895, %v1820
        %v1901 = vadd.f32 %v1900, 0.0
        %1903 = vrot.lane.b32.xlu0 %v1821, 32
        %v1904 = vpop.permute.xlu0 %1903
        %v1906 = vmul.f32 %v1895, %v1904
        %1908 = vrot.lane.b32.xlu0 %v1906, 96
        %v1909 = vpop.permute.xlu0 %1908
        %v1911 = vadd.f32 %v1901, %v1909
        %1913 = vrot.lane.b32.xlu0 %v1822, 64
        %v1914 = vpop.permute.xlu0 %1913
        %v1916 = vmul.f32 %v1895, %v1914
        %1918 = vrot.lane.b32.xlu0 %v1916, 64
        %v1919 = vpop.permute.xlu0 %1918
        %v1921 = vadd.f32 %v1911, %v1919
        %1923 = vrot.lane.b32.xlu0 %v1823, 96
        %v1924 = vpop.permute.xlu0 %1923
        %v1926 = vmul.f32 %v1895, %v1924
        %1928 = vrot.lane.b32.xlu0 %v1926, 32
        %v1929 = vpop.permute.xlu0 %1928
        %v1931 = vadd.f32 %v1921, %v1929
        %v1932 = vcvt.s32.f32 %v1825
        %v1933 = vcvt.s32.f32 %v1826
        %v1934 = vcvt.s32.f32 %v1827
        %v1935 = vcvt.s32.f32 %v1828
        %v1936 = vcvt.s32.f32 %v1830
        %v1937 = vadd.f32 %v1932, 0.0
        %v1938 = vadd.f32 %v1933, 0.0
        %v1939 = vadd.f32 %v1934, 0.0
        %v1940 = vadd.f32 %v1935, 0.0
        %v1941 = vrcp.pop 4.0
        %v1942 = vmul.f32 %v1937, %v1941
        %v1943 = vmul.f32 %v1938, %v1941
        %v1944 = vmul.f32 %v1939, %v1941
        %v1945 = vmul.f32 %v1940, %v1941
        %v1946 = vfloor.f32 %v1942
        %v1947 = vfloor.f32 %v1943
        %v1948 = vfloor.f32 %v1944
        %v1949 = vfloor.f32 %v1945
        %v1950 = vmul.f32 %v1946, 4.0
        %v1951 = vmul.f32 %v1947, 4.0
        %v1952 = vmul.f32 %v1948, 4.0
        %v1953 = vmul.f32 %v1949, 4.0
        %v1954 = vsub.f32 %v1937, %v1950
        %v1955 = vsub.f32 %v1938, %v1951
        %v1956 = vsub.f32 %v1939, %v1952
        %v1957 = vsub.f32 %v1940, %v1953
        %v1958 = vsub.f32 %v1954, %v1936
        %v1959 = vsub.f32 %v1955, %v1936
        %v1960 = vsub.f32 %v1956, %v1936
        %v1961 = vsub.f32 %v1957, %v1936
        %v1962 = vand.u32 2147483647, %v1958
        %v1963 = vand.u32 2147483647, %v1959
        %v1964 = vand.u32 2147483647, %v1960
        %v1965 = vand.u32 2147483647, %v1961
        %vm1966 = vcmp.lt.f32.partialorder %v1962, 0.5
        %vm1967 = vcmp.lt.f32.partialorder %v1963, 0.5
        %vm1968 = vcmp.lt.f32.partialorder %v1964, 0.5
        %vm1969 = vcmp.lt.f32.partialorder %v1965, 0.5
        %v1970 = vsel %vm1966, 1.0, 0.0
        %v1971 = vsel %vm1967, 1.0, 0.0
        %v1972 = vsel %vm1968, 1.0, 0.0
        %v1973 = vsel %vm1969, 1.0, 0.0
        %v1974 = vpack.c.bf16 %v1971, %v1970
        %v1975 = vpack.c.bf16 %v1973, %v1972
        %v1976 = vpack.c.bf16 %v1931, %v1931
        %v1978 = vsel %vm1561, %v1976, 0
        %1980 = vmatprep.subr.bf16.mxu0 0
        %1981 = vmatpush1.bf16.msra.mxu0 %v1974
        %1982 = vmatprep.subr.bf16.mxu0 0
        %1983 = vmatpush1.bf16.msra.mxu0 %v1975
        %1984 = vmatprep.subr.bf16.mxu0 0
        %1985 = vmatpush1.bf16.msra.mxu0 0
        %1986 = vmatprep.subr.bf16.mxu0 0
        %1987 = vmatpush1.bf16.msra.mxu0 0
        %1988 = vmatprep.subr.bf16.mxu0 0
        %1989 = vmatpush1.bf16.msra.mxu0 0
        %1990 = vmatprep.subr.bf16.mxu0 0
        %1991 = vmatpush1.bf16.msra.mxu0 0
        %1992 = vmatprep.subr.bf16.mxu0 0
        %1993 = vmatpush1.bf16.msra.mxu0 0
        %1994 = vmatprep.subr.bf16.mxu0 0
        %1995 = vmatpush1.bf16.msra.mxu0 0
        %1996 = vmatprep.subr.bf16.mxu0 0
        %1997 = vmatpush1.bf16.msra.mxu0 0
        %1998 = vmatprep.subr.bf16.mxu0 0
        %1999 = vmatpush1.bf16.msra.mxu0 0
        %2000 = vmatprep.subr.bf16.mxu0 0
        %2001 = vmatpush1.bf16.msra.mxu0 0
        %2002 = vmatprep.subr.bf16.mxu0 0
        %2003 = vmatpush1.bf16.msra.mxu0 0
        %2004 = vmatprep.subr.bf16.mxu0 0
        %2005 = vmatpush1.bf16.msra.mxu0 0
        %2006 = vmatprep.subr.bf16.mxu0 0
        %2007 = vmatpush1.bf16.msra.mxu0 0
        %2008 = vmatprep.subr.bf16.mxu0 0
        %2009 = vmatpush1.bf16.msra.mxu0 0
        %2010 = vmatprep.subr.bf16.mxu0 0
        %2011 = vmatpush1.bf16.msra.mxu0 0
        %2012 = vmatprep.mubr.bf16.mxu0 0
        %2013 = vmatmul.mubr.bf16.gmra.mrb[0].mxu0 %v1978
        %v2014 = vpop.f32.mrb[0].mxu0
        %v2015 = vadd.f32 0.0, %v2014
        %v2016 = vpop.f32.mrb[0].mxu0
        %v2017 = vpop.f32.mrb[0].mxu0
        %v2018 = vpop.f32.mrb[0].mxu0
        %2019 = vdwg.mxu0
        %vm2020 = vcmask 31744
        %v2021 = vsel %vm2020, %v2015, -inf
        %2022 = vmax.xlane.f32.xlu0 %v2021
        %v2023 = vpop.xlane.xlu0 %2022
        %v2024 = vsub.f32 %v2015, %v2023
        %v2025 = vmul.f32 %v2024, 1.442695
        %v2026 = vpow.pop %v2025
        %v2027 = vsel %vm2020, %v2026, 0.0
        %2028 = vadd.xlane.f32.xlu0 %v2027
        %v2029 = vpop.xlane.xlu0 %2028
        %v2030 = vrcp.pop %v2029
        %v2031 = vmul.f32 %v2026, %v2030
        %2033 = vset.pattern.permute.xlu0 0
        %2034 = vperm.xlu0 %2033, %v2031
        %v2035 = vpop.permute.xlu0 %2034
        %v2037 = vmul.f32 %v2035, %v1820
        %v2038 = vadd.f32 %v2037, 0.0
        %2039 = vset.pattern.permute.xlu0 1
        %2040 = vperm.xlu0 %2039, %v2031
        %v2041 = vpop.permute.xlu0 %2040
        %v2043 = vmul.f32 %v2041, %v1821
        %v2044 = vadd.f32 %v2038, %v2043
        %2045 = vset.pattern.permute.xlu0 2
        %2046 = vperm.xlu0 %2045, %v2031
        %v2047 = vpop.permute.xlu0 %2046
        %v2049 = vmul.f32 %v2047, %v1822
        %v2050 = vadd.f32 %v2044, %v2049
        %2051 = vset.pattern.permute.xlu0 3
        %2052 = vperm.xlu0 %2051, %v2031
        %v2053 = vpop.permute.xlu0 %2052
        %v2055 = vmul.f32 %v2053, %v1823
        %v2056 = vadd.f32 %v2050, %v2055
        %v2057 = vadd.f32 %v1600, %v2056
        %v2058 = vmax.f32 %v2057, 0.0
        %v2059 = vand.u32 2147483647, %v2057
        %v2060 = vsub.f32 0.0, %v2059
        %v2061 = vmul.f32 %v2060, 1.442695
        %v2062 = vpow.pop %v2061
        %v2063 = vadd.f32 %v2062, 1.0
        %v2064 = vlog2.pop %v2063
        %v2065 = vmul.f32 %v2064, 0.6931472
        %v2066 = vadd.f32 %v2058, %v2065
        %v2067 = vsub.f32 %v2066, 0.6931472
        %v2068 = vld [vmem:[%s1269] sm:$0xf]
        %v2069 = vld [vmem:[%s1269 + $0x4] sm:$0xf]
        %v2070 = vld [vmem:[%s1269 + $0x8] sm:$0xf]
        %v2071 = vld [vmem:[%s1269 + $0xc] sm:$0xf]
        %v2072 = vpack.c.bf16 %v2067, %v2067
        %v2073 = vld [vmem:[%s1056] sm:$0x1]
        %v2075 = vlaneseq
        %v2076 = vshrl.u32 %v2075, 7
        %v2077 = vsub.s32 0, %v2076
        %v2078 = vrot.slane %v2073, %v2077
        %v2084 = vunpack.c.l.b16 %v2068
        %v2085 = vunpack.c.l.b16 %v2069
        %v2086 = vunpack.c.l.b16 %v2070
        %v2087 = vunpack.c.l.b16 %v2071
        %v2088 = vpack.c.b16 %v2085, %v2084
        %v2089 = vpack.c.b16 %v2087, %v2086
        %v2093 = vsel %vm1561, %v2072, 0
        %2095 = vmatprep.subr.bf16.mxu0 0
        %2096 = vmatpush1.bf16.msra.mxu0 %v2088
        %2097 = vmatprep.subr.bf16.mxu0 0
        %2098 = vmatpush1.bf16.msra.mxu0 %v2089
        %2099 = vmatprep.subr.bf16.mxu0 0
        %2100 = vmatpush1.bf16.msra.mxu0 0
        %2101 = vmatprep.subr.bf16.mxu0 0
        %2102 = vmatpush1.bf16.msra.mxu0 0
        %2103 = vmatprep.subr.bf16.mxu0 0
        %2104 = vmatpush1.bf16.msra.mxu0 0
        %2105 = vmatprep.subr.bf16.mxu0 0
        %2106 = vmatpush1.bf16.msra.mxu0 0
        %2107 = vmatprep.subr.bf16.mxu0 0
        %2108 = vmatpush1.bf16.msra.mxu0 0
        %2109 = vmatprep.subr.bf16.mxu0 0
        %2110 = vmatpush1.bf16.msra.mxu0 0
        %2111 = vmatprep.subr.bf16.mxu0 0
        %2112 = vmatpush1.bf16.msra.mxu0 0
        %2113 = vmatprep.subr.bf16.mxu0 0
        %2114 = vmatpush1.bf16.msra.mxu0 0
        %2115 = vmatprep.subr.bf16.mxu0 0
        %2116 = vmatpush1.bf16.msra.mxu0 0
        %2117 = vmatprep.subr.bf16.mxu0 0
        %2118 = vmatpush1.bf16.msra.mxu0 0
        %2119 = vmatprep.subr.bf16.mxu0 0
        %2120 = vmatpush1.bf16.msra.mxu0 0
        %2121 = vmatprep.subr.bf16.mxu0 0
        %2122 = vmatpush1.bf16.msra.mxu0 0
        %2123 = vmatprep.subr.bf16.mxu0 0
        %2124 = vmatpush1.bf16.msra.mxu0 0
        %2125 = vmatprep.subr.bf16.mxu0 0
        %2126 = vmatpush1.bf16.msra.mxu0 0
        %2127 = vmatprep.mubr.bf16.mxu0 0
        %2128 = vmatmul.mubr.bf16.gmra.mrb[0].mxu0 %v2093
        %v2129 = vpop.f32.mrb[0].mxu0
        %v2130 = vadd.f32 %v2078, %v2129
        %v2131 = vpop.f32.mrb[0].mxu0
        %v2132 = vpop.f32.mrb[0].mxu0
        %v2133 = vpop.f32.mrb[0].mxu0
        %2134 = vdwg.mxu0
        %v2135 = vld [vmem:[%s1274] sm:$0xf]
        %v2136 = vld [vmem:[%s1274 + $0x4] sm:$0xf]
        %v2137 = vld [vmem:[%s1274 + $0x8] sm:$0xf]
        %v2138 = vld [vmem:[%s1274 + $0xc] sm:$0xf]
        %v2139 = vpack.c.bf16 %v2130, %v2130
        %v2144 = vunpack.c.l.b16 %v2135
        %v2145 = vunpack.c.l.b16 %v2136
        %v2146 = vunpack.c.l.b16 %v2137
        %v2147 = vunpack.c.l.b16 %v2138
        %v2148 = vpack.c.b16 %v2145, %v2144
        %v2149 = vpack.c.b16 %v2147, %v2146
        %v2153 = vsel %vm1561, %v2139, 0
        %2155 = vmatprep.subr.bf16.mxu0 0
        %2156 = vmatpush1.bf16.msra.mxu0 %v2148
        %2157 = vmatprep.subr.bf16.mxu0 0
        %2158 = vmatpush1.bf16.msra.mxu0 %v2149
        %2159 = vmatprep.subr.bf16.mxu0 0
        %2160 = vmatpush1.bf16.msra.mxu0 0
        %2161 = vmatprep.subr.bf16.mxu0 0
        %2162 = vmatpush1.bf16.msra.mxu0 0
        %2163 = vmatprep.subr.bf16.mxu0 0
        %2164 = vmatpush1.bf16.msra.mxu0 0
        %2165 = vmatprep.subr.bf16.mxu0 0
        %2166 = vmatpush1.bf16.msra.mxu0 0
        %2167 = vmatprep.subr.bf16.mxu0 0
        %2168 = vmatpush1.bf16.msra.mxu0 0
        %2169 = vmatprep.subr.bf16.mxu0 0
        %2170 = vmatpush1.bf16.msra.mxu0 0
        %2171 = vmatprep.subr.bf16.mxu0 0
        %2172 = vmatpush1.bf16.msra.mxu0 0
        %2173 = vmatprep.subr.bf16.mxu0 0
        %2174 = vmatpush1.bf16.msra.mxu0 0
        %2175 = vmatprep.subr.bf16.mxu0 0
        %2176 = vmatpush1.bf16.msra.mxu0 0
        %2177 = vmatprep.subr.bf16.mxu0 0
        %2178 = vmatpush1.bf16.msra.mxu0 0
        %2179 = vmatprep.subr.bf16.mxu0 0
        %2180 = vmatpush1.bf16.msra.mxu0 0
        %2181 = vmatprep.subr.bf16.mxu0 0
        %2182 = vmatpush1.bf16.msra.mxu0 0
        %2183 = vmatprep.subr.bf16.mxu0 0
        %2184 = vmatpush1.bf16.msra.mxu0 0
        %2185 = vmatprep.subr.bf16.mxu0 0
        %2186 = vmatpush1.bf16.msra.mxu0 0
        %2187 = vmatprep.mubr.bf16.mxu0 0
        %2188 = vmatmul.mubr.bf16.gmra.mrb[0].mxu0 %v2153
        %v2189 = vpop.f32.mrb[0].mxu0
        %v2190 = vadd.f32 0.0, %v2189
        %v2191 = vpop.f32.mrb[0].mxu0
        %v2192 = vpop.f32.mrb[0].mxu0
        %v2193 = vpop.f32.mrb[0].mxu0
        %2194 = vdwg.mxu0
        %v2195 = vadd.f32 %v2057, %v2190
        %v2196 = vld [vmem:[%s1065] sm:$0x1]
        %v2198 = vlaneseq
        %v2199 = vshrl.u32 %v2198, 7
        %v2200 = vsub.s32 0, %v2199
        %v2201 = vrot.slane %v2196, %v2200
        %v2203 = vadd.f32 %v2195, %v2201
        %v2204 = vmax.f32 %v2203, 0.0
        %v2205 = vand.u32 2147483647, %v2203
        %v2206 = vsub.f32 0.0, %v2205
        %v2207 = vmul.f32 %v2206, 1.442695
        %v2208 = vpow.pop %v2207
        %v2209 = vadd.f32 %v2208, 1.0
        %v2210 = vlog2.pop %v2209
        %v2211 = vmul.f32 %v2210, 0.6931472
        %v2212 = vadd.f32 %v2204, %v2211
        %v2213 = vsub.f32 %v2212, 0.6931472
        %s2214 = scalar_lea.vmem %s1269, 16
        %v2215 = vld [vmem:[%s2214] sm:$0xf]
        %v2216 = vld [vmem:[%s2214 + $0x4] sm:$0xf]
        %v2217 = vld [vmem:[%s2214 + $0x8] sm:$0xf]
        %v2218 = vld [vmem:[%s2214 + $0xc] sm:$0xf]
        %v2219 = vpack.c.bf16 %v2213, %v2213
        %s2220 = scalar_lea.vmem %s1056, 1 [#allocation16]
        %v2221 = vld [vmem:[%s2220] sm:$0x1]
        %v2223 = vlaneseq
        %v2224 = vshrl.u32 %v2223, 7
        %v2225 = vsub.s32 0, %v2224
        %v2226 = vrot.slane %v2221, %v2225
        %v2232 = vunpack.c.l.b16 %v2215
        %v2233 = vunpack.c.l.b16 %v2216
        %v2234 = vunpack.c.l.b16 %v2217
        %v2235 = vunpack.c.l.b16 %v2218
        %v2236 = vpack.c.b16 %v2233, %v2232
        %v2237 = vpack.c.b16 %v2235, %v2234
        %v2241 = vsel %vm1561, %v2219, 0
        %2243 = vmatprep.subr.bf16.mxu0 0
        %2244 = vmatpush1.bf16.msra.mxu0 %v2236
        %2245 = vmatprep.subr.bf16.mxu0 0
        %2246 = vmatpush1.bf16.msra.mxu0 %v2237
        %2247 = vmatprep.subr.bf16.mxu0 0
        %2248 = vmatpush1.bf16.msra.mxu0 0
        %2249 = vmatprep.subr.bf16.mxu0 0
        %2250 = vmatpush1.bf16.msra.mxu0 0
        %2251 = vmatprep.subr.bf16.mxu0 0
        %2252 = vmatpush1.bf16.msra.mxu0 0
        %2253 = vmatprep.subr.bf16.mxu0 0
        %2254 = vmatpush1.bf16.msra.mxu0 0
        %2255 = vmatprep.subr.bf16.mxu0 0
        %2256 = vmatpush1.bf16.msra.mxu0 0
        %2257 = vmatprep.subr.bf16.mxu0 0
        %2258 = vmatpush1.bf16.msra.mxu0 0
        %2259 = vmatprep.subr.bf16.mxu0 0
        %2260 = vmatpush1.bf16.msra.mxu0 0
        %2261 = vmatprep.subr.bf16.mxu0 0
        %2262 = vmatpush1.bf16.msra.mxu0 0
        %2263 = vmatprep.subr.bf16.mxu0 0
        %2264 = vmatpush1.bf16.msra.mxu0 0
        %2265 = vmatprep.subr.bf16.mxu0 0
        %2266 = vmatpush1.bf16.msra.mxu0 0
        %2267 = vmatprep.subr.bf16.mxu0 0
        %2268 = vmatpush1.bf16.msra.mxu0 0
        %2269 = vmatprep.subr.bf16.mxu0 0
        %2270 = vmatpush1.bf16.msra.mxu0 0
        %2271 = vmatprep.subr.bf16.mxu0 0
        %2272 = vmatpush1.bf16.msra.mxu0 0
        %2273 = vmatprep.subr.bf16.mxu0 0
        %2274 = vmatpush1.bf16.msra.mxu0 0
        %2275 = vmatprep.mubr.bf16.mxu0 0
        %2276 = vmatmul.mubr.bf16.gmra.mrb[0].mxu0 %v2241
        %v2277 = vpop.f32.mrb[0].mxu0
        %v2278 = vadd.f32 %v2226, %v2277
        %v2279 = vpop.f32.mrb[0].mxu0
        %v2280 = vpop.f32.mrb[0].mxu0
        %v2281 = vpop.f32.mrb[0].mxu0
        %2282 = vdwg.mxu0
        %s2283 = scalar_lea.vmem %s1274, 16
        %v2284 = vld [vmem:[%s2283] sm:$0xf]
        %v2285 = vld [vmem:[%s2283 + $0x4] sm:$0xf]
        %v2286 = vld [vmem:[%s2283 + $0x8] sm:$0xf]
        %v2287 = vld [vmem:[%s2283 + $0xc] sm:$0xf]
        %v2288 = vpack.c.bf16 %v2278, %v2278
        %v2293 = vunpack.c.l.b16 %v2284
        %v2294 = vunpack.c.l.b16 %v2285
        %v2295 = vunpack.c.l.b16 %v2286
        %v2296 = vunpack.c.l.b16 %v2287
        %v2297 = vpack.c.b16 %v2294, %v2293
        %v2298 = vpack.c.b16 %v2296, %v2295
        %v2302 = vsel %vm1561, %v2288, 0
        %2304 = vmatprep.subr.bf16.mxu0 0
        %2305 = vmatpush1.bf16.msra.mxu0 %v2297
        %2306 = vmatprep.subr.bf16.mxu0 0
        %2307 = vmatpush1.bf16.msra.mxu0 %v2298
        %2308 = vmatprep.subr.bf16.mxu0 0
        %2309 = vmatpush1.bf16.msra.mxu0 0
        %2310 = vmatprep.subr.bf16.mxu0 0
        %2311 = vmatpush1.bf16.msra.mxu0 0
        %2312 = vmatprep.subr.bf16.mxu0 0
        %2313 = vmatpush1.bf16.msra.mxu0 0
        %2314 = vmatprep.subr.bf16.mxu0 0
        %2315 = vmatpush1.bf16.msra.mxu0 0
        %2316 = vmatprep.subr.bf16.mxu0 0
        %2317 = vmatpush1.bf16.msra.mxu0 0
        %2318 = vmatprep.subr.bf16.mxu0 0
        %2319 = vmatpush1.bf16.msra.mxu0 0
        %2320 = vmatprep.subr.bf16.mxu0 0
        %2321 = vmatpush1.bf16.msra.mxu0 0
        %2322 = vmatprep.subr.bf16.mxu0 0
        %2323 = vmatpush1.bf16.msra.mxu0 0
        %2324 = vmatprep.subr.bf16.mxu0 0
        %2325 = vmatpush1.bf16.msra.mxu0 0
        %2326 = vmatprep.subr.bf16.mxu0 0
        %2327 = vmatpush1.bf16.msra.mxu0 0
        %2328 = vmatprep.subr.bf16.mxu0 0
        %2329 = vmatpush1.bf16.msra.mxu0 0
        %2330 = vmatprep.subr.bf16.mxu0 0
        %2331 = vmatpush1.bf16.msra.mxu0 0
        %2332 = vmatprep.subr.bf16.mxu0 0
        %2333 = vmatpush1.bf16.msra.mxu0 0
        %2334 = vmatprep.subr.bf16.mxu0 0
        %2335 = vmatpush1.bf16.msra.mxu0 0
        %2336 = vmatprep.mubr.bf16.mxu0 0
        %2337 = vmatmul.mubr.bf16.gmra.mrb[0].mxu0 %v2302
        %v2338 = vpop.f32.mrb[0].mxu0
        %v2339 = vadd.f32 0.0, %v2338
        %v2340 = vpop.f32.mrb[0].mxu0
        %v2341 = vpop.f32.mrb[0].mxu0
        %v2342 = vpop.f32.mrb[0].mxu0
        %2343 = vdwg.mxu0
        %v2344 = vadd.f32 %v2203, %v2339
        %s2345 = scalar_lea.vmem %s1065, 1 [#allocation18]
        %v2346 = vld [vmem:[%s2345] sm:$0x1]
        %v2348 = vlaneseq
        %v2349 = vshrl.u32 %v2348, 7
        %v2350 = vsub.s32 0, %v2349
        %v2351 = vrot.slane %v2346, %v2350
        %v2353 = vadd.f32 %v2344, %v2351
        %v2354 = vmax.f32 %v2353, 0.0
        %v2355 = vand.u32 2147483647, %v2353
        %v2356 = vsub.f32 0.0, %v2355
        %v2357 = vmul.f32 %v2356, 1.442695
        %v2358 = vpow.pop %v2357
        %v2359 = vadd.f32 %v2358, 1.0
        %v2360 = vlog2.pop %v2359
        %v2361 = vmul.f32 %v2360, 0.6931472
        %v2362 = vadd.f32 %v2354, %v2361
        %v2363 = vsub.f32 %v2362, 0.6931472
        %v2364 = vld [vmem:[%s1277] sm:$0x1]
        %v2366 = vlaneseq
        %v2367 = vshrl.u32 %v2366, 7
        %v2368 = vsub.s32 0, %v2367
        %v2369 = vrot.slane %v2364, %v2368
        %v2371 = vmul.f32 %v2369, %v1526
        %v2372 = vld [vmem:[%s1282] sm:$0xf]
        %v2373 = vld [vmem:[%s1282 + $0x4] sm:$0xf]
        %v2374 = vld [vmem:[%s1282 + $0x8] sm:$0xf]
        %v2375 = vld [vmem:[%s1282 + $0xc] sm:$0xf]
        %v2376 = vpack.c.bf16 %v2363, %v2363
        %v2381 = vunpack.c.l.b16 %v2372
        %v2382 = vunpack.c.l.b16 %v2373
        %v2383 = vunpack.c.l.b16 %v2374
        %v2384 = vunpack.c.l.b16 %v2375
        %v2385 = vpack.c.b16 %v2382, %v2381
        %v2386 = vpack.c.b16 %v2384, %v2383
        %v2390 = vsel %vm1561, %v2376, 0
        %2392 = vmatprep.subr.bf16.mxu0 0
        %2393 = vmatpush1.bf16.msra.mxu0 %v2385
        %2394 = vmatprep.subr.bf16.mxu0 0
        %2395 = vmatpush1.bf16.msra.mxu0 %v2386
        %2396 = vmatprep.subr.bf16.mxu0 0
        %2397 = vmatpush1.bf16.msra.mxu0 0
        %2398 = vmatprep.subr.bf16.mxu0 0
        %2399 = vmatpush1.bf16.msra.mxu0 0
        %2400 = vmatprep.subr.bf16.mxu0 0
        %2401 = vmatpush1.bf16.msra.mxu0 0
        %2402 = vmatprep.subr.bf16.mxu0 0
        %2403 = vmatpush1.bf16.msra.mxu0 0
        %2404 = vmatprep.subr.bf16.mxu0 0
        %2405 = vmatpush1.bf16.msra.mxu0 0
        %2406 = vmatprep.subr.bf16.mxu0 0
        %2407 = vmatpush1.bf16.msra.mxu0 0
        %2408 = vmatprep.subr.bf16.mxu0 0
        %2409 = vmatpush1.bf16.msra.mxu0 0
        %2410 = vmatprep.subr.bf16.mxu0 0
        %2411 = vmatpush1.bf16.msra.mxu0 0
        %2412 = vmatprep.subr.bf16.mxu0 0
        %2413 = vmatpush1.bf16.msra.mxu0 0
        %2414 = vmatprep.subr.bf16.mxu0 0
        %2415 = vmatpush1.bf16.msra.mxu0 0
        %2416 = vmatprep.subr.bf16.mxu0 0
        %2417 = vmatpush1.bf16.msra.mxu0 0
        %2418 = vmatprep.subr.bf16.mxu0 0
        %2419 = vmatpush1.bf16.msra.mxu0 0
        %2420 = vmatprep.subr.bf16.mxu0 0
        %2421 = vmatpush1.bf16.msra.mxu0 0
        %2422 = vmatprep.subr.bf16.mxu0 0
        %2423 = vmatpush1.bf16.msra.mxu0 0
        %2424 = vmatprep.mubr.bf16.mxu0 0
        %2425 = vmatmul.mubr.bf16.gmra.mrb[0].mxu0 %v2390
        %v2426 = vpop.f32.mrb[0].mxu0
        %v2427 = vadd.f32 0.0, %v2426
        %v2428 = vpop.f32.mrb[0].mxu0
        %v2429 = vpop.f32.mrb[0].mxu0
        %v2430 = vpop.f32.mrb[0].mxu0
        %2431 = vdwg.mxu0
        %v2432 = vadd.f32 %v2371, %v2427
        %v2433 = vld [vmem:[%s1073] sm:$0x1]
        %v2435 = vlaneseq
        %v2436 = vshrl.u32 %v2435, 7
        %v2437 = vsub.s32 0, %v2436
        %v2438 = vrot.slane %v2433, %v2437
        %v2440 = vadd.f32 %v2432, %v2438
        %v2441 = vmax.f32 %v2440, 0.0
        %v2442 = vand.u32 2147483647, %v2440
        %v2443 = vsub.f32 0.0, %v2442
        %v2444 = vmul.f32 %v2443, 1.442695
        %v2445 = vpow.pop %v2444
        %v2446 = vadd.f32 %v2445, 1.0
        %v2447 = vlog2.pop %v2446
        %v2448 = vmul.f32 %v2447, 0.6931472
        %v2449 = vadd.f32 %v2441, %v2448
        %v2450 = vsub.f32 %v2449, 0.6931472
        %v2451 = vld [vmem:[%s1082] sm:$0xf]
        %v2452 = vld [vmem:[%s1082 + $0x4] sm:$0xf]
        %v2453 = vld [vmem:[%s1082 + $0x8] sm:$0xf]
        %v2454 = vld [vmem:[%s1082 + $0xc] sm:$0xf]
        %v2455 = vpack.c.bf16 %v2450, %v2450
        %v2456 = vld [vmem:[%s1091] sm:$0x1]
        %v2458 = vlaneseq
        %v2459 = vshrl.u32 %v2458, 7
        %v2460 = vsub.s32 0, %v2459
        %v2461 = vrot.slane %v2456, %v2460
        %v2467 = vunpack.c.l.b16 %v2451
        %v2468 = vunpack.c.l.b16 %v2452
        %v2469 = vunpack.c.l.b16 %v2453
        %v2470 = vunpack.c.l.b16 %v2454
        %v2471 = vpack.c.b16 %v2468, %v2467
        %v2472 = vpack.c.b16 %v2470, %v2469
        %v2476 = vsel %vm1561, %v2455, 0
        %2478 = vmatprep.subr.bf16.mxu0 0
        %2479 = vmatpush1.bf16.msra.mxu0 %v2471
        %2480 = vmatprep.subr.bf16.mxu0 0
        %2481 = vmatpush1.bf16.msra.mxu0 %v2472
        %2482 = vmatprep.subr.bf16.mxu0 0
        %2483 = vmatpush1.bf16.msra.mxu0 0
        %2484 = vmatprep.subr.bf16.mxu0 0
        %2485 = vmatpush1.bf16.msra.mxu0 0
        %2486 = vmatprep.subr.bf16.mxu0 0
        %2487 = vmatpush1.bf16.msra.mxu0 0
        %2488 = vmatprep.subr.bf16.mxu0 0
        %2489 = vmatpush1.bf16.msra.mxu0 0
        %2490 = vmatprep.subr.bf16.mxu0 0
        %2491 = vmatpush1.bf16.msra.mxu0 0
        %2492 = vmatprep.subr.bf16.mxu0 0
        %2493 = vmatpush1.bf16.msra.mxu0 0
        %2494 = vmatprep.subr.bf16.mxu0 0
        %2495 = vmatpush1.bf16.msra.mxu0 0
        %2496 = vmatprep.subr.bf16.mxu0 0
        %2497 = vmatpush1.bf16.msra.mxu0 0
        %2498 = vmatprep.subr.bf16.mxu0 0
        %2499 = vmatpush1.bf16.msra.mxu0 0
        %2500 = vmatprep.subr.bf16.mxu0 0
        %2501 = vmatpush1.bf16.msra.mxu0 0
        %2502 = vmatprep.subr.bf16.mxu0 0
        %2503 = vmatpush1.bf16.msra.mxu0 0
        %2504 = vmatprep.subr.bf16.mxu0 0
        %2505 = vmatpush1.bf16.msra.mxu0 0
        %2506 = vmatprep.subr.bf16.mxu0 0
        %2507 = vmatpush1.bf16.msra.mxu0 0
        %2508 = vmatprep.subr.bf16.mxu0 0
        %2509 = vmatpush1.bf16.msra.mxu0 0
        %2510 = vmatprep.mubr.bf16.mxu0 0
        %2511 = vmatmul.mubr.bf16.gmra.mrb[0].mxu0 %v2476
        %v2512 = vpop.f32.mrb[0].mxu0
        %v2513 = vadd.f32 %v2461, %v2512
        %v2514 = vpop.f32.mrb[0].mxu0
        %v2515 = vpop.f32.mrb[0].mxu0
        %v2516 = vpop.f32.mrb[0].mxu0
        %2517 = vdwg.mxu0
        %v2518 = vld [vmem:[%s1100] sm:$0xf]
        %v2519 = vld [vmem:[%s1100 + $0x4] sm:$0xf]
        %v2520 = vld [vmem:[%s1100 + $0x8] sm:$0xf]
        %v2521 = vld [vmem:[%s1100 + $0xc] sm:$0xf]
        %v2522 = vpack.c.bf16 %v2513, %v2513
        %v2527 = vunpack.c.l.b16 %v2518
        %v2528 = vunpack.c.l.b16 %v2519
        %v2529 = vunpack.c.l.b16 %v2520
        %v2530 = vunpack.c.l.b16 %v2521
        %v2531 = vpack.c.b16 %v2528, %v2527
        %v2532 = vpack.c.b16 %v2530, %v2529
        %v2536 = vsel %vm1561, %v2522, 0
        %2538 = vmatprep.subr.bf16.mxu0 0
        %2539 = vmatpush1.bf16.msra.mxu0 %v2531
        %2540 = vmatprep.subr.bf16.mxu0 0
        %2541 = vmatpush1.bf16.msra.mxu0 %v2532
        %2542 = vmatprep.subr.bf16.mxu0 0
        %2543 = vmatpush1.bf16.msra.mxu0 0
        %2544 = vmatprep.subr.bf16.mxu0 0
        %2545 = vmatpush1.bf16.msra.mxu0 0
        %2546 = vmatprep.subr.bf16.mxu0 0
        %2547 = vmatpush1.bf16.msra.mxu0 0
        %2548 = vmatprep.subr.bf16.mxu0 0
        %2549 = vmatpush1.bf16.msra.mxu0 0
        %2550 = vmatprep.subr.bf16.mxu0 0
        %2551 = vmatpush1.bf16.msra.mxu0 0
        %2552 = vmatprep.subr.bf16.mxu0 0
        %2553 = vmatpush1.bf16.msra.mxu0 0
        %2554 = vmatprep.subr.bf16.mxu0 0
        %2555 = vmatpush1.bf16.msra.mxu0 0
        %2556 = vmatprep.subr.bf16.mxu0 0
        %2557 = vmatpush1.bf16.msra.mxu0 0
        %2558 = vmatprep.subr.bf16.mxu0 0
        %2559 = vmatpush1.bf16.msra.mxu0 0
        %2560 = vmatprep.subr.bf16.mxu0 0
        %2561 = vmatpush1.bf16.msra.mxu0 0
        %2562 = vmatprep.subr.bf16.mxu0 0
        %2563 = vmatpush1.bf16.msra.mxu0 0
        %2564 = vmatprep.subr.bf16.mxu0 0
        %2565 = vmatpush1.bf16.msra.mxu0 0
        %2566 = vmatprep.subr.bf16.mxu0 0
        %2567 = vmatpush1.bf16.msra.mxu0 0
        %2568 = vmatprep.subr.bf16.mxu0 0
        %2569 = vmatpush1.bf16.msra.mxu0 0
        %2570 = vmatprep.mubr.bf16.mxu0 0
        %2571 = vmatmul.mubr.bf16.gmra.mrb[0].mxu0 %v2536
        %v2572 = vpop.f32.mrb[0].mxu0
        %v2573 = vadd.f32 0.0, %v2572
        %v2574 = vpop.f32.mrb[0].mxu0
        %v2575 = vpop.f32.mrb[0].mxu0
        %v2576 = vpop.f32.mrb[0].mxu0
        %2577 = vdwg.mxu0
        %v2578 = vadd.f32 %v2440, %v2573
        %v2579 = vld [vmem:[%s1109] sm:$0x1]
        %v2581 = vlaneseq
        %v2582 = vshrl.u32 %v2581, 7
        %v2583 = vsub.s32 0, %v2582
        %v2584 = vrot.slane %v2579, %v2583
        %v2586 = vadd.f32 %v2578, %v2584
        %v2587 = vmax.f32 %v2586, 0.0
        %v2588 = vand.u32 2147483647, %v2586
        %v2589 = vsub.f32 0.0, %v2588
        %v2590 = vmul.f32 %v2589, 1.442695
        %v2591 = vpow.pop %v2590
        %v2592 = vadd.f32 %v2591, 1.0
        %v2593 = vlog2.pop %v2592
        %v2594 = vmul.f32 %v2593, 0.6931472
        %v2595 = vadd.f32 %v2587, %v2594
        %v2596 = vsub.f32 %v2595, 0.6931472
        %s2597 = scalar_lea.vmem %s1082, 16 [#allocation21]
        %v2598 = vld [vmem:[%s2597] sm:$0xf]
        %v2599 = vld [vmem:[%s2597 + $0x4] sm:$0xf]
        %v2600 = vld [vmem:[%s2597 + $0x8] sm:$0xf]
        %v2601 = vld [vmem:[%s2597 + $0xc] sm:$0xf]
        %v2602 = vpack.c.bf16 %v2596, %v2596
        %s2603 = scalar_lea.vmem %s1091, 1 [#allocation22]
        %v2604 = vld [vmem:[%s2603] sm:$0x1]
        %v2606 = vlaneseq
        %v2607 = vshrl.u32 %v2606, 7
        %v2608 = vsub.s32 0, %v2607
        %v2609 = vrot.slane %v2604, %v2608
        %v2615 = vunpack.c.l.b16 %v2598
        %v2616 = vunpack.c.l.b16 %v2599
        %v2617 = vunpack.c.l.b16 %v2600
        %v2618 = vunpack.c.l.b16 %v2601
        %v2619 = vpack.c.b16 %v2616, %v2615
        %v2620 = vpack.c.b16 %v2618, %v2617
        %v2624 = vsel %vm1561, %v2602, 0
        %2626 = vmatprep.subr.bf16.mxu0 0
        %2627 = vmatpush1.bf16.msra.mxu0 %v2619
        %2628 = vmatprep.subr.bf16.mxu0 0
        %2629 = vmatpush1.bf16.msra.mxu0 %v2620
        %2630 = vmatprep.subr.bf16.mxu0 0
        %2631 = vmatpush1.bf16.msra.mxu0 0
        %2632 = vmatprep.subr.bf16.mxu0 0
        %2633 = vmatpush1.bf16.msra.mxu0 0
        %2634 = vmatprep.subr.bf16.mxu0 0
        %2635 = vmatpush1.bf16.msra.mxu0 0
        %2636 = vmatprep.subr.bf16.mxu0 0
        %2637 = vmatpush1.bf16.msra.mxu0 0
        %2638 = vmatprep.subr.bf16.mxu0 0
        %2639 = vmatpush1.bf16.msra.mxu0 0
        %2640 = vmatprep.subr.bf16.mxu0 0
        %2641 = vmatpush1.bf16.msra.mxu0 0
        %2642 = vmatprep.subr.bf16.mxu0 0
        %2643 = vmatpush1.bf16.msra.mxu0 0
        %2644 = vmatprep.subr.bf16.mxu0 0
        %2645 = vmatpush1.bf16.msra.mxu0 0
        %2646 = vmatprep.subr.bf16.mxu0 0
        %2647 = vmatpush1.bf16.msra.mxu0 0
        %2648 = vmatprep.subr.bf16.mxu0 0
        %2649 = vmatpush1.bf16.msra.mxu0 0
        %2650 = vmatprep.subr.bf16.mxu0 0
        %2651 = vmatpush1.bf16.msra.mxu0 0
        %2652 = vmatprep.subr.bf16.mxu0 0
        %2653 = vmatpush1.bf16.msra.mxu0 0
        %2654 = vmatprep.subr.bf16.mxu0 0
        %2655 = vmatpush1.bf16.msra.mxu0 0
        %2656 = vmatprep.subr.bf16.mxu0 0
        %2657 = vmatpush1.bf16.msra.mxu0 0
        %2658 = vmatprep.mubr.bf16.mxu0 0
        %2659 = vmatmul.mubr.bf16.gmra.mrb[0].mxu0 %v2624
        %v2660 = vpop.f32.mrb[0].mxu0
        %v2661 = vadd.f32 %v2609, %v2660
        %v2662 = vpop.f32.mrb[0].mxu0
        %v2663 = vpop.f32.mrb[0].mxu0
        %v2664 = vpop.f32.mrb[0].mxu0
        %2665 = vdwg.mxu0
        %s2666 = scalar_lea.vmem %s1100, 16 [#allocation24]
        %v2667 = vld [vmem:[%s2666] sm:$0xf]
        %v2668 = vld [vmem:[%s2666 + $0x4] sm:$0xf]
        %v2669 = vld [vmem:[%s2666 + $0x8] sm:$0xf]
        %v2670 = vld [vmem:[%s2666 + $0xc] sm:$0xf]
        %v2671 = vpack.c.bf16 %v2661, %v2661
        %v2676 = vunpack.c.l.b16 %v2667
        %v2677 = vunpack.c.l.b16 %v2668
        %v2678 = vunpack.c.l.b16 %v2669
        %v2679 = vunpack.c.l.b16 %v2670
        %v2680 = vpack.c.b16 %v2677, %v2676
        %v2681 = vpack.c.b16 %v2679, %v2678
        %v2685 = vsel %vm1561, %v2671, 0
        %2687 = vmatprep.subr.bf16.mxu0 0
        %2688 = vmatpush1.bf16.msra.mxu0 %v2680
        %2689 = vmatprep.subr.bf16.mxu0 0
        %2690 = vmatpush1.bf16.msra.mxu0 %v2681
        %2691 = vmatprep.subr.bf16.mxu0 0
        %2692 = vmatpush1.bf16.msra.mxu0 0
        %2693 = vmatprep.subr.bf16.mxu0 0
        %2694 = vmatpush1.bf16.msra.mxu0 0
        %2695 = vmatprep.subr.bf16.mxu0 0
        %2696 = vmatpush1.bf16.msra.mxu0 0
        %2697 = vmatprep.subr.bf16.mxu0 0
        %2698 = vmatpush1.bf16.msra.mxu0 0
        %2699 = vmatprep.subr.bf16.mxu0 0
        %2700 = vmatpush1.bf16.msra.mxu0 0
        %2701 = vmatprep.subr.bf16.mxu0 0
        %2702 = vmatpush1.bf16.msra.mxu0 0
        %2703 = vmatprep.subr.bf16.mxu0 0
        %2704 = vmatpush1.bf16.msra.mxu0 0
        %2705 = vmatprep.subr.bf16.mxu0 0
        %2706 = vmatpush1.bf16.msra.mxu0 0
        %2707 = vmatprep.subr.bf16.mxu0 0
        %2708 = vmatpush1.bf16.msra.mxu0 0
        %2709 = vmatprep.subr.bf16.mxu0 0
        %2710 = vmatpush1.bf16.msra.mxu0 0
        %2711 = vmatprep.subr.bf16.mxu0 0
        %2712 = vmatpush1.bf16.msra.mxu0 0
        %2713 = vmatprep.subr.bf16.mxu0 0
        %2714 = vmatpush1.bf16.msra.mxu0 0
        %2715 = vmatprep.subr.bf16.mxu0 0
        %2716 = vmatpush1.bf16.msra.mxu0 0
        %2717 = vmatprep.subr.bf16.mxu0 0
        %2718 = vmatpush1.bf16.msra.mxu0 0
        %2719 = vmatprep.mubr.bf16.mxu0 0
        %2720 = vmatmul.mubr.bf16.gmra.mrb[0].mxu0 %v2685
        %v2721 = vpop.f32.mrb[0].mxu0
        %v2722 = vadd.f32 0.0, %v2721
        %v2723 = vpop.f32.mrb[0].mxu0
        %v2724 = vpop.f32.mrb[0].mxu0
        %v2725 = vpop.f32.mrb[0].mxu0
        %2726 = vdwg.mxu0
        %v2727 = vadd.f32 %v2586, %v2722
        %s2728 = scalar_lea.vmem %s1109, 1 [#allocation25]
        %v2729 = vld [vmem:[%s2728] sm:$0x1]
        %v2731 = vlaneseq
        %v2732 = vshrl.u32 %v2731, 7
        %v2733 = vsub.s32 0, %v2732
        %v2734 = vrot.slane %v2729, %v2733
        %v2736 = vadd.f32 %v2727, %v2734
        %2737 = vst.msk [vmem:[#allocation2] sm:$0xff] %vm1561, %v2736
        %v2738 = vmax.f32 %v2736, 0.0
        %v2739 = vand.u32 2147483647, %v2736
        %v2740 = vsub.f32 0.0, %v2739
        %v2741 = vmul.f32 %v2740, 1.442695
        %v2742 = vpow.pop %v2741
        %v2743 = vadd.f32 %v2742, 1.0
        %v2744 = vlog2.pop %v2743
        %v2745 = vmul.f32 %v2744, 0.6931472
        %v2746 = vadd.f32 %v2738, %v2745
        %v2747 = vsub.f32 %v2746, 0.6931472
        %v2748 = vld [vmem:[%s1287] sm:$0xf]
        %v2749 = vld [vmem:[%s1287 + $0x4] sm:$0xf]
        %v2750 = vld [vmem:[%s1287 + $0x8] sm:$0xf]
        %v2751 = vld [vmem:[%s1287 + $0xc] sm:$0xf]
        %v2752 = vpack.c.bf16 %v2747, %v2747
        %v2753 = vld [vmem:[%s1290] sm:$0x1]
        %v2755 = vlaneseq
        %v2756 = vshrl.u32 %v2755, 7
        %v2757 = vsub.s32 0, %v2756
        %v2758 = vrot.slane %v2753, %v2757
        %v2764 = vunpack.c.l.b16 %v2748
        %v2765 = vunpack.c.l.b16 %v2749
        %v2766 = vunpack.c.l.b16 %v2750
        %v2767 = vunpack.c.l.b16 %v2751
        %v2768 = vpack.c.b16 %v2765, %v2764
        %v2769 = vpack.c.b16 %v2767, %v2766
        %v2773 = vsel %vm1561, %v2752, 0
        %2775 = vmatprep.subr.bf16.mxu0 0
        %2776 = vmatpush1.bf16.msra.mxu0 %v2768
        %2777 = vmatprep.subr.bf16.mxu0 0
        %2778 = vmatpush1.bf16.msra.mxu0 %v2769
        %2779 = vmatprep.subr.bf16.mxu0 0
        %2780 = vmatpush1.bf16.msra.mxu0 0
        %2781 = vmatprep.subr.bf16.mxu0 0
        %2782 = vmatpush1.bf16.msra.mxu0 0
        %2783 = vmatprep.subr.bf16.mxu0 0
        %2784 = vmatpush1.bf16.msra.mxu0 0
        %2785 = vmatprep.subr.bf16.mxu0 0
        %2786 = vmatpush1.bf16.msra.mxu0 0
        %2787 = vmatprep.subr.bf16.mxu0 0
        %2788 = vmatpush1.bf16.msra.mxu0 0
        %2789 = vmatprep.subr.bf16.mxu0 0
        %2790 = vmatpush1.bf16.msra.mxu0 0
        %2791 = vmatprep.subr.bf16.mxu0 0
        %2792 = vmatpush1.bf16.msra.mxu0 0
        %2793 = vmatprep.subr.bf16.mxu0 0
        %2794 = vmatpush1.bf16.msra.mxu0 0
        %2795 = vmatprep.subr.bf16.mxu0 0
        %2796 = vmatpush1.bf16.msra.mxu0 0
        %2797 = vmatprep.subr.bf16.mxu0 0
        %2798 = vmatpush1.bf16.msra.mxu0 0
        %2799 = vmatprep.subr.bf16.mxu0 0
        %2800 = vmatpush1.bf16.msra.mxu0 0
        %2801 = vmatprep.subr.bf16.mxu0 0
        %2802 = vmatpush1.bf16.msra.mxu0 0
        %2803 = vmatprep.subr.bf16.mxu0 0
        %2804 = vmatpush1.bf16.msra.mxu0 0
        %2805 = vmatprep.subr.bf16.mxu0 0
        %2806 = vmatpush1.bf16.msra.mxu0 0
        %2807 = vmatprep.mubr.bf16.mxu0 0
        %2808 = vmatmul.mubr.bf16.gmra.mrb[0].mxu0 %v2773
        %v2809 = vpop.f32.mrb[0].mxu0
        %v2810 = vadd.f32 %v2758, %v2809
        %v2811 = vpop.f32.mrb[0].mxu0
        %v2812 = vpop.f32.mrb[0].mxu0
        %v2813 = vpop.f32.mrb[0].mxu0
        %2814 = vdwg.mxu0
        %v2815 = vld [vmem:[%s1118] sm:$0xf]
        %v2816 = vld [vmem:[%s1118 + $0x4] sm:$0xf]
        %v2817 = vld [vmem:[%s1118 + $0x8] sm:$0xf]
        %v2818 = vld [vmem:[%s1118 + $0xc] sm:$0xf]
        %v2819 = vpack.c.bf16 %v2810, %v2810
        %v2824 = vunpack.c.l.b16 %v2815
        %v2825 = vunpack.c.l.b16 %v2816
        %v2826 = vunpack.c.l.b16 %v2817
        %v2827 = vunpack.c.l.b16 %v2818
        %v2828 = vpack.c.b16 %v2825, %v2824
        %v2829 = vpack.c.b16 %v2827, %v2826
        %v2833 = vsel %vm1561, %v2819, 0
        %2835 = vmatprep.subr.bf16.mxu0 0
        %2836 = vmatpush1.bf16.msra.mxu0 %v2828
        %2837 = vmatprep.subr.bf16.mxu0 0
        %2838 = vmatpush1.bf16.msra.mxu0 %v2829
        %2839 = vmatprep.subr.bf16.mxu0 0
        %2840 = vmatpush1.bf16.msra.mxu0 0
        %2841 = vmatprep.subr.bf16.mxu0 0
        %2842 = vmatpush1.bf16.msra.mxu0 0
        %2843 = vmatprep.subr.bf16.mxu0 0
        %2844 = vmatpush1.bf16.msra.mxu0 0
        %2845 = vmatprep.subr.bf16.mxu0 0
        %2846 = vmatpush1.bf16.msra.mxu0 0
        %2847 = vmatprep.subr.bf16.mxu0 0
        %2848 = vmatpush1.bf16.msra.mxu0 0
        %2849 = vmatprep.subr.bf16.mxu0 0
        %2850 = vmatpush1.bf16.msra.mxu0 0
        %2851 = vmatprep.subr.bf16.mxu0 0
        %2852 = vmatpush1.bf16.msra.mxu0 0
        %2853 = vmatprep.subr.bf16.mxu0 0
        %2854 = vmatpush1.bf16.msra.mxu0 0
        %2855 = vmatprep.subr.bf16.mxu0 0
        %2856 = vmatpush1.bf16.msra.mxu0 0
        %2857 = vmatprep.subr.bf16.mxu0 0
        %2858 = vmatpush1.bf16.msra.mxu0 0
        %2859 = vmatprep.subr.bf16.mxu0 0
        %2860 = vmatpush1.bf16.msra.mxu0 0
        %2861 = vmatprep.subr.bf16.mxu0 0
        %2862 = vmatpush1.bf16.msra.mxu0 0
        %2863 = vmatprep.subr.bf16.mxu0 0
        %2864 = vmatpush1.bf16.msra.mxu0 0
        %2865 = vmatprep.subr.bf16.mxu0 0
        %2866 = vmatpush1.bf16.msra.mxu0 0
        %2867 = vmatprep.mubr.bf16.mxu0 0
        %2868 = vmatmul.mubr.bf16.gmra.mrb[0].mxu0 %v2833
        %v2869 = vpop.f32.mrb[0].mxu0
        %v2870 = vadd.f32 0.0, %v2869
        %v2871 = vpop.f32.mrb[0].mxu0
        %v2872 = vpop.f32.mrb[0].mxu0
        %v2873 = vpop.f32.mrb[0].mxu0
        %2874 = vdwg.mxu0
        %v2875 = vadd.f32 %v2736, %v2870
        %v2876 = vld [vmem:[%s1293] sm:$0x1]
        %v2878 = vlaneseq
        %v2879 = vshrl.u32 %v2878, 7
        %v2880 = vsub.s32 0, %v2879
        %v2881 = vrot.slane %v2876, %v2880
        %v2883 = vadd.f32 %v2875, %v2881
        %v2884 = vmax.f32 %v2883, 0.0
        %v2885 = vand.u32 2147483647, %v2883
        %v2886 = vsub.f32 0.0, %v2885
        %v2887 = vmul.f32 %v2886, 1.442695
        %v2888 = vpow.pop %v2887
        %v2889 = vadd.f32 %v2888, 1.0
        %v2890 = vlog2.pop %v2889
        %v2891 = vmul.f32 %v2890, 0.6931472
        %v2892 = vadd.f32 %v2884, %v2891
        %v2893 = vsub.f32 %v2892, 0.6931472
        %v2894 = vld [vmem:[%s1298] sm:$0xf]
        %v2895 = vld [vmem:[%s1298 + $0x4] sm:$0xf]
        %v2896 = vld [vmem:[%s1298 + $0x8] sm:$0xf]
        %v2897 = vld [vmem:[%s1298 + $0xc] sm:$0xf]
        %v2898 = vpack.c.bf16 %v2893, %v2893
        %v2903 = vunpack.c.l.b16 %v2894
        %v2904 = vunpack.c.l.b16 %v2895
        %v2905 = vunpack.c.l.b16 %v2896
        %v2906 = vunpack.c.l.b16 %v2897
        %v2907 = vpack.c.b16 %v2904, %v2903
        %v2908 = vpack.c.b16 %v2906, %v2905
        %v2912 = vsel %vm1561, %v2898, 0
        %2914 = vmatprep.subr.bf16.mxu0 0
        %2915 = vmatpush1.bf16.msra.mxu0 %v2907
        %2916 = vmatprep.subr.bf16.mxu0 0
        %2917 = vmatpush1.bf16.msra.mxu0 %v2908
        %2918 = vmatprep.subr.bf16.mxu0 0
        %2919 = vmatpush1.bf16.msra.mxu0 0
        %2920 = vmatprep.subr.bf16.mxu0 0
        %2921 = vmatpush1.bf16.msra.mxu0 0
        %2922 = vmatprep.subr.bf16.mxu0 0
        %2923 = vmatpush1.bf16.msra.mxu0 0
        %2924 = vmatprep.subr.bf16.mxu0 0
        %2925 = vmatpush1.bf16.msra.mxu0 0
        %2926 = vmatprep.subr.bf16.mxu0 0
        %2927 = vmatpush1.bf16.msra.mxu0 0
        %2928 = vmatprep.subr.bf16.mxu0 0
        %2929 = vmatpush1.bf16.msra.mxu0 0
        %2930 = vmatprep.subr.bf16.mxu0 0
        %2931 = vmatpush1.bf16.msra.mxu0 0
        %2932 = vmatprep.subr.bf16.mxu0 0
        %2933 = vmatpush1.bf16.msra.mxu0 0
        %2934 = vmatprep.subr.bf16.mxu0 0
        %2935 = vmatpush1.bf16.msra.mxu0 0
        %2936 = vmatprep.subr.bf16.mxu0 0
        %2937 = vmatpush1.bf16.msra.mxu0 0
        %2938 = vmatprep.subr.bf16.mxu0 0
        %2939 = vmatpush1.bf16.msra.mxu0 0
        %2940 = vmatprep.subr.bf16.mxu0 0
        %2941 = vmatpush1.bf16.msra.mxu0 0
        %2942 = vmatprep.subr.bf16.mxu0 0
        %2943 = vmatpush1.bf16.msra.mxu0 0
        %2944 = vmatprep.subr.bf16.mxu0 0
        %2945 = vmatpush1.bf16.msra.mxu0 0
        %2946 = vmatprep.mubr.bf16.mxu0 0
        %2947 = vmatmul.mubr.bf16.gmra.mrb[0].mxu0 %v2912
        %v2948 = vpop.f32.mrb[0].mxu0
        %v2949 = vadd.f32 0.0, %v2948
        %v2950 = vpop.f32.mrb[0].mxu0
        %v2951 = vpop.f32.mrb[0].mxu0
        %v2952 = vpop.f32.mrb[0].mxu0
        %2953 = vdwg.mxu0
        %v2954 = vld [vmem:[#allocation3] sm:$0xff]
        %v2955 = vadd.f32 %v2954, %v2949
        %vm2956 = vcmask 15360
        %2957 = vst.msk [vmem:[#allocation3] sm:$0xff] %vm2956, %v2955
        %v2958 = vmul.f32 %v2949, %v2949
        %v2959 = vadd.f32 %v2958, 0.0
        %v2960 = vadd.f32 %v2959, 1e-07
        %v2961 = vrcp.pop %v2960
        %v2962 = vmul.f32 %v2958, %v2961
        %v2963 = vsel %vm2956, %v2962, 0.0
        %2964 = vadd.xlane.f32.xlu0 %v2963
        %v2965 = vpop.xlane.xlu0 %2964
        %v2966 = vrot.slane %v2965, 4
        %v2967 = vadd.f32 %v2965, %v2966
        %v2968 = vrot.slane %v2967, 2
        %v2969 = vadd.f32 %v2967, %v2968
        %v2970 = vrot.slane %v2969, 1
        %v2971 = vadd.f32 %v2969, %v2970
        %v2972 = vrcp.pop 16.0
        %v2973 = vmul.f32 %v2971, %v2972
        %p2974 = scmp.gt.s32.totalorder %s55, 0
        // Predicated region
        $region173: #{tpu_custom_call.1} parent=115 // pred_check
          %p2975 = pneg %p2974
        $region174: #{tpu_custom_call.1} parent=115 // pred_check_branch
          %2977 = sbr.rel (%p2975) target = $region176
        $region175: #{tpu_custom_call.1} parent=115 // pred_region
          %v2978 = vld [vmem:[#allocation4] sm:$0x1]
          %v2979 = vadd.f32 %v2978, %v2973
          %vm2980 = vcmask 0
          %2981 = vst.msk [vmem:[#allocation4] sm:$0x1] %vm2980, %v2979
        $region176: #{tpu_custom_call.1} parent=115 // pred_fallthru
          _
        %p2982 = scmp.eq.s32.totalorder %s55, 1
        // Predicated region
        $region177: #{tpu_custom_call.1} parent=115 // pred_check
          %p2983 = pneg %p2982
        $region178: #{tpu_custom_call.1} parent=115 // pred_check_branch
          %2985 = sbr.rel (%p2983) target = $region180
        $region179: #{tpu_custom_call.1} parent=115 // pred_region
          %v2986 = vld [vmem:[#allocation3] sm:$0xff]
          %2987 = vst.msk [vmem:[%s24] sm:$0xff] %vm2956, %v2986
          %v2988 = vld [vmem:[#allocation4] sm:$0x1]
          %vm2989 = vcmask 0
          %2990 = vst.msk [vmem:[#allocation28] sm:$0x1] %vm2989, %v2988
        $region180: #{tpu_custom_call.1} parent=115 // pred_fallthru
          _
        // Predicated region
        $region181: #{tpu_custom_call.1} parent=115 // pred_check
          %p2991 = pneg %p667
        $region182: #{tpu_custom_call.1} parent=115 // pred_check_branch
          %2993 = sbr.rel (%p2991) target = $region184
        $region183: #{tpu_custom_call.1} parent=115 // pred_region
          _
        $region184: #{tpu_custom_call.1} parent=115 // pred_fallthru
          _
        // Predicated region
        $region185: #{tpu_custom_call.1} parent=115 // pred_check
          %p2994 = pneg %p688
        $region186: #{tpu_custom_call.1} parent=115 // pred_check_branch
          %2996 = sbr.rel (%p2994) target = $region188
        $region187: #{tpu_custom_call.1} parent=115 // pred_region
          %s2998 = ssub.s32 16, 16
          %2999 = vsyncadd [#allocation9], %s2998
          %s3001 = sshll.u32 [#allocation28], 4
          %s3002 = int_to_ptr.vmem [resolvable:$true] %s3001
          %3004 = dma.vmem_to_hbm [thread:$0]  %s3002, 16, %s25, [#allocation9]
        $region188: #{tpu_custom_call.1} parent=115 // pred_fallthru
          _
        // Predicated region
        $region189: #{tpu_custom_call.1} parent=115 // pred_check
          %p3005 = pneg %p667
        $region190: #{tpu_custom_call.1} parent=115 // pred_check_branch
          %3007 = sbr.rel (%p3005) target = $region192
        $region191: #{tpu_custom_call.1} parent=115 // pred_region
          _
        $region192: #{tpu_custom_call.1} parent=115 // pred_fallthru
          _
        // Predicated region
        $region193: #{tpu_custom_call.1} parent=115 // pred_check
          %p3008 = pneg %p688
        $region194: #{tpu_custom_call.1} parent=115 // pred_check_branch
          %3010 = sbr.rel (%p3008) target = $region196
        $region195: #{tpu_custom_call.1} parent=115 // pred_region
          %3011 = dma.done [#allocation9], 16
        $region196: #{tpu_custom_call.1} parent=115 // pred_fallthru
          _
      $region116: #{tpu_custom_call.1} parent=5 // pred_fallthru
        _
      %p3012 = scmp.le.s32.totalorder 2, %s50
      // Predicated region
      $region197: #{tpu_custom_call.1} parent=5 // pred_check
        %p3013 = pneg %p3012
      $region198: #{tpu_custom_call.1} parent=5 // pred_check_branch
        %3015 = sbr.rel (%p3013) target = $region200
      $region199: #{tpu_custom_call.1} parent=5 // pred_region
        %s3016 = ssub.s32 %s50, 2
      $region200: #{tpu_custom_call.1} parent=5 // pred_fallthru
        _
    $region6: #{tpu_custom_call.1} parent=1 // loop_footer
      %s54 = sadd.s32 1, %s50
    $region7: #{tpu_custom_call.1} parent=1 // loop_footer_branch
      %49 = sbr.rel target = $region3
    $region8: #{tpu_custom_call.1} parent=1 // loop_exit
      _
    %3017 = vsyncpa [#allocation8], 1
    %s3018 = scalar_lea.sflag [#allocation8], 1
    %3019 = vsyncpa %s3018, 1
    %3020 = vsyncpa [#allocation11], 1
    %3021 = vsyncpa [#allocation14], 1
    %s3022 = scalar_lea.sflag [#allocation14], 1
    %3023 = vsyncpa %s3022, 1
    %3024 = vsyncpa [#allocation17], 1
    %s3025 = scalar_lea.sflag [#allocation17], 1
    %3026 = vsyncpa %s3025, 1
    %3027 = vsyncpa [#allocation20], 1
    %s3028 = scalar_lea.sflag [#allocation20], 1
    %3029 = vsyncpa %s3028, 1
    %3030 = vsyncpa [#allocation23], 1
    %s3031 = scalar_lea.sflag [#allocation23], 1
    %3032 = vsyncpa %s3031, 1
    %3033 = vsyncpa [#allocation26], 1
    %s3034 = scalar_lea.sflag [#allocation26], 1
    %3035 = vsyncpa %s3034, 1
    %3036 = vsyncpa [#allocation9], 1
    %s3037 = scalar_lea.sflag [#allocation9], 1
    %3038 = vsyncpa %s3037, 1

</llo_original>
